<compile_context>
chip_gen: v6e
topology: v6e:2x2x1
jax: 0.10.0
libtpu: 0.0.40
codegen_flags: <defaults>
</compile_context>

<pallas_src>
import functools

import jax
import jax.numpy as jnp
from jax.experimental import pallas as pl
from jax.experimental.pallas import tpu as pltpu

LANE = 128


def conv_head_kernel(x_ref, wt_ref, bconv_ref, wfc_ref, bfc_ref, out_ref,
                     *, H, W, Cin):
    """Fused Conv3x3(SAME) + ReLU + global-avg-pool + FC for one batch element.

    x_ref:    (1, H*W + 2*W + 2, Cin) bf16   flattened spatial, zero-padded
    wt_ref:   (9, Cin, Cout_pad)      bf16   per-tap conv weights (kh-major)
    bconv_ref:(1, Cout_pad)           f32
    wfc_ref:  (Cout_pad, NC_pad)      f32
    bfc_ref:  (1, NC_pad)             f32
    out_ref:  (1, 1, NC_pad)          f32
    """
    HW = H * W
    cout_p = wt_ref.shape[-1]

    # Column index of each output pixel (for masking horizontal wrap-around).
    col = jax.lax.broadcasted_iota(jnp.int32, (HW, 1), 0) % W

    acc = jnp.zeros((HW, cout_p), jnp.float32)
    # 3x3 conv as 9 shifted matmuls; vertical out-of-bounds taps read the zero
    # padding, horizontal wrap is masked per tap.
    for kh in range(3):
        for kw in range(3):
            dh, dw = kh - 1, kw - 1
            start = dh * W + dw + (W + 1)            # static, always >= 0
            a = x_ref[0, start:start + HW, :]        # (HW, Cin) bf16
            if dw == -1:
                a = jnp.where(col >= 1, a, 0).astype(jnp.bfloat16)
            elif dw == 1:
                a = jnp.where(col <= W - 2, a, 0).astype(jnp.bfloat16)
            acc = acc + jnp.dot(a, wt_ref[kh * 3 + kw],
                                preferred_element_type=jnp.float32)

    # Bias + ReLU once per output tile (not per K-step).
    h = jnp.maximum(acc + bconv_ref[...], 0.0)       # (HW, Cout_pad) f32

    # Global average pool as an in-kernel reduction (padded lanes stay zero).
    pooled = jnp.sum(h, axis=0, keepdims=True) * (1.0 / HW)   # (1, Cout_pad)

    # Final classifier; NC padded to 128 lanes -> dense, unmasked store.
    logits = jnp.dot(pooled, wfc_ref[...],
                     preferred_element_type=jnp.float32) + bfc_ref[...]
    out_ref[...] = logits.reshape(1, 1, -1).astype(out_ref.dtype)


def _pad_to(n, mult):
    return ((n + mult - 1) // mult) * mult


@functools.partial(jax.jit, static_argnames=("num_classes",))
def model_forward(x_nchw, w_conv, b_conv, w_fc, b_fc, *, num_classes):
    """Forward of the wrapped CNN. x_nchw: (B, Cin, H, W) float32."""
    B, Cin, H, W = x_nchw.shape
    Cout = w_conv.shape[0]
    HW = H * W
    Cout_p = _pad_to(max(Cout, LANE), LANE)
    NC_p = _pad_to(max(num_classes, LANE), LANE)

    # ---- glue: layout + padding (1x input volume, no im2col inflation) ----
    # NCHW -> NHWC -> (B, H*W, Cin), zero-pad the flattened spatial axis by
    # (W+1) on each side so every 3x3 tap is a static in-bounds slice.
    x_flat = jnp.transpose(x_nchw, (0, 2, 3, 1)).reshape(B, HW, Cin)
    x_pad = jnp.pad(x_flat, ((0, 0), (W + 1, W + 1), (0, 0))).astype(jnp.bfloat16)
    L = HW + 2 * W + 2

    # torch conv weight (Cout, Cin, 3, 3) -> (3,3,Cin,Cout) -> (9, Cin, Cout_p)
    w_taps = jnp.transpose(w_conv, (2, 3, 1, 0)).reshape(9, Cin, Cout)
    w_taps = jnp.pad(w_taps, ((0, 0), (0, 0), (0, Cout_p - Cout))).astype(jnp.bfloat16)
    b_conv_row = jnp.pad(b_conv, (0, Cout_p - Cout)).reshape(1, Cout_p).astype(jnp.float32)

    w_fc_mat = jnp.pad(w_fc.T, ((0, Cout_p - Cout),
                                (0, NC_p - num_classes))).astype(jnp.float32)
    b_fc_row = jnp.pad(b_fc, (0, NC_p - num_classes)).reshape(1, NC_p).astype(jnp.float32)

    kernel = functools.partial(conv_head_kernel, H=H, W=W, Cin=Cin)

    flops = 2 * B * HW * 9 * Cin * Cout_p + 2 * B * Cout_p * NC_p
    bytes_accessed = (B * L * Cin * 2 + 9 * Cin * Cout_p * 2 +
                      (Cout_p + Cout_p * NC_p + NC_p) * 4 + B * NC_p * 4)

    out = pl.pallas_call(
        kernel,
        out_shape=jax.ShapeDtypeStruct((B, 1, NC_p), jnp.float32),
        grid_spec=pltpu.PrefetchScalarGridSpec(
            num_scalar_prefetch=0,
            grid=(B,),
            in_specs=[
                pl.BlockSpec((1, L, Cin), lambda b: (b, 0, 0)),       # activations
                pl.BlockSpec((9, Cin, Cout_p), lambda b: (0, 0, 0)),  # conv taps
                pl.BlockSpec((1, Cout_p), lambda b: (0, 0)),          # conv bias
                pl.BlockSpec((Cout_p, NC_p), lambda b: (0, 0)),       # fc weight
                pl.BlockSpec((1, NC_p), lambda b: (0, 0)),            # fc bias
            ],
            out_specs=pl.BlockSpec((1, 1, NC_p), lambda b: (b, 0, 0)),
        ),
        compiler_params=pltpu.CompilerParams(
            dimension_semantics=("parallel",),       # batch-independent -> megacore
            vmem_limit_bytes=32 * 1024 * 1024),      # explicit (v5e default is 16 MiB)
        cost_estimate=pl.CostEstimate(flops=flops, transcendentals=0,
                                      bytes_accessed=bytes_accessed),
    )(x_pad, w_taps, b_conv_row, w_fc_mat, b_fc_row)

    # TODO(synk): for very large H*W (per-image slab > VMEM) add a spatial
    # row-tile grid axis with halo DMA (memory_space=pl.ANY + make_async_copy).
    return out.reshape(B, NC_p)[:, :num_classes]


def reference_forward(x_nchw, w_conv, b_conv, w_fc, b_fc):
    """Pure-JAX reference (mirrors the PyTorch model) for a correctness check."""
    y = jax.lax.conv_general_dilated(
        x_nchw, w_conv, window_strides=(1, 1), padding="SAME",
        dimension_numbers=("NCHW", "OIHW", "NCHW"))
    y = y + b_conv[None, :, None, None]
    y = jnp.maximum(y, 0.0)
    pooled = jnp.mean(y, axis=(2, 3))                          # (B, Cout)
    return pooled @ w_fc.T + b_fc[None, :]


if __name__ == "__main__":
    B, Cin, H, W = 2, 4, 16, 16
    Cout, NUM_CLASSES = 32, 10

    key = jax.random.PRNGKey(0)
    kx, kw1, kb1, kw2, kb2 = jax.random.split(key, 5)

    x = jax.random.normal(kx, (B, Cin, H, W), dtype=jnp.float32)
    w_conv = 0.1 * jax.random.normal(kw1, (Cout, Cin, 3, 3), dtype=jnp.float32)
    b_conv = 0.1 * jax.random.normal(kb1, (Cout,), dtype=jnp.float32)
    w_fc = 0.1 * jax.random.normal(kw2, (NUM_CLASSES, Cout), dtype=jnp.float32)
    b_fc = 0.1 * jax.random.normal(kb2, (NUM_CLASSES,), dtype=jnp.float32)

    logits = model_forward(x, w_conv, b_conv, w_fc, b_fc,
                           num_classes=NUM_CLASSES)
    jax.block_until_ready(logits)

    ref = reference_forward(x, w_conv, b_conv, w_fc, b_fc)
    assert logits.shape == (B, NUM_CLASSES)
    # bf16 matmul operands (f32 accumulation) -> slightly relaxed tolerance.
    assert jnp.allclose(logits, ref, atol=2e-2, rtol=2e-2), "mismatch vs reference"

    # TODO(synk): get_accuracy / get_top5_accuracy are host-side eval metrics
    # (argmax / topk over logits), not part of the forward hot path; omitted.
    print("KERNEL_OK")
</pallas_src>

<mosaic_0001>
module attributes {stable_mosaic.version = 11 : i64} {
  func.func @conv_head_kernel(%arg0: i32, %arg1: memref<1x290x4xbf16, #tpu.memory_space<vmem>>, %arg2: memref<9x4x128xbf16, #tpu.memory_space<vmem>>, %arg3: memref<1x128xf32, #tpu.memory_space<vmem>>, %arg4: memref<128x128xf32, #tpu.memory_space<vmem>>, %arg5: memref<1x128xf32, #tpu.memory_space<vmem>>, %arg6: memref<1x1x128xf32, #tpu.memory_space<vmem>>) attributes {dimension_semantics = [#tpu.dimension_semantics<parallel>], iteration_bounds = array<i64: 2>, scalar_prefetch = 0 : i64, scratch_operands = 0 : i64, tpu.core_type = #tpu.core_type<tc>, window_params = [{transform_indices = @transform_0, window_bounds = array<i64: 1, 290, 4>}, {pipeline_mode = #tpu.pipeline_mode<synchronous>, transform_indices = @transform_1, window_bounds = array<i64: 9, 4, 128>}, {pipeline_mode = #tpu.pipeline_mode<synchronous>, transform_indices = @transform_2, window_bounds = array<i64: 1, 128>}, {pipeline_mode = #tpu.pipeline_mode<synchronous>, transform_indices = @transform_3, window_bounds = array<i64: 128, 128>}, {pipeline_mode = #tpu.pipeline_mode<synchronous>, transform_indices = @transform_4, window_bounds = array<i64: 1, 128>}, {transform_indices = @transform_5, window_bounds = array<i64: 1, 1, 128>}]} {
    %0 = tpu.iota {dimensions = array<i32: 0>} : vector<256x1xi32>
    %c16_i32 = arith.constant 16 : i32
    %c0_i32 = arith.constant 0 : i32
    %1 = arith.cmpi eq, %c16_i32, %c0_i32 : i32
    %c1_i32 = arith.constant 1 : i32
    %2 = arith.select %1, %c1_i32, %c16_i32 : i32
    %3 = vector.broadcast %2 : i32 to vector<256x1xi32>
    %4 = arith.remsi %0, %3 : vector<256x1xi32>
    %c0_i32_0 = arith.constant 0 : i32
    %5 = vector.broadcast %c0_i32_0 : i32 to vector<256x1xi32>
    %6 = arith.cmpi ne, %4, %5 : vector<256x1xi32>
    %c0_i32_1 = arith.constant 0 : i32
    %7 = vector.broadcast %c0_i32_1 : i32 to vector<256x1xi32>
    %8 = arith.cmpi slt, %4, %7 : vector<256x1xi32>
    %c0_i32_2 = arith.constant 0 : i32
    %9 = arith.cmpi slt, %2, %c0_i32_2 : i32
    %10 = vector.broadcast %9 : i1 to vector<256x1xi1>
    %11 = vector.broadcast %10 : vector<256x1xi1> to vector<256x1xi1>
    %12 = arith.xori %8, %11 : vector<256x1xi1>
    %13 = arith.andi %12, %6 : vector<256x1xi1>
    %14 = vector.broadcast %2 : i32 to vector<256x1xi32>
    %15 = arith.addi %4, %14 : vector<256x1xi32>
    %16 = arith.select %13, %15, %4 : vector<256x1xi1>, vector<256x1xi32>
    %cst = arith.constant 0.000000e+00 : f32
    %17 = vector.broadcast %cst : f32 to vector<256x128xf32>
    %c0 = arith.constant 0 : index
    %c0_3 = arith.constant 0 : index
    %c0_4 = arith.constant 0 : index
    %18 = vector.load %arg1[%c0, %c0_3, %c0_4] : memref<1x290x4xbf16, #tpu.memory_space<vmem>>, vector<1x256x4xbf16>
    %19 = vector.shape_cast %18 : vector<1x256x4xbf16> to vector<256x4xbf16>
    %c1_i32_5 = arith.constant 1 : i32
    %20 = vector.broadcast %c1_i32_5 : i32 to vector<256x1xi32>
    %21 = arith.cmpi sge, %16, %20 : vector<256x1xi32>
    %c0_i32_6 = arith.constant 0 : i32
    %22 = arith.sitofp %c0_i32_6 : i32 to bf16
    %23 = vector.shape_cast %21 : vector<256x1xi1> to vector<256x1xi1>
    %24 = vector.broadcast %23 : vector<256x1xi1> to vector<256x4xi1>
    %25 = vector.broadcast %22 : bf16 to vector<256x4xbf16>
    %26 = arith.select %24, %19, %25 : vector<256x4xi1>, vector<256x4xbf16>
    %c0_7 = arith.constant 0 : index
    %c0_8 = arith.constant 0 : index
    %c0_9 = arith.constant 0 : index
    %27 = vector.load %arg2[%c0_7, %c0_8, %c0_9] : memref<9x4x128xbf16, #tpu.memory_space<vmem>>, vector<1x4x128xbf16>
    %28 = vector.shape_cast %27 : vector<1x4x128xbf16> to vector<4x128xbf16>
    %cst_10 = arith.constant dense<0.000000e+00> : vector<256x128xf32>
    %29 = tpu.matmul %26, %28, %cst_10 {dimension_numbers = #tpu.dot_dimension_numbers<[1], [0], [0], [1], [0, 0, 1, 1], [], []>} : vector<256x4xbf16>, vector<4x128xbf16>, vector<256x128xf32> -> vector<256x128xf32>
    %30 = arith.addf %17, %29 : vector<256x128xf32>
    %c0_11 = arith.constant 0 : index
    %c1 = arith.constant 1 : index
    %c0_12 = arith.constant 0 : index
    %31 = vector.load %arg1[%c0_11, %c1, %c0_12] : memref<1x290x4xbf16, #tpu.memory_space<vmem>>, vector<1x256x4xbf16>
    %32 = vector.shape_cast %31 : vector<1x256x4xbf16> to vector<256x4xbf16>
    %c1_13 = arith.constant 1 : index
    %c0_14 = arith.constant 0 : index
    %c0_15 = arith.constant 0 : index
    %33 = vector.load %arg2[%c1_13, %c0_14, %c0_15] : memref<9x4x128xbf16, #tpu.memory_space<vmem>>, vector<1x4x128xbf16>
    %34 = vector.shape_cast %33 : vector<1x4x128xbf16> to vector<4x128xbf16>
    %cst_16 = arith.constant dense<0.000000e+00> : vector<256x128xf32>
    %35 = tpu.matmul %32, %34, %cst_16 {dimension_numbers = #tpu.dot_dimension_numbers<[1], [0], [0], [1], [0, 0, 1, 1], [], []>} : vector<256x4xbf16>, vector<4x128xbf16>, vector<256x128xf32> -> vector<256x128xf32>
    %36 = arith.addf %30, %35 : vector<256x128xf32>
    %c0_17 = arith.constant 0 : index
    %c2 = arith.constant 2 : index
    %c0_18 = arith.constant 0 : index
    %37 = vector.load %arg1[%c0_17, %c2, %c0_18] : memref<1x290x4xbf16, #tpu.memory_space<vmem>>, vector<1x256x4xbf16>
    %38 = vector.shape_cast %37 : vector<1x256x4xbf16> to vector<256x4xbf16>
    %c14_i32 = arith.constant 14 : i32
    %39 = vector.broadcast %c14_i32 : i32 to vector<256x1xi32>
    %40 = arith.cmpi sle, %16, %39 : vector<256x1xi32>
    %c0_i32_19 = arith.constant 0 : i32
    %41 = arith.sitofp %c0_i32_19 : i32 to bf16
    %42 = vector.shape_cast %40 : vector<256x1xi1> to vector<256x1xi1>
    %43 = vector.broadcast %42 : vector<256x1xi1> to vector<256x4xi1>
    %44 = vector.broadcast %41 : bf16 to vector<256x4xbf16>
    %45 = arith.select %43, %38, %44 : vector<256x4xi1>, vector<256x4xbf16>
    %c2_20 = arith.constant 2 : index
    %c0_21 = arith.constant 0 : index
    %c0_22 = arith.constant 0 : index
    %46 = vector.load %arg2[%c2_20, %c0_21, %c0_22] : memref<9x4x128xbf16, #tpu.memory_space<vmem>>, vector<1x4x128xbf16>
    %47 = vector.shape_cast %46 : vector<1x4x128xbf16> to vector<4x128xbf16>
    %cst_23 = arith.constant dense<0.000000e+00> : vector<256x128xf32>
    %48 = tpu.matmul %45, %47, %cst_23 {dimension_numbers = #tpu.dot_dimension_numbers<[1], [0], [0], [1], [0, 0, 1, 1], [], []>} : vector<256x4xbf16>, vector<4x128xbf16>, vector<256x128xf32> -> vector<256x128xf32>
    %49 = arith.addf %36, %48 : vector<256x128xf32>
    %c0_24 = arith.constant 0 : index
    %c16 = arith.constant 16 : index
    %c0_25 = arith.constant 0 : index
    %50 = vector.load %arg1[%c0_24, %c16, %c0_25] : memref<1x290x4xbf16, #tpu.memory_space<vmem>>, vector<1x256x4xbf16>
    %51 = vector.shape_cast %50 : vector<1x256x4xbf16> to vector<256x4xbf16>
    %c1_i32_26 = arith.constant 1 : i32
    %52 = vector.broadcast %c1_i32_26 : i32 to vector<256x1xi32>
    %53 = arith.cmpi sge, %16, %52 : vector<256x1xi32>
    %c0_i32_27 = arith.constant 0 : i32
    %54 = arith.sitofp %c0_i32_27 : i32 to bf16
    %55 = vector.shape_cast %53 : vector<256x1xi1> to vector<256x1xi1>
    %56 = vector.broadcast %55 : vector<256x1xi1> to vector<256x4xi1>
    %57 = vector.broadcast %54 : bf16 to vector<256x4xbf16>
    %58 = arith.select %56, %51, %57 : vector<256x4xi1>, vector<256x4xbf16>
    %c3 = arith.constant 3 : index
    %c0_28 = arith.constant 0 : index
    %c0_29 = arith.constant 0 : index
    %59 = vector.load %arg2[%c3, %c0_28, %c0_29] : memref<9x4x128xbf16, #tpu.memory_space<vmem>>, vector<1x4x128xbf16>
    %60 = vector.shape_cast %59 : vector<1x4x128xbf16> to vector<4x128xbf16>
    %cst_30 = arith.constant dense<0.000000e+00> : vector<256x128xf32>
    %61 = tpu.matmul %58, %60, %cst_30 {dimension_numbers = #tpu.dot_dimension_numbers<[1], [0], [0], [1], [0, 0, 1, 1], [], []>} : vector<256x4xbf16>, vector<4x128xbf16>, vector<256x128xf32> -> vector<256x128xf32>
    %62 = arith.addf %49, %61 : vector<256x128xf32>
    %c0_31 = arith.constant 0 : index
    %c17 = arith.constant 17 : index
    %c0_32 = arith.constant 0 : index
    %63 = vector.load %arg1[%c0_31, %c17, %c0_32] : memref<1x290x4xbf16, #tpu.memory_space<vmem>>, vector<1x256x4xbf16>
    %64 = vector.shape_cast %63 : vector<1x256x4xbf16> to vector<256x4xbf16>
    %c4 = arith.constant 4 : index
    %c0_33 = arith.constant 0 : index
    %c0_34 = arith.constant 0 : index
    %65 = vector.load %arg2[%c4, %c0_33, %c0_34] : memref<9x4x128xbf16, #tpu.memory_space<vmem>>, vector<1x4x128xbf16>
    %66 = vector.shape_cast %65 : vector<1x4x128xbf16> to vector<4x128xbf16>
    %cst_35 = arith.constant dense<0.000000e+00> : vector<256x128xf32>
    %67 = tpu.matmul %64, %66, %cst_35 {dimension_numbers = #tpu.dot_dimension_numbers<[1], [0], [0], [1], [0, 0, 1, 1], [], []>} : vector<256x4xbf16>, vector<4x128xbf16>, vector<256x128xf32> -> vector<256x128xf32>
    %68 = arith.addf %62, %67 : vector<256x128xf32>
    %c0_36 = arith.constant 0 : index
    %c18 = arith.constant 18 : index
    %c0_37 = arith.constant 0 : index
    %69 = vector.load %arg1[%c0_36, %c18, %c0_37] : memref<1x290x4xbf16, #tpu.memory_space<vmem>>, vector<1x256x4xbf16>
    %70 = vector.shape_cast %69 : vector<1x256x4xbf16> to vector<256x4xbf16>
    %c14_i32_38 = arith.constant 14 : i32
    %71 = vector.broadcast %c14_i32_38 : i32 to vector<256x1xi32>
    %72 = arith.cmpi sle, %16, %71 : vector<256x1xi32>
    %c0_i32_39 = arith.constant 0 : i32
    %73 = arith.sitofp %c0_i32_39 : i32 to bf16
    %74 = vector.shape_cast %72 : vector<256x1xi1> to vector<256x1xi1>
    %75 = vector.broadcast %74 : vector<256x1xi1> to vector<256x4xi1>
    %76 = vector.broadcast %73 : bf16 to vector<256x4xbf16>
    %77 = arith.select %75, %70, %76 : vector<256x4xi1>, vector<256x4xbf16>
    %c5 = arith.constant 5 : index
    %c0_40 = arith.constant 0 : index
    %c0_41 = arith.constant 0 : index
    %78 = vector.load %arg2[%c5, %c0_40, %c0_41] : memref<9x4x128xbf16, #tpu.memory_space<vmem>>, vector<1x4x128xbf16>
    %79 = vector.shape_cast %78 : vector<1x4x128xbf16> to vector<4x128xbf16>
    %cst_42 = arith.constant dense<0.000000e+00> : vector<256x128xf32>
    %80 = tpu.matmul %77, %79, %cst_42 {dimension_numbers = #tpu.dot_dimension_numbers<[1], [0], [0], [1], [0, 0, 1, 1], [], []>} : vector<256x4xbf16>, vector<4x128xbf16>, vector<256x128xf32> -> vector<256x128xf32>
    %81 = arith.addf %68, %80 : vector<256x128xf32>
    %c0_43 = arith.constant 0 : index
    %c32 = arith.constant 32 : index
    %c0_44 = arith.constant 0 : index
    %82 = vector.load %arg1[%c0_43, %c32, %c0_44] : memref<1x290x4xbf16, #tpu.memory_space<vmem>>, vector<1x256x4xbf16>
    %83 = vector.shape_cast %82 : vector<1x256x4xbf16> to vector<256x4xbf16>
    %c1_i32_45 = arith.constant 1 : i32
    %84 = vector.broadcast %c1_i32_45 : i32 to vector<256x1xi32>
    %85 = arith.cmpi sge, %16, %84 : vector<256x1xi32>
    %c0_i32_46 = arith.constant 0 : i32
    %86 = arith.sitofp %c0_i32_46 : i32 to bf16
    %87 = vector.shape_cast %85 : vector<256x1xi1> to vector<256x1xi1>
    %88 = vector.broadcast %87 : vector<256x1xi1> to vector<256x4xi1>
    %89 = vector.broadcast %86 : bf16 to vector<256x4xbf16>
    %90 = arith.select %88, %83, %89 : vector<256x4xi1>, vector<256x4xbf16>
    %c6 = arith.constant 6 : index
    %c0_47 = arith.constant 0 : index
    %c0_48 = arith.constant 0 : index
    %91 = vector.load %arg2[%c6, %c0_47, %c0_48] : memref<9x4x128xbf16, #tpu.memory_space<vmem>>, vector<1x4x128xbf16>
    %92 = vector.shape_cast %91 : vector<1x4x128xbf16> to vector<4x128xbf16>
    %cst_49 = arith.constant dense<0.000000e+00> : vector<256x128xf32>
    %93 = tpu.matmul %90, %92, %cst_49 {dimension_numbers = #tpu.dot_dimension_numbers<[1], [0], [0], [1], [0, 0, 1, 1], [], []>} : vector<256x4xbf16>, vector<4x128xbf16>, vector<256x128xf32> -> vector<256x128xf32>
    %94 = arith.addf %81, %93 : vector<256x128xf32>
    %c0_50 = arith.constant 0 : index
    %c33 = arith.constant 33 : index
    %c0_51 = arith.constant 0 : index
    %95 = vector.load %arg1[%c0_50, %c33, %c0_51] : memref<1x290x4xbf16, #tpu.memory_space<vmem>>, vector<1x256x4xbf16>
    %96 = vector.shape_cast %95 : vector<1x256x4xbf16> to vector<256x4xbf16>
    %c7 = arith.constant 7 : index
    %c0_52 = arith.constant 0 : index
    %c0_53 = arith.constant 0 : index
    %97 = vector.load %arg2[%c7, %c0_52, %c0_53] : memref<9x4x128xbf16, #tpu.memory_space<vmem>>, vector<1x4x128xbf16>
    %98 = vector.shape_cast %97 : vector<1x4x128xbf16> to vector<4x128xbf16>
    %cst_54 = arith.constant dense<0.000000e+00> : vector<256x128xf32>
    %99 = tpu.matmul %96, %98, %cst_54 {dimension_numbers = #tpu.dot_dimension_numbers<[1], [0], [0], [1], [0, 0, 1, 1], [], []>} : vector<256x4xbf16>, vector<4x128xbf16>, vector<256x128xf32> -> vector<256x128xf32>
    %100 = arith.addf %94, %99 : vector<256x128xf32>
    %c0_55 = arith.constant 0 : index
    %c34 = arith.constant 34 : index
    %c0_56 = arith.constant 0 : index
    %101 = vector.load %arg1[%c0_55, %c34, %c0_56] : memref<1x290x4xbf16, #tpu.memory_space<vmem>>, vector<1x256x4xbf16>
    %102 = vector.shape_cast %101 : vector<1x256x4xbf16> to vector<256x4xbf16>
    %c14_i32_57 = arith.constant 14 : i32
    %103 = vector.broadcast %c14_i32_57 : i32 to vector<256x1xi32>
    %104 = arith.cmpi sle, %16, %103 : vector<256x1xi32>
    %c0_i32_58 = arith.constant 0 : i32
    %105 = arith.sitofp %c0_i32_58 : i32 to bf16
    %106 = vector.shape_cast %104 : vector<256x1xi1> to vector<256x1xi1>
    %107 = vector.broadcast %106 : vector<256x1xi1> to vector<256x4xi1>
    %108 = vector.broadcast %105 : bf16 to vector<256x4xbf16>
    %109 = arith.select %107, %102, %108 : vector<256x4xi1>, vector<256x4xbf16>
    %c8 = arith.constant 8 : index
    %c0_59 = arith.constant 0 : index
    %c0_60 = arith.constant 0 : index
    %110 = vector.load %arg2[%c8, %c0_59, %c0_60] : memref<9x4x128xbf16, #tpu.memory_space<vmem>>, vector<1x4x128xbf16>
    %111 = vector.shape_cast %110 : vector<1x4x128xbf16> to vector<4x128xbf16>
    %cst_61 = arith.constant dense<0.000000e+00> : vector<256x128xf32>
    %112 = tpu.matmul %109, %111, %cst_61 {dimension_numbers = #tpu.dot_dimension_numbers<[1], [0], [0], [1], [0, 0, 1, 1], [], []>} : vector<256x4xbf16>, vector<4x128xbf16>, vector<256x128xf32> -> vector<256x128xf32>
    %113 = arith.addf %100, %112 : vector<256x128xf32>
    %c0_62 = arith.constant 0 : index
    %c0_63 = arith.constant 0 : index
    %114 = vector.load %arg3[%c0_62, %c0_63] : memref<1x128xf32, #tpu.memory_space<vmem>>, vector<1x128xf32>
    %115 = vector.broadcast %114 : vector<1x128xf32> to vector<256x128xf32>
    %116 = arith.addf %113, %115 : vector<256x128xf32>
    %cst_64 = arith.constant 0.000000e+00 : f32
    %117 = vector.broadcast %cst_64 : f32 to vector<256x128xf32>
    %118 = arith.maximumf %116, %117 : vector<256x128xf32>
    %cst_65 = arith.constant dense<0.000000e+00> : vector<128xf32>
    %119 = vector.multi_reduction <add>, %118, %cst_65 [0] : vector<256x128xf32> to vector<128xf32>
    %120 = vector.shape_cast %119 : vector<128xf32> to vector<1x128xf32>
    %cst_66 = arith.constant 3.906250e-03 : f32
    %121 = vector.broadcast %cst_66 : f32 to vector<1x128xf32>
    %122 = arith.mulf %120, %121 : vector<1x128xf32>
    %c0_67 = arith.constant 0 : index
    %c0_68 = arith.constant 0 : index
    %123 = vector.load %arg4[%c0_67, %c0_68] : memref<128x128xf32, #tpu.memory_space<vmem>>, vector<128x128xf32>
    %cst_69 = arith.constant dense<0.000000e+00> : vector<1x128xf32>
    %124 = tpu.matmul %122, %123, %cst_69 {dimension_numbers = #tpu.dot_dimension_numbers<[1], [0], [0], [1], [0, 0, 1, 1], [], []>} : vector<1x128xf32>, vector<128x128xf32>, vector<1x128xf32> -> vector<1x128xf32>
    %c0_70 = arith.constant 0 : index
    %c0_71 = arith.constant 0 : index
    %125 = vector.load %arg5[%c0_70, %c0_71] : memref<1x128xf32, #tpu.memory_space<vmem>>, vector<1x128xf32>
    %126 = arith.addf %124, %125 : vector<1x128xf32>
    %127 = vector.shape_cast %126 : vector<1x128xf32> to vector<1x1x128xf32>
    %c0_72 = arith.constant 0 : index
    %c0_73 = arith.constant 0 : index
    %c0_74 = arith.constant 0 : index
    %128 = vector.load %arg6[%c0_72, %c0_73, %c0_74] : memref<1x1x128xf32, #tpu.memory_space<vmem>>, vector<1x1x128xf32>
    tpu.vector_store %arg6[%c0_72, %c0_73, %c0_74], %127 {strides = array<i32>} : memref<1x1x128xf32, #tpu.memory_space<vmem>>, vector<1x1x128xf32>,
    return
  }
  func.func @transform_0(%arg0: i32) -> (i32, i32, i32) {
    %c0_i32 = arith.constant 0 : i32
    %c0_i32_0 = arith.constant 0 : i32
    %c0_i32_1 = arith.constant 0 : i32
    return %arg0, %c0_i32, %c0_i32_0 : i32, i32, i32
  }
  func.func @transform_1(%arg0: i32) -> (i32, i32, i32) {
    %c0_i32 = arith.constant 0 : i32
    %c0_i32_0 = arith.constant 0 : i32
    %c0_i32_1 = arith.constant 0 : i32
    %c0_i32_2 = arith.constant 0 : i32
    return %c0_i32, %c0_i32_0, %c0_i32_1 : i32, i32, i32
  }
  func.func @transform_2(%arg0: i32) -> (i32, i32) {
    %c0_i32 = arith.constant 0 : i32
    %c0_i32_0 = arith.constant 0 : i32
    %c0_i32_1 = arith.constant 0 : i32
    return %c0_i32, %c0_i32_0 : i32, i32
  }
  func.func @transform_3(%arg0: i32) -> (i32, i32) {
    %c0_i32 = arith.constant 0 : i32
    %c0_i32_0 = arith.constant 0 : i32
    %c0_i32_1 = arith.constant 0 : i32
    return %c0_i32, %c0_i32_0 : i32, i32
  }
  func.func @transform_4(%arg0: i32) -> (i32, i32) {
    %c0_i32 = arith.constant 0 : i32
    %c0_i32_0 = arith.constant 0 : i32
    %c0_i32_1 = arith.constant 0 : i32
    return %c0_i32, %c0_i32_0 : i32, i32
  }
  func.func @transform_5(%arg0: i32) -> (i32, i32, i32) {
    %c0_i32 = arith.constant 0 : i32
    %c0_i32_0 = arith.constant 0 : i32
    %c0_i32_1 = arith.constant 0 : i32
    return %arg0, %c0_i32, %c0_i32_0 : i32, i32, i32
  }
}

</mosaic_0001>

<llo_original>
// kernel: model_forward.1
$region0: #{model_forward.1}
  #allocation0 [shape = 'u32[]', space=smem, size = 0x4, offset = 0x4, fixed_abs, tag = 'smem constant byte address 0x4 - core index']
  #allocation1 [shape = 'u32[144,128]{1,0:T(1,128)}', space=vmem, size = 0x12000, scoped, tag = 'internal scratch']
  %s0 = inlined_call_operand.vmem [shape: bf16[2,290,4], index: 0, kind: input, shape index: {}]
  %s1 = inlined_call_operand.vmem [shape: bf16[9,4,128], index: 1, kind: input, shape index: {}]
  %s2 = inlined_call_operand.vmem [shape: f32[1,128], index: 2, kind: input, shape index: {}]
  %s3 = inlined_call_operand.vmem [shape: f32[128,128], index: 3, kind: input, shape index: {}]
  %s4 = inlined_call_operand.vmem [shape: f32[1,128], index: 4, kind: input, shape index: {}]
  %s5 = inlined_call_operand.hbm [shape: f32[2,1,128], index: 5, kind: output, shape index: {}]
  %s6 = sld [smem:[#allocation0]]
  $region53: #{model_forward.1} parent=0
    _
  %s8 = ssub.s32 1, %s6
  %s9 = scalar_select 0, %s8, %s6
  $region1: #{model_forward.1} parent=0
    #allocation2 [shape = 'u8[1024]{0}', space=vmem, size = 0x400, scoped, tag = 'output window, operand 0']
    #allocation3 [shape = 's32[2]{0}', space=sflag, size = 0x8, scoped, tag = 'scoped memory for model_forward.1']
    %10 = vsyncpa [#allocation3], 0
    %s11 = scalar_lea.sflag [#allocation3], 1
    %12 = vsyncpa %s11, 0
    loop: start=0, step=1, limit=4
    $region2: #{model_forward.1} parent=1 // loop_pre_header
      _
    $region3: #{model_forward.1} parent=1 // loop_header
      %s14 = sphi 0, %s18
      %p15 = scmp.ge.s32.totalorder %s14, 4
      %s24 = sphi 0, %s26
      %s27 = sphi 0, %s24
      %s28 = sphi 0, %s27
      %s44 = sphi 0, %s28
      %s48 = sphi 0, %s48
      %s50 = sphi 0, %s48
      %s51 = sphi 0, %s50
      %s65 = sphi 0, %s51
      %s69 = sphi 0, %s69
      %s71 = sphi 0, %s69
      %s72 = sphi 0, %s71
      %s86 = sphi 0, %s72
      %s90 = sphi 0, %s90
      %s92 = sphi 0, %s90
      %s93 = sphi 0, %s92
      %s107 = sphi 0, %s93
      %s111 = sphi 0, %s111
      %s113 = sphi 0, %s111
      %s114 = sphi 0, %s113
      %s128 = sphi 0, %s114
      %s134 = sphi 0, %s136
      %s137 = sphi 0, %s134
      %s138 = sphi 0, %s137
      %s154 = sphi 0, %s138
    $region4: #{model_forward.1} parent=1 // loop_header_branch
      %17 = sbr.rel (%p15) target = $region8
    $region5: #{model_forward.1} parent=1 // loop_body
      %s19 = ssub.s32 %s14, 1
      %s20 = ssub.s32 %s14, 2
      %s21 = sadd.s32 %s14, 1
      %s22 = ssub.s32 %s14, %s21
      %p23 = scmp.eq.s32.totalorder %s22, 0
      %s25 = sadd.s32 %s24, 1
      %s26 = scalar_select %p23, %s24, %s25
      %p29 = pneg %p23
      %p30 = scmp.eq.s32.totalorder %s14, 1
      %p31 = por %p29, %p30
      %p32 = scmp.ne.s32.totalorder %s24, %s27
      %p33 = scmp.eq.s32.totalorder %s14, 0
      %p34 = por %p32, %p33
      %p35 = scmp.ne.s32.totalorder %s24, %s27
      %p36 = scmp.eq.s32.totalorder %s19, 1
      %p37 = por %p35, %p36
      %p38 = scmp.ne.s32.totalorder %s27, %s28
      %p39 = scmp.eq.s32.totalorder %s19, 0
      %p40 = por %p38, %p39
      %p41 = scmp.ne.s32.totalorder %s27, %s28
      %p42 = scmp.eq.s32.totalorder %s20, 1
      %p43 = por %p41, %p42
      %p45 = scmp.ne.s32.totalorder %s28, %s44
      %p46 = scmp.eq.s32.totalorder %s20, 0
      %p47 = por %p45, %p46
      %s49 = sadd.s32 %s48, 1
      %p52 = scmp.eq.s32.totalorder %s14, 1
      %p53 = scmp.ne.s32.totalorder %s48, %s50
      %p54 = scmp.eq.s32.totalorder %s14, 0
      %p55 = por %p53, %p54
      %p56 = scmp.ne.s32.totalorder %s48, %s50
      %p57 = scmp.eq.s32.totalorder %s19, 1
      %p58 = por %p56, %p57
      %p59 = scmp.ne.s32.totalorder %s50, %s51
      %p60 = scmp.eq.s32.totalorder %s19, 0
      %p61 = por %p59, %p60
      %p62 = scmp.ne.s32.totalorder %s50, %s51
      %p63 = scmp.eq.s32.totalorder %s20, 1
      %p64 = por %p62, %p63
      %p66 = scmp.ne.s32.totalorder %s51, %s65
      %p67 = scmp.eq.s32.totalorder %s20, 0
      %p68 = por %p66, %p67
      %s70 = sadd.s32 %s69, 1
      %p73 = scmp.eq.s32.totalorder %s14, 1
      %p74 = scmp.ne.s32.totalorder %s69, %s71
      %p75 = scmp.eq.s32.totalorder %s14, 0
      %p76 = por %p74, %p75
      %p77 = scmp.ne.s32.totalorder %s69, %s71
      %p78 = scmp.eq.s32.totalorder %s19, 1
      %p79 = por %p77, %p78
      %p80 = scmp.ne.s32.totalorder %s71, %s72
      %p81 = scmp.eq.s32.totalorder %s19, 0
      %p82 = por %p80, %p81
      %p83 = scmp.ne.s32.totalorder %s71, %s72
      %p84 = scmp.eq.s32.totalorder %s20, 1
      %p85 = por %p83, %p84
      %p87 = scmp.ne.s32.totalorder %s72, %s86
      %p88 = scmp.eq.s32.totalorder %s20, 0
      %p89 = por %p87, %p88
      %s91 = sadd.s32 %s90, 1
      %p94 = scmp.eq.s32.totalorder %s14, 1
      %p95 = scmp.ne.s32.totalorder %s90, %s92
      %p96 = scmp.eq.s32.totalorder %s14, 0
      %p97 = por %p95, %p96
      %p98 = scmp.ne.s32.totalorder %s90, %s92
      %p99 = scmp.eq.s32.totalorder %s19, 1
      %p100 = por %p98, %p99
      %p101 = scmp.ne.s32.totalorder %s92, %s93
      %p102 = scmp.eq.s32.totalorder %s19, 0
      %p103 = por %p101, %p102
      %p104 = scmp.ne.s32.totalorder %s92, %s93
      %p105 = scmp.eq.s32.totalorder %s20, 1
      %p106 = por %p104, %p105
      %p108 = scmp.ne.s32.totalorder %s93, %s107
      %p109 = scmp.eq.s32.totalorder %s20, 0
      %p110 = por %p108, %p109
      %s112 = sadd.s32 %s111, 1
      %p115 = scmp.eq.s32.totalorder %s14, 1
      %p116 = scmp.ne.s32.totalorder %s111, %s113
      %p117 = scmp.eq.s32.totalorder %s14, 0
      %p118 = por %p116, %p117
      %p119 = scmp.ne.s32.totalorder %s111, %s113
      %p120 = scmp.eq.s32.totalorder %s19, 1
      %p121 = por %p119, %p120
      %p122 = scmp.ne.s32.totalorder %s113, %s114
      %p123 = scmp.eq.s32.totalorder %s19, 0
      %p124 = por %p122, %p123
      %p125 = scmp.ne.s32.totalorder %s113, %s114
      %p126 = scmp.eq.s32.totalorder %s20, 1
      %p127 = por %p125, %p126
      %p129 = scmp.ne.s32.totalorder %s114, %s128
      %p130 = scmp.eq.s32.totalorder %s20, 0
      %p131 = por %p129, %p130
      %s132 = ssub.s32 %s14, %s21
      %p133 = scmp.eq.s32.totalorder %s132, 0
      %s135 = sadd.s32 %s134, 1
      %s136 = scalar_select %p133, %s134, %s135
      %p139 = pneg %p133
      %p140 = scmp.eq.s32.totalorder %s14, 1
      %p141 = por %p139, %p140
      %p142 = scmp.ne.s32.totalorder %s134, %s137
      %p143 = scmp.eq.s32.totalorder %s14, 0
      %p144 = por %p142, %p143
      %p145 = scmp.ne.s32.totalorder %s134, %s137
      %p146 = scmp.eq.s32.totalorder %s19, 1
      %p147 = por %p145, %p146
      %p148 = scmp.ne.s32.totalorder %s137, %s138
      %p149 = scmp.eq.s32.totalorder %s19, 0
      %p150 = por %p148, %p149
      %p151 = scmp.ne.s32.totalorder %s137, %s138
      %p152 = scmp.eq.s32.totalorder %s20, 1
      %p153 = por %p151, %p152
      %p155 = scmp.ne.s32.totalorder %s138, %s154
      %p156 = scmp.eq.s32.totalorder %s20, 0
      %p157 = por %p155, %p156
      %p158 = scmp.le.s32.totalorder 1, %s14
      %p159 = scmp.lt.s32.totalorder %s14, 3
      %p160 = pnand %p158, %p159
      %p161 = pneg %p160
      // Predicated region
      $region9: #{model_forward.1} parent=5 // pred_check
        _
      $region10: #{model_forward.1} parent=5 // pred_check_branch
        %163 = sbr.rel (%p160) target = $region12
      $region11: #{model_forward.1} parent=5 // pred_region
        %s164 = ssub.s32 %s14, 1
        // Predicated region
        $region13: #{model_forward.1} parent=11 // pred_check
          %p165 = pneg %p61
        $region14: #{model_forward.1} parent=11 // pred_check_branch
          %167 = sbr.rel (%p165) target = $region16
        $region15: #{model_forward.1} parent=11 // pred_region
          _
        $region16: #{model_forward.1} parent=11 // pred_fallthru
          _
        // Predicated region
        $region17: #{model_forward.1} parent=11 // pred_check
          %p168 = pneg %p82
        $region18: #{model_forward.1} parent=11 // pred_check_branch
          %170 = sbr.rel (%p168) target = $region20
        $region19: #{model_forward.1} parent=11 // pred_region
          _
        $region20: #{model_forward.1} parent=11 // pred_fallthru
          _
        // Predicated region
        $region21: #{model_forward.1} parent=11 // pred_check
          %p171 = pneg %p103
        $region22: #{model_forward.1} parent=11 // pred_check_branch
          %173 = sbr.rel (%p171) target = $region24
        $region23: #{model_forward.1} parent=11 // pred_region
          _
        $region24: #{model_forward.1} parent=11 // pred_fallthru
          _
        // Predicated region
        $region25: #{model_forward.1} parent=11 // pred_check
          %p174 = pneg %p124
        $region26: #{model_forward.1} parent=11 // pred_check_branch
          %176 = sbr.rel (%p174) target = $region28
        $region27: #{model_forward.1} parent=11 // pred_region
          _
        $region28: #{model_forward.1} parent=11 // pred_fallthru
          _
      $region12: #{model_forward.1} parent=5 // pred_fallthru
        _
      %p177 = scmp.lt.s32.totalorder %s14, 2
      // Predicated region
      $region29: #{model_forward.1} parent=5 // pred_check
        %p178 = pneg %p177
      $region30: #{model_forward.1} parent=5 // pred_check_branch
        %180 = sbr.rel (%p178) target = $region32
      $region31: #{model_forward.1} parent=5 // pred_region
        // Predicated region
        $region33: #{model_forward.1} parent=31 // pred_check
          %p181 = pneg %p34
        $region34: #{model_forward.1} parent=31 // pred_check_branch
          %183 = sbr.rel (%p181) target = $region36
        $region35: #{model_forward.1} parent=31 // pred_region
          %p184 = scmp.lt.s32.totalorder %s14, 1
          %s185 = scalar_select %p184, %s14, 1
          %s186 = smul.addr %s185, 37
          %s187 = smul.addr %s186, 4
          %s188 = scalar_lea.vmem %s0, %s187
        $region36: #{model_forward.1} parent=31 // pred_fallthru
          _
      $region32: #{model_forward.1} parent=5 // pred_fallthru
        _
      %p189 = scmp.le.s32.totalorder 1, %s14
      %p190 = scmp.lt.s32.totalorder %s14, 3
      %p191 = pnand %p189, %p190
      %p192 = pneg %p191
      // Predicated region
      $region37: #{model_forward.1} parent=5 // pred_check
        _
      $region38: #{model_forward.1} parent=5 // pred_check_branch
        %194 = sbr.rel (%p191) target = $region40
      $region39: #{model_forward.1} parent=5 // pred_region
        %s195 = ssub.s32 %s14, 1
        %p196 = scmp.lt.s32.totalorder %s19, 1
        %s197 = scalar_select %p196, %s19, 1
        %s198 = smul.addr %s197, 37
        %s199 = smul.addr %s198, 4
        %s200 = scalar_lea.vmem %s0, %s199
        %p201 = pneg %p40
        %p202 = pneg %p37
        %p203 = pneg %p61
        %p204 = pneg %p58
        %p205 = pneg %p82
        %p206 = pneg %p79
        %p207 = pneg %p103
        %p208 = pneg %p100
        %p209 = pneg %p124
        %p210 = pneg %p121
        %p211 = pneg %p150
        %p212 = pneg %p147
        %s213 = sand.u32 %s137, 1
        %s214 = scalar_lea.sflag [#allocation3], %s213
        %s215 = sand.u32 %s137, 1
        %s216 = scalar_lea.vmem [#allocation2], %s215
        %p217 = scmp.lt.s32.totalorder %s19, 1
        %s218 = scalar_select %p217, %s19, 1
        %s219 = smul.addr %s218, 37
        %s220 = smul.addr %s219, 4
        %s221 = scalar_lea.vmem %s0, %s220
        %v225 = vlaneseq
        %v226 = vshrl.u32 %v225, 7
        %v227 = vadd.s32 %v226, 8
        %v228 = vadd.s32 %v226, 16
        %v229 = vadd.s32 %v226, 24
        %v230 = vadd.s32 %v226, 32
        %v231 = vadd.s32 %v226, 40
        %v232 = vadd.s32 %v226, 48
        %v233 = vadd.s32 %v226, 56
        %v234 = vadd.s32 %v226, 64
        %v235 = vadd.s32 %v226, 72
        %v236 = vadd.s32 %v226, 80
        %v237 = vadd.s32 %v226, 88
        %v238 = vadd.s32 %v226, 96
        %v239 = vadd.s32 %v226, 104
        %v240 = vadd.s32 %v226, 112
        %v241 = vadd.s32 %v226, 120
        %v242 = vadd.s32 %v226, 128
        %v243 = vadd.s32 %v226, 136
        %v244 = vadd.s32 %v226, 144
        %v245 = vadd.s32 %v226, 152
        %v246 = vadd.s32 %v226, 160
        %v247 = vadd.s32 %v226, 168
        %v248 = vadd.s32 %v226, 176
        %v249 = vadd.s32 %v226, 184
        %v250 = vadd.s32 %v226, 192
        %v251 = vadd.s32 %v226, 200
        %v252 = vadd.s32 %v226, 208
        %v253 = vadd.s32 %v226, 216
        %v254 = vadd.s32 %v226, 224
        %v255 = vadd.s32 %v226, 232
        %v256 = vadd.s32 %v226, 240
        %v257 = vadd.s32 %v226, 248
        %vm258 = vcmp.lt.s32.totalorder %v226, 0
        %v259 = vsub.s32 0, %v226
        %v260 = vsel %vm258, %v259, %v226
        %v261 = vshrl.u32 %v260, 4
        %v262 = vand.u32 %v260, 15
        %v263 = vsub.s32 0, %v262
        %v264 = vsel %vm258, %v263, %v262
        %vm265 = vcmp.lt.s32.totalorder %v227, 0
        %v266 = vsub.s32 0, %v227
        %v267 = vsel %vm265, %v266, %v227
        %v268 = vshrl.u32 %v267, 4
        %v269 = vand.u32 %v267, 15
        %v270 = vsub.s32 0, %v269
        %v271 = vsel %vm265, %v270, %v269
        %vm272 = vcmp.lt.s32.totalorder %v228, 0
        %v273 = vsub.s32 0, %v228
        %v274 = vsel %vm272, %v273, %v228
        %v275 = vshrl.u32 %v274, 4
        %v276 = vand.u32 %v274, 15
        %v277 = vsub.s32 0, %v276
        %v278 = vsel %vm272, %v277, %v276
        %vm279 = vcmp.lt.s32.totalorder %v229, 0
        %v280 = vsub.s32 0, %v229
        %v281 = vsel %vm279, %v280, %v229
        %v282 = vshrl.u32 %v281, 4
        %v283 = vand.u32 %v281, 15
        %v284 = vsub.s32 0, %v283
        %v285 = vsel %vm279, %v284, %v283
        %vm286 = vcmp.lt.s32.totalorder %v230, 0
        %v287 = vsub.s32 0, %v230
        %v288 = vsel %vm286, %v287, %v230
        %v289 = vshrl.u32 %v288, 4
        %v290 = vand.u32 %v288, 15
        %v291 = vsub.s32 0, %v290
        %v292 = vsel %vm286, %v291, %v290
        %vm293 = vcmp.lt.s32.totalorder %v231, 0
        %v294 = vsub.s32 0, %v231
        %v295 = vsel %vm293, %v294, %v231
        %v296 = vshrl.u32 %v295, 4
        %v297 = vand.u32 %v295, 15
        %v298 = vsub.s32 0, %v297
        %v299 = vsel %vm293, %v298, %v297
        %vm300 = vcmp.lt.s32.totalorder %v232, 0
        %v301 = vsub.s32 0, %v232
        %v302 = vsel %vm300, %v301, %v232
        %v303 = vshrl.u32 %v302, 4
        %v304 = vand.u32 %v302, 15
        %v305 = vsub.s32 0, %v304
        %v306 = vsel %vm300, %v305, %v304
        %vm307 = vcmp.lt.s32.totalorder %v233, 0
        %v308 = vsub.s32 0, %v233
        %v309 = vsel %vm307, %v308, %v233
        %v310 = vshrl.u32 %v309, 4
        %v311 = vand.u32 %v309, 15
        %v312 = vsub.s32 0, %v311
        %v313 = vsel %vm307, %v312, %v311
        %vm314 = vcmp.lt.s32.totalorder %v234, 0
        %v315 = vsub.s32 0, %v234
        %v316 = vsel %vm314, %v315, %v234
        %v317 = vshrl.u32 %v316, 4
        %v318 = vand.u32 %v316, 15
        %v319 = vsub.s32 0, %v318
        %v320 = vsel %vm314, %v319, %v318
        %vm321 = vcmp.lt.s32.totalorder %v235, 0
        %v322 = vsub.s32 0, %v235
        %v323 = vsel %vm321, %v322, %v235
        %v324 = vshrl.u32 %v323, 4
        %v325 = vand.u32 %v323, 15
        %v326 = vsub.s32 0, %v325
        %v327 = vsel %vm321, %v326, %v325
        %vm328 = vcmp.lt.s32.totalorder %v236, 0
        %v329 = vsub.s32 0, %v236
        %v330 = vsel %vm328, %v329, %v236
        %v331 = vshrl.u32 %v330, 4
        %v332 = vand.u32 %v330, 15
        %v333 = vsub.s32 0, %v332
        %v334 = vsel %vm328, %v333, %v332
        %vm335 = vcmp.lt.s32.totalorder %v237, 0
        %v336 = vsub.s32 0, %v237
        %v337 = vsel %vm335, %v336, %v237
        %v338 = vshrl.u32 %v337, 4
        %v339 = vand.u32 %v337, 15
        %v340 = vsub.s32 0, %v339
        %v341 = vsel %vm335, %v340, %v339
        %vm342 = vcmp.lt.s32.totalorder %v238, 0
        %v343 = vsub.s32 0, %v238
        %v344 = vsel %vm342, %v343, %v238
        %v345 = vshrl.u32 %v344, 4
        %v346 = vand.u32 %v344, 15
        %v347 = vsub.s32 0, %v346
        %v348 = vsel %vm342, %v347, %v346
        %vm349 = vcmp.lt.s32.totalorder %v239, 0
        %v350 = vsub.s32 0, %v239
        %v351 = vsel %vm349, %v350, %v239
        %v352 = vshrl.u32 %v351, 4
        %v353 = vand.u32 %v351, 15
        %v354 = vsub.s32 0, %v353
        %v355 = vsel %vm349, %v354, %v353
        %vm356 = vcmp.lt.s32.totalorder %v240, 0
        %v357 = vsub.s32 0, %v240
        %v358 = vsel %vm356, %v357, %v240
        %v359 = vshrl.u32 %v358, 4
        %v360 = vand.u32 %v358, 15
        %v361 = vsub.s32 0, %v360
        %v362 = vsel %vm356, %v361, %v360
        %vm363 = vcmp.lt.s32.totalorder %v241, 0
        %v364 = vsub.s32 0, %v241
        %v365 = vsel %vm363, %v364, %v241
        %v366 = vshrl.u32 %v365, 4
        %v367 = vand.u32 %v365, 15
        %v368 = vsub.s32 0, %v367
        %v369 = vsel %vm363, %v368, %v367
        %vm370 = vcmp.lt.s32.totalorder %v242, 0
        %v371 = vsub.s32 0, %v242
        %v372 = vsel %vm370, %v371, %v242
        %v373 = vshrl.u32 %v372, 4
        %v374 = vand.u32 %v372, 15
        %v375 = vsub.s32 0, %v374
        %v376 = vsel %vm370, %v375, %v374
        %vm377 = vcmp.lt.s32.totalorder %v243, 0
        %v378 = vsub.s32 0, %v243
        %v379 = vsel %vm377, %v378, %v243
        %v380 = vshrl.u32 %v379, 4
        %v381 = vand.u32 %v379, 15
        %v382 = vsub.s32 0, %v381
        %v383 = vsel %vm377, %v382, %v381
        %vm384 = vcmp.lt.s32.totalorder %v244, 0
        %v385 = vsub.s32 0, %v244
        %v386 = vsel %vm384, %v385, %v244
        %v387 = vshrl.u32 %v386, 4
        %v388 = vand.u32 %v386, 15
        %v389 = vsub.s32 0, %v388
        %v390 = vsel %vm384, %v389, %v388
        %vm391 = vcmp.lt.s32.totalorder %v245, 0
        %v392 = vsub.s32 0, %v245
        %v393 = vsel %vm391, %v392, %v245
        %v394 = vshrl.u32 %v393, 4
        %v395 = vand.u32 %v393, 15
        %v396 = vsub.s32 0, %v395
        %v397 = vsel %vm391, %v396, %v395
        %vm398 = vcmp.lt.s32.totalorder %v246, 0
        %v399 = vsub.s32 0, %v246
        %v400 = vsel %vm398, %v399, %v246
        %v401 = vshrl.u32 %v400, 4
        %v402 = vand.u32 %v400, 15
        %v403 = vsub.s32 0, %v402
        %v404 = vsel %vm398, %v403, %v402
        %vm405 = vcmp.lt.s32.totalorder %v247, 0
        %v406 = vsub.s32 0, %v247
        %v407 = vsel %vm405, %v406, %v247
        %v408 = vshrl.u32 %v407, 4
        %v409 = vand.u32 %v407, 15
        %v410 = vsub.s32 0, %v409
        %v411 = vsel %vm405, %v410, %v409
        %vm412 = vcmp.lt.s32.totalorder %v248, 0
        %v413 = vsub.s32 0, %v248
        %v414 = vsel %vm412, %v413, %v248
        %v415 = vshrl.u32 %v414, 4
        %v416 = vand.u32 %v414, 15
        %v417 = vsub.s32 0, %v416
        %v418 = vsel %vm412, %v417, %v416
        %vm419 = vcmp.lt.s32.totalorder %v249, 0
        %v420 = vsub.s32 0, %v249
        %v421 = vsel %vm419, %v420, %v249
        %v422 = vshrl.u32 %v421, 4
        %v423 = vand.u32 %v421, 15
        %v424 = vsub.s32 0, %v423
        %v425 = vsel %vm419, %v424, %v423
        %vm426 = vcmp.lt.s32.totalorder %v250, 0
        %v427 = vsub.s32 0, %v250
        %v428 = vsel %vm426, %v427, %v250
        %v429 = vshrl.u32 %v428, 4
        %v430 = vand.u32 %v428, 15
        %v431 = vsub.s32 0, %v430
        %v432 = vsel %vm426, %v431, %v430
        %vm433 = vcmp.lt.s32.totalorder %v251, 0
        %v434 = vsub.s32 0, %v251
        %v435 = vsel %vm433, %v434, %v251
        %v436 = vshrl.u32 %v435, 4
        %v437 = vand.u32 %v435, 15
        %v438 = vsub.s32 0, %v437
        %v439 = vsel %vm433, %v438, %v437
        %vm440 = vcmp.lt.s32.totalorder %v252, 0
        %v441 = vsub.s32 0, %v252
        %v442 = vsel %vm440, %v441, %v252
        %v443 = vshrl.u32 %v442, 4
        %v444 = vand.u32 %v442, 15
        %v445 = vsub.s32 0, %v444
        %v446 = vsel %vm440, %v445, %v444
        %vm447 = vcmp.lt.s32.totalorder %v253, 0
        %v448 = vsub.s32 0, %v253
        %v449 = vsel %vm447, %v448, %v253
        %v450 = vshrl.u32 %v449, 4
        %v451 = vand.u32 %v449, 15
        %v452 = vsub.s32 0, %v451
        %v453 = vsel %vm447, %v452, %v451
        %vm454 = vcmp.lt.s32.totalorder %v254, 0
        %v455 = vsub.s32 0, %v254
        %v456 = vsel %vm454, %v455, %v254
        %v457 = vshrl.u32 %v456, 4
        %v458 = vand.u32 %v456, 15
        %v459 = vsub.s32 0, %v458
        %v460 = vsel %vm454, %v459, %v458
        %vm461 = vcmp.lt.s32.totalorder %v255, 0
        %v462 = vsub.s32 0, %v255
        %v463 = vsel %vm461, %v462, %v255
        %v464 = vshrl.u32 %v463, 4
        %v465 = vand.u32 %v463, 15
        %v466 = vsub.s32 0, %v465
        %v467 = vsel %vm461, %v466, %v465
        %vm468 = vcmp.lt.s32.totalorder %v256, 0
        %v469 = vsub.s32 0, %v256
        %v470 = vsel %vm468, %v469, %v256
        %v471 = vshrl.u32 %v470, 4
        %v472 = vand.u32 %v470, 15
        %v473 = vsub.s32 0, %v472
        %v474 = vsel %vm468, %v473, %v472
        %vm475 = vcmp.lt.s32.totalorder %v257, 0
        %v476 = vsub.s32 0, %v257
        %v477 = vsel %vm475, %v476, %v257
        %v478 = vshrl.u32 %v477, 4
        %v479 = vand.u32 %v477, 15
        %v480 = vsub.s32 0, %v479
        %v481 = vsel %vm475, %v480, %v479
        %vm482 = vcmp.ne.s32.totalorder %v264, 0
        %vm483 = vcmp.ne.s32.totalorder %v271, 0
        %vm484 = vcmp.ne.s32.totalorder %v278, 0
        %vm485 = vcmp.ne.s32.totalorder %v285, 0
        %vm486 = vcmp.ne.s32.totalorder %v292, 0
        %vm487 = vcmp.ne.s32.totalorder %v299, 0
        %vm488 = vcmp.ne.s32.totalorder %v306, 0
        %vm489 = vcmp.ne.s32.totalorder %v313, 0
        %vm490 = vcmp.ne.s32.totalorder %v320, 0
        %vm491 = vcmp.ne.s32.totalorder %v327, 0
        %vm492 = vcmp.ne.s32.totalorder %v334, 0
        %vm493 = vcmp.ne.s32.totalorder %v341, 0
        %vm494 = vcmp.ne.s32.totalorder %v348, 0
        %vm495 = vcmp.ne.s32.totalorder %v355, 0
        %vm496 = vcmp.ne.s32.totalorder %v362, 0
        %vm497 = vcmp.ne.s32.totalorder %v369, 0
        %vm498 = vcmp.ne.s32.totalorder %v376, 0
        %vm499 = vcmp.ne.s32.totalorder %v383, 0
        %vm500 = vcmp.ne.s32.totalorder %v390, 0
        %vm501 = vcmp.ne.s32.totalorder %v397, 0
        %vm502 = vcmp.ne.s32.totalorder %v404, 0
        %vm503 = vcmp.ne.s32.totalorder %v411, 0
        %vm504 = vcmp.ne.s32.totalorder %v418, 0
        %vm505 = vcmp.ne.s32.totalorder %v425, 0
        %vm506 = vcmp.ne.s32.totalorder %v432, 0
        %vm507 = vcmp.ne.s32.totalorder %v439, 0
        %vm508 = vcmp.ne.s32.totalorder %v446, 0
        %vm509 = vcmp.ne.s32.totalorder %v453, 0
        %vm510 = vcmp.ne.s32.totalorder %v460, 0
        %vm511 = vcmp.ne.s32.totalorder %v467, 0
        %vm512 = vcmp.ne.s32.totalorder %v474, 0
        %vm513 = vcmp.ne.s32.totalorder %v481, 0
        %vm514 = vcmp.lt.s32.totalorder %v264, 0
        %vm515 = vcmp.lt.s32.totalorder %v271, 0
        %vm516 = vcmp.lt.s32.totalorder %v278, 0
        %vm517 = vcmp.lt.s32.totalorder %v285, 0
        %vm518 = vcmp.lt.s32.totalorder %v292, 0
        %vm519 = vcmp.lt.s32.totalorder %v299, 0
        %vm520 = vcmp.lt.s32.totalorder %v306, 0
        %vm521 = vcmp.lt.s32.totalorder %v313, 0
        %vm522 = vcmp.lt.s32.totalorder %v320, 0
        %vm523 = vcmp.lt.s32.totalorder %v327, 0
        %vm524 = vcmp.lt.s32.totalorder %v334, 0
        %vm525 = vcmp.lt.s32.totalorder %v341, 0
        %vm526 = vcmp.lt.s32.totalorder %v348, 0
        %vm527 = vcmp.lt.s32.totalorder %v355, 0
        %vm528 = vcmp.lt.s32.totalorder %v362, 0
        %vm529 = vcmp.lt.s32.totalorder %v369, 0
        %vm530 = vcmp.lt.s32.totalorder %v376, 0
        %vm531 = vcmp.lt.s32.totalorder %v383, 0
        %vm532 = vcmp.lt.s32.totalorder %v390, 0
        %vm533 = vcmp.lt.s32.totalorder %v397, 0
        %vm534 = vcmp.lt.s32.totalorder %v404, 0
        %vm535 = vcmp.lt.s32.totalorder %v411, 0
        %vm536 = vcmp.lt.s32.totalorder %v418, 0
        %vm537 = vcmp.lt.s32.totalorder %v425, 0
        %vm538 = vcmp.lt.s32.totalorder %v432, 0
        %vm539 = vcmp.lt.s32.totalorder %v439, 0
        %vm540 = vcmp.lt.s32.totalorder %v446, 0
        %vm541 = vcmp.lt.s32.totalorder %v453, 0
        %vm542 = vcmp.lt.s32.totalorder %v460, 0
        %vm543 = vcmp.lt.s32.totalorder %v467, 0
        %vm544 = vcmp.lt.s32.totalorder %v474, 0
        %vm545 = vcmp.lt.s32.totalorder %v481, 0
        %vm546 = vmand %vm514, %vm482
        %vm547 = vmand %vm515, %vm483
        %vm548 = vmand %vm516, %vm484
        %vm549 = vmand %vm517, %vm485
        %vm550 = vmand %vm518, %vm486
        %vm551 = vmand %vm519, %vm487
        %vm552 = vmand %vm520, %vm488
        %vm553 = vmand %vm521, %vm489
        %vm554 = vmand %vm522, %vm490
        %vm555 = vmand %vm523, %vm491
        %vm556 = vmand %vm524, %vm492
        %vm557 = vmand %vm525, %vm493
        %vm558 = vmand %vm526, %vm494
        %vm559 = vmand %vm527, %vm495
        %vm560 = vmand %vm528, %vm496
        %vm561 = vmand %vm529, %vm497
        %vm562 = vmand %vm530, %vm498
        %vm563 = vmand %vm531, %vm499
        %vm564 = vmand %vm532, %vm500
        %vm565 = vmand %vm533, %vm501
        %vm566 = vmand %vm534, %vm502
        %vm567 = vmand %vm535, %vm503
        %vm568 = vmand %vm536, %vm504
        %vm569 = vmand %vm537, %vm505
        %vm570 = vmand %vm538, %vm506
        %vm571 = vmand %vm539, %vm507
        %vm572 = vmand %vm540, %vm508
        %vm573 = vmand %vm541, %vm509
        %vm574 = vmand %vm542, %vm510
        %vm575 = vmand %vm543, %vm511
        %vm576 = vmand %vm544, %vm512
        %vm577 = vmand %vm545, %vm513
        %v578 = vadd.s32 %v264, 16
        %v579 = vadd.s32 %v271, 16
        %v580 = vadd.s32 %v278, 16
        %v581 = vadd.s32 %v285, 16
        %v582 = vadd.s32 %v292, 16
        %v583 = vadd.s32 %v299, 16
        %v584 = vadd.s32 %v306, 16
        %v585 = vadd.s32 %v313, 16
        %v586 = vadd.s32 %v320, 16
        %v587 = vadd.s32 %v327, 16
        %v588 = vadd.s32 %v334, 16
        %v589 = vadd.s32 %v341, 16
        %v590 = vadd.s32 %v348, 16
        %v591 = vadd.s32 %v355, 16
        %v592 = vadd.s32 %v362, 16
        %v593 = vadd.s32 %v369, 16
        %v594 = vadd.s32 %v376, 16
        %v595 = vadd.s32 %v383, 16
        %v596 = vadd.s32 %v390, 16
        %v597 = vadd.s32 %v397, 16
        %v598 = vadd.s32 %v404, 16
        %v599 = vadd.s32 %v411, 16
        %v600 = vadd.s32 %v418, 16
        %v601 = vadd.s32 %v425, 16
        %v602 = vadd.s32 %v432, 16
        %v603 = vadd.s32 %v439, 16
        %v604 = vadd.s32 %v446, 16
        %v605 = vadd.s32 %v453, 16
        %v606 = vadd.s32 %v460, 16
        %v607 = vadd.s32 %v467, 16
        %v608 = vadd.s32 %v474, 16
        %v609 = vadd.s32 %v481, 16
        %v610 = vsel %vm546, %v578, %v264
        %v611 = vsel %vm547, %v579, %v271
        %v612 = vsel %vm548, %v580, %v278
        %v613 = vsel %vm549, %v581, %v285
        %v614 = vsel %vm550, %v582, %v292
        %v615 = vsel %vm551, %v583, %v299
        %v616 = vsel %vm552, %v584, %v306
        %v617 = vsel %vm553, %v585, %v313
        %v618 = vsel %vm554, %v586, %v320
        %v619 = vsel %vm555, %v587, %v327
        %v620 = vsel %vm556, %v588, %v334
        %v621 = vsel %vm557, %v589, %v341
        %v622 = vsel %vm558, %v590, %v348
        %v623 = vsel %vm559, %v591, %v355
        %v624 = vsel %vm560, %v592, %v362
        %v625 = vsel %vm561, %v593, %v369
        %v626 = vsel %vm562, %v594, %v376
        %v627 = vsel %vm563, %v595, %v383
        %v628 = vsel %vm564, %v596, %v390
        %v629 = vsel %vm565, %v597, %v397
        %v630 = vsel %vm566, %v598, %v404
        %v631 = vsel %vm567, %v599, %v411
        %v632 = vsel %vm568, %v600, %v418
        %v633 = vsel %vm569, %v601, %v425
        %v634 = vsel %vm570, %v602, %v432
        %v635 = vsel %vm571, %v603, %v439
        %v636 = vsel %vm572, %v604, %v446
        %v637 = vsel %vm573, %v605, %v453
        %v638 = vsel %vm574, %v606, %v460
        %v639 = vsel %vm575, %v607, %v467
        %v640 = vsel %vm576, %v608, %v474
        %v641 = vsel %vm577, %v609, %v481
        %v642 = vld [vmem:[%s221] sm:$0xf]
        %v643 = vld [vmem:[%s221 + $0x4] sm:$0xf]
        %v644 = vld [vmem:[%s221 + $0x8] sm:$0xf]
        %v645 = vld [vmem:[%s221 + $0xc] sm:$0xf]
        %v646 = vld [vmem:[%s221 + $0x10] sm:$0xf]
        %v647 = vld [vmem:[%s221 + $0x14] sm:$0xf]
        %v648 = vld [vmem:[%s221 + $0x18] sm:$0xf]
        %v649 = vld [vmem:[%s221 + $0x1c] sm:$0xf]
        %v650 = vld [vmem:[%s221 + $0x20] sm:$0xf]
        %v651 = vld [vmem:[%s221 + $0x24] sm:$0xf]
        %v652 = vld [vmem:[%s221 + $0x28] sm:$0xf]
        %v653 = vld [vmem:[%s221 + $0x2c] sm:$0xf]
        %v654 = vld [vmem:[%s221 + $0x30] sm:$0xf]
        %v655 = vld [vmem:[%s221 + $0x34] sm:$0xf]
        %v656 = vld [vmem:[%s221 + $0x38] sm:$0xf]
        %v657 = vld [vmem:[%s221 + $0x3c] sm:$0xf]
        %v658 = vld [vmem:[%s221 + $0x40] sm:$0xf]
        %v659 = vld [vmem:[%s221 + $0x44] sm:$0xf]
        %v660 = vld [vmem:[%s221 + $0x48] sm:$0xf]
        %v661 = vld [vmem:[%s221 + $0x4c] sm:$0xf]
        %v662 = vld [vmem:[%s221 + $0x50] sm:$0xf]
        %v663 = vld [vmem:[%s221 + $0x54] sm:$0xf]
        %v664 = vld [vmem:[%s221 + $0x58] sm:$0xf]
        %v665 = vld [vmem:[%s221 + $0x5c] sm:$0xf]
        %v666 = vld [vmem:[%s221 + $0x60] sm:$0xf]
        %v667 = vld [vmem:[%s221 + $0x64] sm:$0xf]
        %v668 = vld [vmem:[%s221 + $0x68] sm:$0xf]
        %v669 = vld [vmem:[%s221 + $0x6c] sm:$0xf]
        %v670 = vld [vmem:[%s221 + $0x70] sm:$0xf]
        %v671 = vld [vmem:[%s221 + $0x74] sm:$0xf]
        %v672 = vld [vmem:[%s221 + $0x78] sm:$0xf]
        %v673 = vld [vmem:[%s221 + $0x7c] sm:$0xf]
        %vm674 = vcmp.ge.s32.totalorder %v610, 1
        %vm675 = vcmp.ge.s32.totalorder %v611, 1
        %vm676 = vcmp.ge.s32.totalorder %v612, 1
        %vm677 = vcmp.ge.s32.totalorder %v613, 1
        %vm678 = vcmp.ge.s32.totalorder %v614, 1
        %vm679 = vcmp.ge.s32.totalorder %v615, 1
        %vm680 = vcmp.ge.s32.totalorder %v616, 1
        %vm681 = vcmp.ge.s32.totalorder %v617, 1
        %vm682 = vcmp.ge.s32.totalorder %v618, 1
        %vm683 = vcmp.ge.s32.totalorder %v619, 1
        %vm684 = vcmp.ge.s32.totalorder %v620, 1
        %vm685 = vcmp.ge.s32.totalorder %v621, 1
        %vm686 = vcmp.ge.s32.totalorder %v622, 1
        %vm687 = vcmp.ge.s32.totalorder %v623, 1
        %vm688 = vcmp.ge.s32.totalorder %v624, 1
        %vm689 = vcmp.ge.s32.totalorder %v625, 1
        %vm690 = vcmp.ge.s32.totalorder %v626, 1
        %vm691 = vcmp.ge.s32.totalorder %v627, 1
        %vm692 = vcmp.ge.s32.totalorder %v628, 1
        %vm693 = vcmp.ge.s32.totalorder %v629, 1
        %vm694 = vcmp.ge.s32.totalorder %v630, 1
        %vm695 = vcmp.ge.s32.totalorder %v631, 1
        %vm696 = vcmp.ge.s32.totalorder %v632, 1
        %vm697 = vcmp.ge.s32.totalorder %v633, 1
        %vm698 = vcmp.ge.s32.totalorder %v634, 1
        %vm699 = vcmp.ge.s32.totalorder %v635, 1
        %vm700 = vcmp.ge.s32.totalorder %v636, 1
        %vm701 = vcmp.ge.s32.totalorder %v637, 1
        %vm702 = vcmp.ge.s32.totalorder %v638, 1
        %vm703 = vcmp.ge.s32.totalorder %v639, 1
        %vm704 = vcmp.ge.s32.totalorder %v640, 1
        %vm705 = vcmp.ge.s32.totalorder %v641, 1
        %v706 = vsel %vm674, 1, 0
        %v707 = vsel %vm675, 1, 0
        %v708 = vsel %vm676, 1, 0
        %v709 = vsel %vm677, 1, 0
        %v710 = vsel %vm678, 1, 0
        %v711 = vsel %vm679, 1, 0
        %v712 = vsel %vm680, 1, 0
        %v713 = vsel %vm681, 1, 0
        %v714 = vsel %vm682, 1, 0
        %v715 = vsel %vm683, 1, 0
        %v716 = vsel %vm684, 1, 0
        %v717 = vsel %vm685, 1, 0
        %v718 = vsel %vm686, 1, 0
        %v719 = vsel %vm687, 1, 0
        %v720 = vsel %vm688, 1, 0
        %v721 = vsel %vm689, 1, 0
        %v722 = vsel %vm690, 1, 0
        %v723 = vsel %vm691, 1, 0
        %v724 = vsel %vm692, 1, 0
        %v725 = vsel %vm693, 1, 0
        %v726 = vsel %vm694, 1, 0
        %v727 = vsel %vm695, 1, 0
        %v728 = vsel %vm696, 1, 0
        %v729 = vsel %vm697, 1, 0
        %v730 = vsel %vm698, 1, 0
        %v731 = vsel %vm699, 1, 0
        %v732 = vsel %vm700, 1, 0
        %v733 = vsel %vm701, 1, 0
        %v734 = vsel %vm702, 1, 0
        %v735 = vsel %vm703, 1, 0
        %v736 = vsel %vm704, 1, 0
        %v737 = vsel %vm705, 1, 0
        %vm738 = vcmp.eq.s32.totalorder %v706, 1
        %vm739 = vcmp.eq.s32.totalorder %v707, 1
        %vm740 = vcmp.eq.s32.totalorder %v708, 1
        %vm741 = vcmp.eq.s32.totalorder %v709, 1
        %vm742 = vcmp.eq.s32.totalorder %v710, 1
        %vm743 = vcmp.eq.s32.totalorder %v711, 1
        %vm744 = vcmp.eq.s32.totalorder %v712, 1
        %vm745 = vcmp.eq.s32.totalorder %v713, 1
        %vm746 = vcmp.eq.s32.totalorder %v714, 1
        %vm747 = vcmp.eq.s32.totalorder %v715, 1
        %vm748 = vcmp.eq.s32.totalorder %v716, 1
        %vm749 = vcmp.eq.s32.totalorder %v717, 1
        %vm750 = vcmp.eq.s32.totalorder %v718, 1
        %vm751 = vcmp.eq.s32.totalorder %v719, 1
        %vm752 = vcmp.eq.s32.totalorder %v720, 1
        %vm753 = vcmp.eq.s32.totalorder %v721, 1
        %vm754 = vcmp.eq.s32.totalorder %v722, 1
        %vm755 = vcmp.eq.s32.totalorder %v723, 1
        %vm756 = vcmp.eq.s32.totalorder %v724, 1
        %vm757 = vcmp.eq.s32.totalorder %v725, 1
        %vm758 = vcmp.eq.s32.totalorder %v726, 1
        %vm759 = vcmp.eq.s32.totalorder %v727, 1
        %vm760 = vcmp.eq.s32.totalorder %v728, 1
        %vm761 = vcmp.eq.s32.totalorder %v729, 1
        %vm762 = vcmp.eq.s32.totalorder %v730, 1
        %vm763 = vcmp.eq.s32.totalorder %v731, 1
        %vm764 = vcmp.eq.s32.totalorder %v732, 1
        %vm765 = vcmp.eq.s32.totalorder %v733, 1
        %vm766 = vcmp.eq.s32.totalorder %v734, 1
        %vm767 = vcmp.eq.s32.totalorder %v735, 1
        %vm768 = vcmp.eq.s32.totalorder %v736, 1
        %vm769 = vcmp.eq.s32.totalorder %v737, 1
        %vm770 = vmpackc.low %vm738, %vm738
        %vm771 = vmpackc.low %vm739, %vm739
        %vm772 = vmpackc.low %vm740, %vm740
        %vm773 = vmpackc.low %vm741, %vm741
        %vm774 = vmpackc.low %vm742, %vm742
        %vm775 = vmpackc.low %vm743, %vm743
        %vm776 = vmpackc.low %vm744, %vm744
        %vm777 = vmpackc.low %vm745, %vm745
        %vm778 = vmpackc.low %vm746, %vm746
        %vm779 = vmpackc.low %vm747, %vm747
        %vm780 = vmpackc.low %vm748, %vm748
        %vm781 = vmpackc.low %vm749, %vm749
        %vm782 = vmpackc.low %vm750, %vm750
        %vm783 = vmpackc.low %vm751, %vm751
        %vm784 = vmpackc.low %vm752, %vm752
        %vm785 = vmpackc.low %vm753, %vm753
        %vm786 = vmpackc.low %vm754, %vm754
        %vm787 = vmpackc.low %vm755, %vm755
        %vm788 = vmpackc.low %vm756, %vm756
        %vm789 = vmpackc.low %vm757, %vm757
        %vm790 = vmpackc.low %vm758, %vm758
        %vm791 = vmpackc.low %vm759, %vm759
        %vm792 = vmpackc.low %vm760, %vm760
        %vm793 = vmpackc.low %vm761, %vm761
        %vm794 = vmpackc.low %vm762, %vm762
        %vm795 = vmpackc.low %vm763, %vm763
        %vm796 = vmpackc.low %vm764, %vm764
        %vm797 = vmpackc.low %vm765, %vm765
        %vm798 = vmpackc.low %vm766, %vm766
        %vm799 = vmpackc.low %vm767, %vm767
        %vm800 = vmpackc.low %vm768, %vm768
        %vm801 = vmpackc.low %vm769, %vm769
        %v802 = vsel %vm770, %v642, 0
        %v803 = vsel %vm771, %v643, 0
        %v804 = vsel %vm772, %v644, 0
        %v805 = vsel %vm773, %v645, 0
        %v806 = vsel %vm774, %v646, 0
        %v807 = vsel %vm775, %v647, 0
        %v808 = vsel %vm776, %v648, 0
        %v809 = vsel %vm777, %v649, 0
        %v810 = vsel %vm778, %v650, 0
        %v811 = vsel %vm779, %v651, 0
        %v812 = vsel %vm780, %v652, 0
        %v813 = vsel %vm781, %v653, 0
        %v814 = vsel %vm782, %v654, 0
        %v815 = vsel %vm783, %v655, 0
        %v816 = vsel %vm784, %v656, 0
        %v817 = vsel %vm785, %v657, 0
        %v818 = vsel %vm786, %v658, 0
        %v819 = vsel %vm787, %v659, 0
        %v820 = vsel %vm788, %v660, 0
        %v821 = vsel %vm789, %v661, 0
        %v822 = vsel %vm790, %v662, 0
        %v823 = vsel %vm791, %v663, 0
        %v824 = vsel %vm792, %v664, 0
        %v825 = vsel %vm793, %v665, 0
        %v826 = vsel %vm794, %v666, 0
        %v827 = vsel %vm795, %v667, 0
        %v828 = vsel %vm796, %v668, 0
        %v829 = vsel %vm797, %v669, 0
        %v830 = vsel %vm798, %v670, 0
        %v831 = vsel %vm799, %v671, 0
        %v832 = vsel %vm800, %v672, 0
        %v833 = vsel %vm801, %v673, 0
        %v834 = vld [vmem:[%s1] sm:$0x3]
        %v835 = vld [vmem:[%s221 + $0x80] sm:$0x1]
        %s836 = scalar_lea.vmem %s1, 2
        %v837 = vld [vmem:[%s836] sm:$0x3]
        %v871 = vunpack.c.l.b16 %v642
        %v872 = vunpack.c.l.b16 %v643
        %v873 = vunpack.c.l.b16 %v644
        %v874 = vunpack.c.l.b16 %v645
        %v875 = vunpack.c.l.b16 %v646
        %v876 = vunpack.c.l.b16 %v647
        %v877 = vunpack.c.l.b16 %v648
        %v878 = vunpack.c.l.b16 %v649
        %v879 = vunpack.c.l.b16 %v650
        %v880 = vunpack.c.l.b16 %v651
        %v881 = vunpack.c.l.b16 %v652
        %v882 = vunpack.c.l.b16 %v653
        %v883 = vunpack.c.l.b16 %v654
        %v884 = vunpack.c.l.b16 %v655
        %v885 = vunpack.c.l.b16 %v656
        %v886 = vunpack.c.l.b16 %v657
        %v887 = vunpack.c.l.b16 %v658
        %v888 = vunpack.c.l.b16 %v659
        %v889 = vunpack.c.l.b16 %v660
        %v890 = vunpack.c.l.b16 %v661
        %v891 = vunpack.c.l.b16 %v662
        %v892 = vunpack.c.l.b16 %v663
        %v893 = vunpack.c.l.b16 %v664
        %v894 = vunpack.c.l.b16 %v665
        %v895 = vunpack.c.l.b16 %v666
        %v896 = vunpack.c.l.b16 %v667
        %v897 = vunpack.c.l.b16 %v668
        %v898 = vunpack.c.l.b16 %v669
        %v899 = vunpack.c.l.b16 %v670
        %v900 = vunpack.c.l.b16 %v671
        %v901 = vunpack.c.l.b16 %v672
        %v902 = vunpack.c.l.b16 %v673
        %v903 = vunpack.c.l.b16 %v835
        %v904 = vpack.c.b16 %v872, %v871
        %v905 = vpack.c.b16 %v874, %v873
        %v906 = vpack.c.b16 %v876, %v875
        %v907 = vpack.c.b16 %v878, %v877
        %v908 = vpack.c.b16 %v880, %v879
        %v909 = vpack.c.b16 %v882, %v881
        %v910 = vpack.c.b16 %v884, %v883
        %v911 = vpack.c.b16 %v886, %v885
        %v912 = vpack.c.b16 %v888, %v887
        %v913 = vpack.c.b16 %v890, %v889
        %v914 = vpack.c.b16 %v892, %v891
        %v915 = vpack.c.b16 %v894, %v893
        %v916 = vpack.c.b16 %v896, %v895
        %v917 = vpack.c.b16 %v898, %v897
        %v918 = vpack.c.b16 %v900, %v899
        %v919 = vpack.c.b16 %v902, %v901
        %v920 = vpack.c.b16 %v903, %v903
        %vm921 = vsmask.f32 7424
        %v923 = vshrl.u32 %v904, 16
        %v925 = vshll.u32 %v904, 16
        %v927 = vrot.slane %v925, 1
        %v928 = vor.u32 %v923, %v927
        %v930 = vshll.u32 %v905, 16
        %v932 = vrot.slane %v930, 1
        %v933 = vsel %vm921, %v928, %v932
        %v934 = vshrl.u32 %v905, 16
        %v936 = vor.u32 %v934, %v932
        %v938 = vshll.u32 %v906, 16
        %v940 = vrot.slane %v938, 1
        %v941 = vsel %vm921, %v936, %v940
        %v942 = vshrl.u32 %v906, 16
        %v944 = vor.u32 %v942, %v940
        %v946 = vshll.u32 %v907, 16
        %v948 = vrot.slane %v946, 1
        %v949 = vsel %vm921, %v944, %v948
        %v950 = vshrl.u32 %v907, 16
        %v952 = vor.u32 %v950, %v948
        %v954 = vshll.u32 %v908, 16
        %v956 = vrot.slane %v954, 1
        %v957 = vsel %vm921, %v952, %v956
        %v958 = vshrl.u32 %v908, 16
        %v960 = vor.u32 %v958, %v956
        %v962 = vshll.u32 %v909, 16
        %v964 = vrot.slane %v962, 1
        %v965 = vsel %vm921, %v960, %v964
        %v966 = vshrl.u32 %v909, 16
        %v968 = vor.u32 %v966, %v964
        %v970 = vshll.u32 %v910, 16
        %v972 = vrot.slane %v970, 1
        %v973 = vsel %vm921, %v968, %v972
        %v974 = vshrl.u32 %v910, 16
        %v976 = vor.u32 %v974, %v972
        %v978 = vshll.u32 %v911, 16
        %v980 = vrot.slane %v978, 1
        %v981 = vsel %vm921, %v976, %v980
        %v982 = vshrl.u32 %v911, 16
        %v984 = vor.u32 %v982, %v980
        %v986 = vshll.u32 %v912, 16
        %v988 = vrot.slane %v986, 1
        %v989 = vsel %vm921, %v984, %v988
        %v990 = vshrl.u32 %v912, 16
        %v992 = vor.u32 %v990, %v988
        %v994 = vshll.u32 %v913, 16
        %v996 = vrot.slane %v994, 1
        %v997 = vsel %vm921, %v992, %v996
        %v998 = vshrl.u32 %v913, 16
        %v1000 = vor.u32 %v998, %v996
        %v1002 = vshll.u32 %v914, 16
        %v1004 = vrot.slane %v1002, 1
        %v1005 = vsel %vm921, %v1000, %v1004
        %v1006 = vshrl.u32 %v914, 16
        %v1008 = vor.u32 %v1006, %v1004
        %v1010 = vshll.u32 %v915, 16
        %v1012 = vrot.slane %v1010, 1
        %v1013 = vsel %vm921, %v1008, %v1012
        %v1014 = vshrl.u32 %v915, 16
        %v1016 = vor.u32 %v1014, %v1012
        %v1018 = vshll.u32 %v916, 16
        %v1020 = vrot.slane %v1018, 1
        %v1021 = vsel %vm921, %v1016, %v1020
        %v1022 = vshrl.u32 %v916, 16
        %v1024 = vor.u32 %v1022, %v1020
        %v1026 = vshll.u32 %v917, 16
        %v1028 = vrot.slane %v1026, 1
        %v1029 = vsel %vm921, %v1024, %v1028
        %v1030 = vshrl.u32 %v917, 16
        %v1032 = vor.u32 %v1030, %v1028
        %v1034 = vshll.u32 %v918, 16
        %v1036 = vrot.slane %v1034, 1
        %v1037 = vsel %vm921, %v1032, %v1036
        %v1038 = vshrl.u32 %v918, 16
        %v1040 = vor.u32 %v1038, %v1036
        %v1042 = vshll.u32 %v919, 16
        %v1044 = vrot.slane %v1042, 1
        %v1045 = vsel %vm921, %v1040, %v1044
        %v1046 = vshrl.u32 %v919, 16
        %v1048 = vor.u32 %v1046, %v1044
        %v1050 = vshll.u32 %v920, 16
        %v1052 = vrot.slane %v1050, 1
        %v1053 = vsel %vm921, %v1048, %v1052
        %vm1054 = vcmask 31744
        %v1056 = vsel %vm1054, %v933, 0
        %v1059 = vsel %vm1054, %v941, 0
        %v1062 = vsel %vm1054, %v949, 0
        %v1065 = vsel %vm1054, %v957, 0
        %v1068 = vsel %vm1054, %v965, 0
        %v1071 = vsel %vm1054, %v973, 0
        %v1074 = vsel %vm1054, %v981, 0
        %v1077 = vsel %vm1054, %v989, 0
        %v1080 = vsel %vm1054, %v997, 0
        %v1083 = vsel %vm1054, %v1005, 0
        %v1086 = vsel %vm1054, %v1013, 0
        %v1089 = vsel %vm1054, %v1021, 0
        %v1092 = vsel %vm1054, %v1029, 0
        %v1095 = vsel %vm1054, %v1037, 0
        %v1098 = vsel %vm1054, %v1045, 0
        %v1101 = vsel %vm1054, %v1053, 0
        %vm1103 = vcmask 1041408
        %v1105 = vsel %vm1103, %v837, 0
        %1107 = vmatprep.subr.bf16.mxu0 0
        %1108 = vmatpush1.bf16.msra.mxu0 0
        %1109 = vmatprep.subr.bf16.mxu0 0
        %1110 = vmatpush1.bf16.msra.mxu0 0
        %1111 = vmatprep.subr.bf16.mxu0 0
        %1112 = vmatpush1.bf16.msra.mxu0 0
        %1113 = vmatprep.subr.bf16.mxu0 0
        %1114 = vmatpush1.bf16.msra.mxu0 0
        %1115 = vmatprep.subr.bf16.mxu0 0
        %1116 = vmatpush1.bf16.msra.mxu0 0
        %1117 = vmatprep.subr.bf16.mxu0 0
        %1118 = vmatpush1.bf16.msra.mxu0 0
        %1119 = vmatprep.subr.bf16.mxu0 0
        %1120 = vmatpush1.bf16.msra.mxu0 0
        %1121 = vmatprep.subr.bf16.mxu0 0
        %1122 = vmatpush1.bf16.msra.mxu0 %v1105
        %1123 = vmatprep.subr.bf16.mxu0 0
        %1124 = vmatpush2.bf16.msra.mxu0 0
        %1125 = vmatprep.subr.bf16.mxu0 0
        %1126 = vmatpush2.bf16.msra.mxu0 0
        %1127 = vmatprep.subr.bf16.mxu0 0
        %1128 = vmatpush2.bf16.msra.mxu0 0
        %1129 = vmatprep.subr.bf16.mxu0 0
        %1130 = vmatpush2.bf16.msra.mxu0 0
        %1131 = vmatprep.subr.bf16.mxu0 0
        %1132 = vmatpush2.bf16.msra.mxu0 0
        %1133 = vmatprep.subr.bf16.mxu0 0
        %1134 = vmatpush2.bf16.msra.mxu0 0
        %1135 = vmatprep.subr.bf16.mxu0 0
        %1136 = vmatpush2.bf16.msra.mxu0 0
        %1137 = vmatprep.subr.bf16.mxu0 0
        %1138 = vmatpush2.bf16.msra.mxu0 0
        %1139 = vmatprep.mubr.bf16.mxu0 0
        %1140 = vmatmul.mubr.bf16.gmra.mxu0 %v1056
        %v1141 = vpop.f32.mrf.mxu0
        %v1142 = vadd.f32 0.0, %v1141
        %v1143 = vpop.f32.mrf.mxu0
        %v1144 = vpop.f32.mrf.mxu0
        %v1145 = vadd.f32 0.0, %v1144
        %v1146 = vpop.f32.mrf.mxu0
        %1147 = vmatprep.mubr.bf16.mxu0 0
        %1148 = vmatmul.mubr.bf16.gmra.mxu0 %v1059
        %v1149 = vpop.f32.mrf.mxu0
        %v1150 = vadd.f32 0.0, %v1149
        %v1151 = vpop.f32.mrf.mxu0
        %v1152 = vpop.f32.mrf.mxu0
        %v1153 = vadd.f32 0.0, %v1152
        %v1154 = vpop.f32.mrf.mxu0
        %1155 = vmatprep.mubr.bf16.mxu0 0
        %1156 = vmatmul.mubr.bf16.gmra.mxu0 %v1062
        %v1157 = vpop.f32.mrf.mxu0
        %v1158 = vadd.f32 0.0, %v1157
        %v1159 = vpop.f32.mrf.mxu0
        %v1160 = vpop.f32.mrf.mxu0
        %v1161 = vadd.f32 0.0, %v1160
        %v1162 = vpop.f32.mrf.mxu0
        %1163 = vmatprep.mubr.bf16.mxu0 0
        %1164 = vmatmul.mubr.bf16.gmra.mxu0 %v1065
        %v1165 = vpop.f32.mrf.mxu0
        %v1166 = vadd.f32 0.0, %v1165
        %v1167 = vpop.f32.mrf.mxu0
        %v1168 = vpop.f32.mrf.mxu0
        %v1169 = vadd.f32 0.0, %v1168
        %v1170 = vpop.f32.mrf.mxu0
        %1171 = vmatprep.mubr.bf16.mxu0 0
        %1172 = vmatmul.mubr.bf16.gmra.mxu0 %v1068
        %v1173 = vpop.f32.mrf.mxu0
        %v1174 = vadd.f32 0.0, %v1173
        %v1175 = vpop.f32.mrf.mxu0
        %v1176 = vpop.f32.mrf.mxu0
        %v1177 = vadd.f32 0.0, %v1176
        %v1178 = vpop.f32.mrf.mxu0
        %1179 = vmatprep.mubr.bf16.mxu0 0
        %1180 = vmatmul.mubr.bf16.gmra.mxu0 %v1071
        %v1181 = vpop.f32.mrf.mxu0
        %v1182 = vadd.f32 0.0, %v1181
        %v1183 = vpop.f32.mrf.mxu0
        %v1184 = vpop.f32.mrf.mxu0
        %v1185 = vadd.f32 0.0, %v1184
        %v1186 = vpop.f32.mrf.mxu0
        %1187 = vmatprep.mubr.bf16.mxu0 0
        %1188 = vmatmul.mubr.bf16.gmra.mxu0 %v1074
        %v1189 = vpop.f32.mrf.mxu0
        %v1190 = vadd.f32 0.0, %v1189
        %v1191 = vpop.f32.mrf.mxu0
        %v1192 = vpop.f32.mrf.mxu0
        %v1193 = vadd.f32 0.0, %v1192
        %v1194 = vpop.f32.mrf.mxu0
        %1195 = vmatprep.mubr.bf16.mxu0 0
        %1196 = vmatmul.mubr.bf16.gmra.mxu0 %v1077
        %v1197 = vpop.f32.mrf.mxu0
        %v1198 = vadd.f32 0.0, %v1197
        %v1199 = vpop.f32.mrf.mxu0
        %v1200 = vpop.f32.mrf.mxu0
        %v1201 = vadd.f32 0.0, %v1200
        %v1202 = vpop.f32.mrf.mxu0
        %1203 = vmatprep.mubr.bf16.mxu0 0
        %1204 = vmatmul.mubr.bf16.gmra.mxu0 %v1080
        %v1205 = vpop.f32.mrf.mxu0
        %v1206 = vadd.f32 0.0, %v1205
        %v1207 = vpop.f32.mrf.mxu0
        %v1208 = vpop.f32.mrf.mxu0
        %v1209 = vadd.f32 0.0, %v1208
        %v1210 = vpop.f32.mrf.mxu0
        %1211 = vmatprep.mubr.bf16.mxu0 0
        %1212 = vmatmul.mubr.bf16.gmra.mxu0 %v1083
        %v1213 = vpop.f32.mrf.mxu0
        %v1214 = vadd.f32 0.0, %v1213
        %v1215 = vpop.f32.mrf.mxu0
        %v1216 = vpop.f32.mrf.mxu0
        %v1217 = vadd.f32 0.0, %v1216
        %v1218 = vpop.f32.mrf.mxu0
        %1219 = vmatprep.mubr.bf16.mxu0 0
        %1220 = vmatmul.mubr.bf16.gmra.mxu0 %v1086
        %v1221 = vpop.f32.mrf.mxu0
        %v1222 = vadd.f32 0.0, %v1221
        %v1223 = vpop.f32.mrf.mxu0
        %v1224 = vpop.f32.mrf.mxu0
        %v1225 = vadd.f32 0.0, %v1224
        %v1226 = vpop.f32.mrf.mxu0
        %1227 = vmatprep.mubr.bf16.mxu0 0
        %1228 = vmatmul.mubr.bf16.gmra.mxu0 %v1089
        %v1229 = vpop.f32.mrf.mxu0
        %v1230 = vadd.f32 0.0, %v1229
        %v1231 = vpop.f32.mrf.mxu0
        %v1232 = vpop.f32.mrf.mxu0
        %v1233 = vadd.f32 0.0, %v1232
        %v1234 = vpop.f32.mrf.mxu0
        %1235 = vmatprep.mubr.bf16.mxu0 0
        %1236 = vmatmul.mubr.bf16.gmra.mxu0 %v1092
        %v1237 = vpop.f32.mrf.mxu0
        %v1238 = vadd.f32 0.0, %v1237
        %v1239 = vpop.f32.mrf.mxu0
        %v1240 = vpop.f32.mrf.mxu0
        %v1241 = vadd.f32 0.0, %v1240
        %v1242 = vpop.f32.mrf.mxu0
        %1243 = vmatprep.mubr.bf16.mxu0 0
        %1244 = vmatmul.mubr.bf16.gmra.mxu0 %v1095
        %v1245 = vpop.f32.mrf.mxu0
        %v1246 = vadd.f32 0.0, %v1245
        %v1247 = vpop.f32.mrf.mxu0
        %v1248 = vpop.f32.mrf.mxu0
        %v1249 = vadd.f32 0.0, %v1248
        %v1250 = vpop.f32.mrf.mxu0
        %1251 = vmatprep.mubr.bf16.mxu0 0
        %1252 = vmatmul.mubr.bf16.gmra.mxu0 %v1098
        %v1253 = vpop.f32.mrf.mxu0
        %v1254 = vadd.f32 0.0, %v1253
        %v1255 = vpop.f32.mrf.mxu0
        %v1256 = vpop.f32.mrf.mxu0
        %v1257 = vadd.f32 0.0, %v1256
        %v1258 = vpop.f32.mrf.mxu0
        %1259 = vmatprep.mubr.bf16.mxu0 0
        %1260 = vmatmul.mubr.bf16.gmra.mxu0 %v1101
        %v1261 = vpop.f32.mrf.mxu0
        %v1262 = vadd.f32 0.0, %v1261
        %v1263 = vpop.f32.mrf.mxu0
        %v1264 = vpop.f32.mrf.mxu0
        %v1265 = vadd.f32 0.0, %v1264
        %v1266 = vpop.f32.mrf.mxu0
        %1267 = vdwg.mxu0
        %v1300 = vunpack.c.l.b16 %v802
        %v1301 = vunpack.c.l.b16 %v803
        %v1302 = vunpack.c.l.b16 %v804
        %v1303 = vunpack.c.l.b16 %v805
        %v1304 = vunpack.c.l.b16 %v806
        %v1305 = vunpack.c.l.b16 %v807
        %v1306 = vunpack.c.l.b16 %v808
        %v1307 = vunpack.c.l.b16 %v809
        %v1308 = vunpack.c.l.b16 %v810
        %v1309 = vunpack.c.l.b16 %v811
        %v1310 = vunpack.c.l.b16 %v812
        %v1311 = vunpack.c.l.b16 %v813
        %v1312 = vunpack.c.l.b16 %v814
        %v1313 = vunpack.c.l.b16 %v815
        %v1314 = vunpack.c.l.b16 %v816
        %v1315 = vunpack.c.l.b16 %v817
        %v1316 = vunpack.c.l.b16 %v818
        %v1317 = vunpack.c.l.b16 %v819
        %v1318 = vunpack.c.l.b16 %v820
        %v1319 = vunpack.c.l.b16 %v821
        %v1320 = vunpack.c.l.b16 %v822
        %v1321 = vunpack.c.l.b16 %v823
        %v1322 = vunpack.c.l.b16 %v824
        %v1323 = vunpack.c.l.b16 %v825
        %v1324 = vunpack.c.l.b16 %v826
        %v1325 = vunpack.c.l.b16 %v827
        %v1326 = vunpack.c.l.b16 %v828
        %v1327 = vunpack.c.l.b16 %v829
        %v1328 = vunpack.c.l.b16 %v830
        %v1329 = vunpack.c.l.b16 %v831
        %v1330 = vunpack.c.l.b16 %v832
        %v1331 = vunpack.c.l.b16 %v833
        %v1332 = vpack.c.b16 %v1301, %v1300
        %v1333 = vpack.c.b16 %v1303, %v1302
        %v1334 = vpack.c.b16 %v1305, %v1304
        %v1335 = vpack.c.b16 %v1307, %v1306
        %v1336 = vpack.c.b16 %v1309, %v1308
        %v1337 = vpack.c.b16 %v1311, %v1310
        %v1338 = vpack.c.b16 %v1313, %v1312
        %v1339 = vpack.c.b16 %v1315, %v1314
        %v1340 = vpack.c.b16 %v1317, %v1316
        %v1341 = vpack.c.b16 %v1319, %v1318
        %v1342 = vpack.c.b16 %v1321, %v1320
        %v1343 = vpack.c.b16 %v1323, %v1322
        %v1344 = vpack.c.b16 %v1325, %v1324
        %v1345 = vpack.c.b16 %v1327, %v1326
        %v1346 = vpack.c.b16 %v1329, %v1328
        %v1347 = vpack.c.b16 %v1331, %v1330
        %v1349 = vsel %vm1054, %v1332, 0
        %v1352 = vsel %vm1054, %v1333, 0
        %v1355 = vsel %vm1054, %v1334, 0
        %v1358 = vsel %vm1054, %v1335, 0
        %v1361 = vsel %vm1054, %v1336, 0
        %v1364 = vsel %vm1054, %v1337, 0
        %v1367 = vsel %vm1054, %v1338, 0
        %v1370 = vsel %vm1054, %v1339, 0
        %v1373 = vsel %vm1054, %v1340, 0
        %v1376 = vsel %vm1054, %v1341, 0
        %v1379 = vsel %vm1054, %v1342, 0
        %v1382 = vsel %vm1054, %v1343, 0
        %v1385 = vsel %vm1054, %v1344, 0
        %v1388 = vsel %vm1054, %v1345, 0
        %v1391 = vsel %vm1054, %v1346, 0
        %v1394 = vsel %vm1054, %v1347, 0
        %v1397 = vsel %vm1103, %v834, 0
        %1399 = vmatprep.subr.bf16.mxu0 0
        %1400 = vmatpush1.bf16.msra.mxu0 0
        %1401 = vmatprep.subr.bf16.mxu0 0
        %1402 = vmatpush1.bf16.msra.mxu0 0
        %1403 = vmatprep.subr.bf16.mxu0 0
        %1404 = vmatpush1.bf16.msra.mxu0 0
        %1405 = vmatprep.subr.bf16.mxu0 0
        %1406 = vmatpush1.bf16.msra.mxu0 0
        %1407 = vmatprep.subr.bf16.mxu0 0
        %1408 = vmatpush1.bf16.msra.mxu0 0
        %1409 = vmatprep.subr.bf16.mxu0 0
        %1410 = vmatpush1.bf16.msra.mxu0 0
        %1411 = vmatprep.subr.bf16.mxu0 0
        %1412 = vmatpush1.bf16.msra.mxu0 0
        %1413 = vmatprep.subr.bf16.mxu0 0
        %1414 = vmatpush1.bf16.msra.mxu0 %v1397
        %1415 = vmatprep.subr.bf16.mxu0 0
        %1416 = vmatpush2.bf16.msra.mxu0 0
        %1417 = vmatprep.subr.bf16.mxu0 0
        %1418 = vmatpush2.bf16.msra.mxu0 0
        %1419 = vmatprep.subr.bf16.mxu0 0
        %1420 = vmatpush2.bf16.msra.mxu0 0
        %1421 = vmatprep.subr.bf16.mxu0 0
        %1422 = vmatpush2.bf16.msra.mxu0 0
        %1423 = vmatprep.subr.bf16.mxu0 0
        %1424 = vmatpush2.bf16.msra.mxu0 0
        %1425 = vmatprep.subr.bf16.mxu0 0
        %1426 = vmatpush2.bf16.msra.mxu0 0
        %1427 = vmatprep.subr.bf16.mxu0 0
        %1428 = vmatpush2.bf16.msra.mxu0 0
        %1429 = vmatprep.subr.bf16.mxu0 0
        %1430 = vmatpush2.bf16.msra.mxu0 0
        %1431 = vmatprep.mubr.bf16.mxu0 0
        %1432 = vmatmul.mubr.bf16.gmra.mxu0 %v1349
        %v1433 = vpop.f32.mrf.mxu0
        %v1434 = vadd.f32 %v1142, %v1433
        %v1435 = vpop.f32.mrf.mxu0
        %v1436 = vpop.f32.mrf.mxu0
        %v1437 = vadd.f32 %v1145, %v1436
        %v1438 = vpop.f32.mrf.mxu0
        %1439 = vmatprep.mubr.bf16.mxu0 0
        %1440 = vmatmul.mubr.bf16.gmra.mxu0 %v1352
        %v1441 = vpop.f32.mrf.mxu0
        %v1442 = vadd.f32 %v1150, %v1441
        %v1443 = vpop.f32.mrf.mxu0
        %v1444 = vpop.f32.mrf.mxu0
        %v1445 = vadd.f32 %v1153, %v1444
        %v1446 = vpop.f32.mrf.mxu0
        %1447 = vmatprep.mubr.bf16.mxu0 0
        %1448 = vmatmul.mubr.bf16.gmra.mxu0 %v1355
        %v1449 = vpop.f32.mrf.mxu0
        %v1450 = vadd.f32 %v1158, %v1449
        %v1451 = vpop.f32.mrf.mxu0
        %v1452 = vpop.f32.mrf.mxu0
        %v1453 = vadd.f32 %v1161, %v1452
        %v1454 = vpop.f32.mrf.mxu0
        %1455 = vmatprep.mubr.bf16.mxu0 0
        %1456 = vmatmul.mubr.bf16.gmra.mxu0 %v1358
        %v1457 = vpop.f32.mrf.mxu0
        %v1458 = vadd.f32 %v1166, %v1457
        %v1459 = vpop.f32.mrf.mxu0
        %v1460 = vpop.f32.mrf.mxu0
        %v1461 = vadd.f32 %v1169, %v1460
        %v1462 = vpop.f32.mrf.mxu0
        %1463 = vmatprep.mubr.bf16.mxu0 0
        %1464 = vmatmul.mubr.bf16.gmra.mxu0 %v1361
        %v1465 = vpop.f32.mrf.mxu0
        %v1466 = vadd.f32 %v1174, %v1465
        %v1467 = vpop.f32.mrf.mxu0
        %v1468 = vpop.f32.mrf.mxu0
        %v1469 = vadd.f32 %v1177, %v1468
        %v1470 = vpop.f32.mrf.mxu0
        %1471 = vmatprep.mubr.bf16.mxu0 0
        %1472 = vmatmul.mubr.bf16.gmra.mxu0 %v1364
        %v1473 = vpop.f32.mrf.mxu0
        %v1474 = vadd.f32 %v1182, %v1473
        %v1475 = vpop.f32.mrf.mxu0
        %v1476 = vpop.f32.mrf.mxu0
        %v1477 = vadd.f32 %v1185, %v1476
        %v1478 = vpop.f32.mrf.mxu0
        %1479 = vmatprep.mubr.bf16.mxu0 0
        %1480 = vmatmul.mubr.bf16.gmra.mxu0 %v1367
        %v1481 = vpop.f32.mrf.mxu0
        %v1482 = vadd.f32 %v1190, %v1481
        %v1483 = vpop.f32.mrf.mxu0
        %v1484 = vpop.f32.mrf.mxu0
        %v1485 = vadd.f32 %v1193, %v1484
        %v1486 = vpop.f32.mrf.mxu0
        %1487 = vmatprep.mubr.bf16.mxu0 0
        %1488 = vmatmul.mubr.bf16.gmra.mxu0 %v1370
        %v1489 = vpop.f32.mrf.mxu0
        %v1490 = vadd.f32 %v1198, %v1489
        %v1491 = vpop.f32.mrf.mxu0
        %v1492 = vpop.f32.mrf.mxu0
        %v1493 = vadd.f32 %v1201, %v1492
        %v1494 = vpop.f32.mrf.mxu0
        %1495 = vmatprep.mubr.bf16.mxu0 0
        %1496 = vmatmul.mubr.bf16.gmra.mxu0 %v1373
        %v1497 = vpop.f32.mrf.mxu0
        %v1498 = vadd.f32 %v1206, %v1497
        %v1499 = vpop.f32.mrf.mxu0
        %v1500 = vpop.f32.mrf.mxu0
        %v1501 = vadd.f32 %v1209, %v1500
        %v1502 = vpop.f32.mrf.mxu0
        %1503 = vmatprep.mubr.bf16.mxu0 0
        %1504 = vmatmul.mubr.bf16.gmra.mxu0 %v1376
        %v1505 = vpop.f32.mrf.mxu0
        %v1506 = vadd.f32 %v1214, %v1505
        %v1507 = vpop.f32.mrf.mxu0
        %v1508 = vpop.f32.mrf.mxu0
        %v1509 = vadd.f32 %v1217, %v1508
        %v1510 = vpop.f32.mrf.mxu0
        %1511 = vmatprep.mubr.bf16.mxu0 0
        %1512 = vmatmul.mubr.bf16.gmra.mxu0 %v1379
        %v1513 = vpop.f32.mrf.mxu0
        %v1514 = vadd.f32 %v1222, %v1513
        %v1515 = vpop.f32.mrf.mxu0
        %v1516 = vpop.f32.mrf.mxu0
        %v1517 = vadd.f32 %v1225, %v1516
        %v1518 = vpop.f32.mrf.mxu0
        %1519 = vmatprep.mubr.bf16.mxu0 0
        %1520 = vmatmul.mubr.bf16.gmra.mxu0 %v1382
        %v1521 = vpop.f32.mrf.mxu0
        %v1522 = vadd.f32 %v1230, %v1521
        %v1523 = vpop.f32.mrf.mxu0
        %v1524 = vpop.f32.mrf.mxu0
        %v1525 = vadd.f32 %v1233, %v1524
        %v1526 = vpop.f32.mrf.mxu0
        %1527 = vmatprep.mubr.bf16.mxu0 0
        %1528 = vmatmul.mubr.bf16.gmra.mxu0 %v1385
        %v1529 = vpop.f32.mrf.mxu0
        %v1530 = vadd.f32 %v1238, %v1529
        %v1531 = vpop.f32.mrf.mxu0
        %v1532 = vpop.f32.mrf.mxu0
        %v1533 = vadd.f32 %v1241, %v1532
        %v1534 = vpop.f32.mrf.mxu0
        %1535 = vmatprep.mubr.bf16.mxu0 0
        %1536 = vmatmul.mubr.bf16.gmra.mxu0 %v1388
        %v1537 = vpop.f32.mrf.mxu0
        %v1538 = vadd.f32 %v1246, %v1537
        %v1539 = vpop.f32.mrf.mxu0
        %v1540 = vpop.f32.mrf.mxu0
        %v1541 = vadd.f32 %v1249, %v1540
        %v1542 = vpop.f32.mrf.mxu0
        %1543 = vmatprep.mubr.bf16.mxu0 0
        %1544 = vmatmul.mubr.bf16.gmra.mxu0 %v1391
        %v1545 = vpop.f32.mrf.mxu0
        %v1546 = vadd.f32 %v1254, %v1545
        %v1547 = vpop.f32.mrf.mxu0
        %v1548 = vpop.f32.mrf.mxu0
        %v1549 = vadd.f32 %v1257, %v1548
        %v1550 = vpop.f32.mrf.mxu0
        %1551 = vmatprep.mubr.bf16.mxu0 0
        %1552 = vmatmul.mubr.bf16.gmra.mxu0 %v1394
        %v1553 = vpop.f32.mrf.mxu0
        %v1554 = vadd.f32 %v1262, %v1553
        %v1555 = vpop.f32.mrf.mxu0
        %v1556 = vpop.f32.mrf.mxu0
        %v1557 = vadd.f32 %v1265, %v1556
        %v1558 = vpop.f32.mrf.mxu0
        %1559 = vdwg.mxu0
        %v1560 = vld [vmem:[%s221] sm:$0xe]
        %vm1561 = vcmp.le.s32.totalorder %v610, 14
        %vm1562 = vcmp.le.s32.totalorder %v611, 14
        %vm1563 = vcmp.le.s32.totalorder %v612, 14
        %vm1564 = vcmp.le.s32.totalorder %v613, 14
        %vm1565 = vcmp.le.s32.totalorder %v614, 14
        %vm1566 = vcmp.le.s32.totalorder %v615, 14
        %vm1567 = vcmp.le.s32.totalorder %v616, 14
        %vm1568 = vcmp.le.s32.totalorder %v617, 14
        %vm1569 = vcmp.le.s32.totalorder %v618, 14
        %vm1570 = vcmp.le.s32.totalorder %v619, 14
        %vm1571 = vcmp.le.s32.totalorder %v620, 14
        %vm1572 = vcmp.le.s32.totalorder %v621, 14
        %vm1573 = vcmp.le.s32.totalorder %v622, 14
        %vm1574 = vcmp.le.s32.totalorder %v623, 14
        %vm1575 = vcmp.le.s32.totalorder %v624, 14
        %vm1576 = vcmp.le.s32.totalorder %v625, 14
        %vm1577 = vcmp.le.s32.totalorder %v626, 14
        %vm1578 = vcmp.le.s32.totalorder %v627, 14
        %vm1579 = vcmp.le.s32.totalorder %v628, 14
        %vm1580 = vcmp.le.s32.totalorder %v629, 14
        %vm1581 = vcmp.le.s32.totalorder %v630, 14
        %vm1582 = vcmp.le.s32.totalorder %v631, 14
        %vm1583 = vcmp.le.s32.totalorder %v632, 14
        %vm1584 = vcmp.le.s32.totalorder %v633, 14
        %vm1585 = vcmp.le.s32.totalorder %v634, 14
        %vm1586 = vcmp.le.s32.totalorder %v635, 14
        %vm1587 = vcmp.le.s32.totalorder %v636, 14
        %vm1588 = vcmp.le.s32.totalorder %v637, 14
        %vm1589 = vcmp.le.s32.totalorder %v638, 14
        %vm1590 = vcmp.le.s32.totalorder %v639, 14
        %vm1591 = vcmp.le.s32.totalorder %v640, 14
        %vm1592 = vcmp.le.s32.totalorder %v641, 14
        %v1593 = vsel %vm1561, 1, 0
        %v1594 = vsel %vm1562, 1, 0
        %v1595 = vsel %vm1563, 1, 0
        %v1596 = vsel %vm1564, 1, 0
        %v1597 = vsel %vm1565, 1, 0
        %v1598 = vsel %vm1566, 1, 0
        %v1599 = vsel %vm1567, 1, 0
        %v1600 = vsel %vm1568, 1, 0
        %v1601 = vsel %vm1569, 1, 0
        %v1602 = vsel %vm1570, 1, 0
        %v1603 = vsel %vm1571, 1, 0
        %v1604 = vsel %vm1572, 1, 0
        %v1605 = vsel %vm1573, 1, 0
        %v1606 = vsel %vm1574, 1, 0
        %v1607 = vsel %vm1575, 1, 0
        %v1608 = vsel %vm1576, 1, 0
        %v1609 = vsel %vm1577, 1, 0
        %v1610 = vsel %vm1578, 1, 0
        %v1611 = vsel %vm1579, 1, 0
        %v1612 = vsel %vm1580, 1, 0
        %v1613 = vsel %vm1581, 1, 0
        %v1614 = vsel %vm1582, 1, 0
        %v1615 = vsel %vm1583, 1, 0
        %v1616 = vsel %vm1584, 1, 0
        %v1617 = vsel %vm1585, 1, 0
        %v1618 = vsel %vm1586, 1, 0
        %v1619 = vsel %vm1587, 1, 0
        %v1620 = vsel %vm1588, 1, 0
        %v1621 = vsel %vm1589, 1, 0
        %v1622 = vsel %vm1590, 1, 0
        %v1623 = vsel %vm1591, 1, 0
        %v1624 = vsel %vm1592, 1, 0
        %vm1625 = vcmp.eq.s32.totalorder %v1593, 1
        %vm1626 = vcmp.eq.s32.totalorder %v1594, 1
        %vm1627 = vcmp.eq.s32.totalorder %v1595, 1
        %vm1628 = vcmp.eq.s32.totalorder %v1596, 1
        %vm1629 = vcmp.eq.s32.totalorder %v1597, 1
        %vm1630 = vcmp.eq.s32.totalorder %v1598, 1
        %vm1631 = vcmp.eq.s32.totalorder %v1599, 1
        %vm1632 = vcmp.eq.s32.totalorder %v1600, 1
        %vm1633 = vcmp.eq.s32.totalorder %v1601, 1
        %vm1634 = vcmp.eq.s32.totalorder %v1602, 1
        %vm1635 = vcmp.eq.s32.totalorder %v1603, 1
        %vm1636 = vcmp.eq.s32.totalorder %v1604, 1
        %vm1637 = vcmp.eq.s32.totalorder %v1605, 1
        %vm1638 = vcmp.eq.s32.totalorder %v1606, 1
        %vm1639 = vcmp.eq.s32.totalorder %v1607, 1
        %vm1640 = vcmp.eq.s32.totalorder %v1608, 1
        %vm1641 = vcmp.eq.s32.totalorder %v1609, 1
        %vm1642 = vcmp.eq.s32.totalorder %v1610, 1
        %vm1643 = vcmp.eq.s32.totalorder %v1611, 1
        %vm1644 = vcmp.eq.s32.totalorder %v1612, 1
        %vm1645 = vcmp.eq.s32.totalorder %v1613, 1
        %vm1646 = vcmp.eq.s32.totalorder %v1614, 1
        %vm1647 = vcmp.eq.s32.totalorder %v1615, 1
        %vm1648 = vcmp.eq.s32.totalorder %v1616, 1
        %vm1649 = vcmp.eq.s32.totalorder %v1617, 1
        %vm1650 = vcmp.eq.s32.totalorder %v1618, 1
        %vm1651 = vcmp.eq.s32.totalorder %v1619, 1
        %vm1652 = vcmp.eq.s32.totalorder %v1620, 1
        %vm1653 = vcmp.eq.s32.totalorder %v1621, 1
        %vm1654 = vcmp.eq.s32.totalorder %v1622, 1
        %vm1655 = vcmp.eq.s32.totalorder %v1623, 1
        %vm1656 = vcmp.eq.s32.totalorder %v1624, 1
        %vm1657 = vmpackc.low %vm1625, %vm1625
        %vm1658 = vmpackc.low %vm1626, %vm1626
        %vm1659 = vmpackc.low %vm1627, %vm1627
        %vm1660 = vmpackc.low %vm1628, %vm1628
        %vm1661 = vmpackc.low %vm1629, %vm1629
        %vm1662 = vmpackc.low %vm1630, %vm1630
        %vm1663 = vmpackc.low %vm1631, %vm1631
        %vm1664 = vmpackc.low %vm1632, %vm1632
        %vm1665 = vmpackc.low %vm1633, %vm1633
        %vm1666 = vmpackc.low %vm1634, %vm1634
        %vm1667 = vmpackc.low %vm1635, %vm1635
        %vm1668 = vmpackc.low %vm1636, %vm1636
        %vm1669 = vmpackc.low %vm1637, %vm1637
        %vm1670 = vmpackc.low %vm1638, %vm1638
        %vm1671 = vmpackc.low %vm1639, %vm1639
        %vm1672 = vmpackc.low %vm1640, %vm1640
        %vm1673 = vmpackc.low %vm1641, %vm1641
        %vm1674 = vmpackc.low %vm1642, %vm1642
        %vm1675 = vmpackc.low %vm1643, %vm1643
        %vm1676 = vmpackc.low %vm1644, %vm1644
        %vm1677 = vmpackc.low %vm1645, %vm1645
        %vm1678 = vmpackc.low %vm1646, %vm1646
        %vm1679 = vmpackc.low %vm1647, %vm1647
        %vm1680 = vmpackc.low %vm1648, %vm1648
        %vm1681 = vmpackc.low %vm1649, %vm1649
        %vm1682 = vmpackc.low %vm1650, %vm1650
        %vm1683 = vmpackc.low %vm1651, %vm1651
        %vm1684 = vmpackc.low %vm1652, %vm1652
        %vm1685 = vmpackc.low %vm1653, %vm1653
        %vm1686 = vmpackc.low %vm1654, %vm1654
        %vm1687 = vmpackc.low %vm1655, %vm1655
        %vm1688 = vmpackc.low %vm1656, %vm1656
        %v1689 = vsel %vm1657, 65537, 0
        %v1690 = vsel %vm1658, 65537, 0
        %v1691 = vsel %vm1659, 65537, 0
        %v1692 = vsel %vm1660, 65537, 0
        %v1693 = vsel %vm1661, 65537, 0
        %v1694 = vsel %vm1662, 65537, 0
        %v1695 = vsel %vm1663, 65537, 0
        %v1696 = vsel %vm1664, 65537, 0
        %v1697 = vsel %vm1665, 65537, 0
        %v1698 = vsel %vm1666, 65537, 0
        %v1699 = vsel %vm1667, 65537, 0
        %v1700 = vsel %vm1668, 65537, 0
        %v1701 = vsel %vm1669, 65537, 0
        %v1702 = vsel %vm1670, 65537, 0
        %v1703 = vsel %vm1671, 65537, 0
        %v1704 = vsel %vm1672, 65537, 0
        %v1705 = vsel %vm1673, 65537, 0
        %v1706 = vsel %vm1674, 65537, 0
        %v1707 = vsel %vm1675, 65537, 0
        %v1708 = vsel %vm1676, 65537, 0
        %v1709 = vsel %vm1677, 65537, 0
        %v1710 = vsel %vm1678, 65537, 0
        %v1711 = vsel %vm1679, 65537, 0
        %v1712 = vsel %vm1680, 65537, 0
        %v1713 = vsel %vm1681, 65537, 0
        %v1714 = vsel %vm1682, 65537, 0
        %v1715 = vsel %vm1683, 65537, 0
        %v1716 = vsel %vm1684, 65537, 0
        %v1717 = vsel %vm1685, 65537, 0
        %v1718 = vsel %vm1686, 65537, 0
        %v1719 = vsel %vm1687, 65537, 0
        %v1720 = vsel %vm1688, 65537, 0
        %vm1721 = vcmask 1040384
        %vm1722 = vcmask 1044484
        %vm1723 = vmor %vm1721, %vm1722
        %v1724 = vrot.slane %v1689, 7
        %v1725 = vrot.slane %v1724, 4
        %v1726 = vrot.slane %v1690, 7
        %v1727 = vsel %vm1723, %v1725, %v1726
        %v1728 = vrot.slane %v1726, 4
        %v1729 = vrot.slane %v1691, 7
        %v1730 = vsel %vm1723, %v1728, %v1729
        %v1731 = vrot.slane %v1729, 4
        %v1732 = vrot.slane %v1692, 7
        %v1733 = vsel %vm1723, %v1731, %v1732
        %v1734 = vrot.slane %v1732, 4
        %v1735 = vrot.slane %v1693, 7
        %v1736 = vsel %vm1723, %v1734, %v1735
        %v1737 = vrot.slane %v1735, 4
        %v1738 = vrot.slane %v1694, 7
        %v1739 = vsel %vm1723, %v1737, %v1738
        %v1740 = vrot.slane %v1738, 4
        %v1741 = vrot.slane %v1695, 7
        %v1742 = vsel %vm1723, %v1740, %v1741
        %v1743 = vrot.slane %v1741, 4
        %v1744 = vrot.slane %v1696, 7
        %v1745 = vsel %vm1723, %v1743, %v1744
        %v1746 = vrot.slane %v1744, 4
        %v1747 = vrot.slane %v1697, 7
        %v1748 = vsel %vm1723, %v1746, %v1747
        %v1749 = vrot.slane %v1747, 4
        %v1750 = vrot.slane %v1698, 7
        %v1751 = vsel %vm1723, %v1749, %v1750
        %v1752 = vrot.slane %v1750, 4
        %v1753 = vrot.slane %v1699, 7
        %v1754 = vsel %vm1723, %v1752, %v1753
        %v1755 = vrot.slane %v1753, 4
        %v1756 = vrot.slane %v1700, 7
        %v1757 = vsel %vm1723, %v1755, %v1756
        %v1758 = vrot.slane %v1756, 4
        %v1759 = vrot.slane %v1701, 7
        %v1760 = vsel %vm1723, %v1758, %v1759
        %v1761 = vrot.slane %v1759, 4
        %v1762 = vrot.slane %v1702, 7
        %v1763 = vsel %vm1723, %v1761, %v1762
        %v1764 = vrot.slane %v1762, 4
        %v1765 = vrot.slane %v1703, 7
        %v1766 = vsel %vm1723, %v1764, %v1765
        %v1767 = vrot.slane %v1765, 4
        %v1768 = vrot.slane %v1704, 7
        %v1769 = vsel %vm1723, %v1767, %v1768
        %v1770 = vrot.slane %v1768, 4
        %v1771 = vrot.slane %v1705, 7
        %v1772 = vsel %vm1723, %v1770, %v1771
        %v1773 = vrot.slane %v1771, 4
        %v1774 = vrot.slane %v1706, 7
        %v1775 = vsel %vm1723, %v1773, %v1774
        %v1776 = vrot.slane %v1774, 4
        %v1777 = vrot.slane %v1707, 7
        %v1778 = vsel %vm1723, %v1776, %v1777
        %v1779 = vrot.slane %v1777, 4
        %v1780 = vrot.slane %v1708, 7
        %v1781 = vsel %vm1723, %v1779, %v1780
        %v1782 = vrot.slane %v1780, 4
        %v1783 = vrot.slane %v1709, 7
        %v1784 = vsel %vm1723, %v1782, %v1783
        %v1785 = vrot.slane %v1783, 4
        %v1786 = vrot.slane %v1710, 7
        %v1787 = vsel %vm1723, %v1785, %v1786
        %v1788 = vrot.slane %v1786, 4
        %v1789 = vrot.slane %v1711, 7
        %v1790 = vsel %vm1723, %v1788, %v1789
        %v1791 = vrot.slane %v1789, 4
        %v1792 = vrot.slane %v1712, 7
        %v1793 = vsel %vm1723, %v1791, %v1792
        %v1794 = vrot.slane %v1792, 4
        %v1795 = vrot.slane %v1713, 7
        %v1796 = vsel %vm1723, %v1794, %v1795
        %v1797 = vrot.slane %v1795, 4
        %v1798 = vrot.slane %v1714, 7
        %v1799 = vsel %vm1723, %v1797, %v1798
        %v1800 = vrot.slane %v1798, 4
        %v1801 = vrot.slane %v1715, 7
        %v1802 = vsel %vm1723, %v1800, %v1801
        %v1803 = vrot.slane %v1801, 4
        %v1804 = vrot.slane %v1716, 7
        %v1805 = vsel %vm1723, %v1803, %v1804
        %v1806 = vrot.slane %v1804, 4
        %v1807 = vrot.slane %v1717, 7
        %v1808 = vsel %vm1723, %v1806, %v1807
        %v1809 = vrot.slane %v1807, 4
        %v1810 = vrot.slane %v1718, 7
        %v1811 = vsel %vm1723, %v1809, %v1810
        %v1812 = vrot.slane %v1810, 4
        %v1813 = vrot.slane %v1719, 7
        %v1814 = vsel %vm1723, %v1812, %v1813
        %v1815 = vrot.slane %v1813, 4
        %v1816 = vrot.slane %v1720, 7
        %v1817 = vsel %vm1723, %v1815, %v1816
        %v1818 = vrot.slane %v1816, 4
        %vm1819 = vcmp.ne.s16.totalorder %v1724, 0
        %vm1820 = vcmp.ne.s16.totalorder %v1727, 0
        %vm1821 = vcmp.ne.s16.totalorder %v1730, 0
        %vm1822 = vcmp.ne.s16.totalorder %v1733, 0
        %vm1823 = vcmp.ne.s16.totalorder %v1736, 0
        %vm1824 = vcmp.ne.s16.totalorder %v1739, 0
        %vm1825 = vcmp.ne.s16.totalorder %v1742, 0
        %vm1826 = vcmp.ne.s16.totalorder %v1745, 0
        %vm1827 = vcmp.ne.s16.totalorder %v1748, 0
        %vm1828 = vcmp.ne.s16.totalorder %v1751, 0
        %vm1829 = vcmp.ne.s16.totalorder %v1754, 0
        %vm1830 = vcmp.ne.s16.totalorder %v1757, 0
        %vm1831 = vcmp.ne.s16.totalorder %v1760, 0
        %vm1832 = vcmp.ne.s16.totalorder %v1763, 0
        %vm1833 = vcmp.ne.s16.totalorder %v1766, 0
        %vm1834 = vcmp.ne.s16.totalorder %v1769, 0
        %vm1835 = vcmp.ne.s16.totalorder %v1772, 0
        %vm1836 = vcmp.ne.s16.totalorder %v1775, 0
        %vm1837 = vcmp.ne.s16.totalorder %v1778, 0
        %vm1838 = vcmp.ne.s16.totalorder %v1781, 0
        %vm1839 = vcmp.ne.s16.totalorder %v1784, 0
        %vm1840 = vcmp.ne.s16.totalorder %v1787, 0
        %vm1841 = vcmp.ne.s16.totalorder %v1790, 0
        %vm1842 = vcmp.ne.s16.totalorder %v1793, 0
        %vm1843 = vcmp.ne.s16.totalorder %v1796, 0
        %vm1844 = vcmp.ne.s16.totalorder %v1799, 0
        %vm1845 = vcmp.ne.s16.totalorder %v1802, 0
        %vm1846 = vcmp.ne.s16.totalorder %v1805, 0
        %vm1847 = vcmp.ne.s16.totalorder %v1808, 0
        %vm1848 = vcmp.ne.s16.totalorder %v1811, 0
        %vm1849 = vcmp.ne.s16.totalorder %v1814, 0
        %vm1850 = vcmp.ne.s16.totalorder %v1817, 0
        %vm1851 = vcmp.ne.s16.totalorder %v1818, 0
        %v1852 = vsel %vm1819, %v1560, 0
        %v1853 = vsel %vm1820, %v643, 0
        %v1854 = vsel %vm1821, %v644, 0
        %v1855 = vsel %vm1822, %v645, 0
        %v1856 = vsel %vm1823, %v646, 0
        %v1857 = vsel %vm1824, %v647, 0
        %v1858 = vsel %vm1825, %v648, 0
        %v1859 = vsel %vm1826, %v649, 0
        %v1860 = vsel %vm1827, %v650, 0
        %v1861 = vsel %vm1828, %v651, 0
        %v1862 = vsel %vm1829, %v652, 0
        %v1863 = vsel %vm1830, %v653, 0
        %v1864 = vsel %vm1831, %v654, 0
        %v1865 = vsel %vm1832, %v655, 0
        %v1866 = vsel %vm1833, %v656, 0
        %v1867 = vsel %vm1834, %v657, 0
        %v1868 = vsel %vm1835, %v658, 0
        %v1869 = vsel %vm1836, %v659, 0
        %v1870 = vsel %vm1837, %v660, 0
        %v1871 = vsel %vm1838, %v661, 0
        %v1872 = vsel %vm1839, %v662, 0
        %v1873 = vsel %vm1840, %v663, 0
        %v1874 = vsel %vm1841, %v664, 0
        %v1875 = vsel %vm1842, %v665, 0
        %v1876 = vsel %vm1843, %v666, 0
        %v1877 = vsel %vm1844, %v667, 0
        %v1878 = vsel %vm1845, %v668, 0
        %v1879 = vsel %vm1846, %v669, 0
        %v1880 = vsel %vm1847, %v670, 0
        %v1881 = vsel %vm1848, %v671, 0
        %v1882 = vsel %vm1849, %v672, 0
        %v1883 = vsel %vm1850, %v673, 0
        %v1884 = vsel %vm1851, %v835, 0
        %s1885 = scalar_lea.vmem %s1, 4
        %v1886 = vld [vmem:[%s1885] sm:$0x3]
        %v1920 = vunpack.c.l.b16 %v1852
        %v1921 = vunpack.c.l.b16 %v1853
        %v1922 = vunpack.c.l.b16 %v1854
        %v1923 = vunpack.c.l.b16 %v1855
        %v1924 = vunpack.c.l.b16 %v1856
        %v1925 = vunpack.c.l.b16 %v1857
        %v1926 = vunpack.c.l.b16 %v1858
        %v1927 = vunpack.c.l.b16 %v1859
        %v1928 = vunpack.c.l.b16 %v1860
        %v1929 = vunpack.c.l.b16 %v1861
        %v1930 = vunpack.c.l.b16 %v1862
        %v1931 = vunpack.c.l.b16 %v1863
        %v1932 = vunpack.c.l.b16 %v1864
        %v1933 = vunpack.c.l.b16 %v1865
        %v1934 = vunpack.c.l.b16 %v1866
        %v1935 = vunpack.c.l.b16 %v1867
        %v1936 = vunpack.c.l.b16 %v1868
        %v1937 = vunpack.c.l.b16 %v1869
        %v1938 = vunpack.c.l.b16 %v1870
        %v1939 = vunpack.c.l.b16 %v1871
        %v1940 = vunpack.c.l.b16 %v1872
        %v1941 = vunpack.c.l.b16 %v1873
        %v1942 = vunpack.c.l.b16 %v1874
        %v1943 = vunpack.c.l.b16 %v1875
        %v1944 = vunpack.c.l.b16 %v1876
        %v1945 = vunpack.c.l.b16 %v1877
        %v1946 = vunpack.c.l.b16 %v1878
        %v1947 = vunpack.c.l.b16 %v1879
        %v1948 = vunpack.c.l.b16 %v1880
        %v1949 = vunpack.c.l.b16 %v1881
        %v1950 = vunpack.c.l.b16 %v1882
        %v1951 = vunpack.c.l.b16 %v1883
        %v1952 = vunpack.c.l.b16 %v1884
        %v1953 = vpack.c.b16 %v1921, %v1920
        %v1954 = vpack.c.b16 %v1923, %v1922
        %v1955 = vpack.c.b16 %v1925, %v1924
        %v1956 = vpack.c.b16 %v1927, %v1926
        %v1957 = vpack.c.b16 %v1929, %v1928
        %v1958 = vpack.c.b16 %v1931, %v1930
        %v1959 = vpack.c.b16 %v1933, %v1932
        %v1960 = vpack.c.b16 %v1935, %v1934
        %v1961 = vpack.c.b16 %v1937, %v1936
        %v1962 = vpack.c.b16 %v1939, %v1938
        %v1963 = vpack.c.b16 %v1941, %v1940
        %v1964 = vpack.c.b16 %v1943, %v1942
        %v1965 = vpack.c.b16 %v1945, %v1944
        %v1966 = vpack.c.b16 %v1947, %v1946
        %v1967 = vpack.c.b16 %v1949, %v1948
        %v1968 = vpack.c.b16 %v1951, %v1950
        %v1969 = vpack.c.b16 %v1952, %v1952
        %vm1970 = vcmask 1046528
        %v1971 = vrot.slane %v1953, 1
        %v1972 = vrot.slane %v1954, 1
        %v1973 = vsel %vm1970, %v1971, %v1972
        %v1974 = vrot.slane %v1955, 1
        %v1975 = vsel %vm1970, %v1972, %v1974
        %v1976 = vrot.slane %v1956, 1
        %v1977 = vsel %vm1970, %v1974, %v1976
        %v1978 = vrot.slane %v1957, 1
        %v1979 = vsel %vm1970, %v1976, %v1978
        %v1980 = vrot.slane %v1958, 1
        %v1981 = vsel %vm1970, %v1978, %v1980
        %v1982 = vrot.slane %v1959, 1
        %v1983 = vsel %vm1970, %v1980, %v1982
        %v1984 = vrot.slane %v1960, 1
        %v1985 = vsel %vm1970, %v1982, %v1984
        %v1986 = vrot.slane %v1961, 1
        %v1987 = vsel %vm1970, %v1984, %v1986
        %v1988 = vrot.slane %v1962, 1
        %v1989 = vsel %vm1970, %v1986, %v1988
        %v1990 = vrot.slane %v1963, 1
        %v1991 = vsel %vm1970, %v1988, %v1990
        %v1992 = vrot.slane %v1964, 1
        %v1993 = vsel %vm1970, %v1990, %v1992
        %v1994 = vrot.slane %v1965, 1
        %v1995 = vsel %vm1970, %v1992, %v1994
        %v1996 = vrot.slane %v1966, 1
        %v1997 = vsel %vm1970, %v1994, %v1996
        %v1998 = vrot.slane %v1967, 1
        %v1999 = vsel %vm1970, %v1996, %v1998
        %v2000 = vrot.slane %v1968, 1
        %v2001 = vsel %vm1970, %v1998, %v2000
        %v2002 = vrot.slane %v1969, 1
        %v2003 = vsel %vm1970, %v2000, %v2002
        %v2005 = vsel %vm1054, %v1973, 0
        %v2008 = vsel %vm1054, %v1975, 0
        %v2011 = vsel %vm1054, %v1977, 0
        %v2014 = vsel %vm1054, %v1979, 0
        %v2017 = vsel %vm1054, %v1981, 0
        %v2020 = vsel %vm1054, %v1983, 0
        %v2023 = vsel %vm1054, %v1985, 0
        %v2026 = vsel %vm1054, %v1987, 0
        %v2029 = vsel %vm1054, %v1989, 0
        %v2032 = vsel %vm1054, %v1991, 0
        %v2035 = vsel %vm1054, %v1993, 0
        %v2038 = vsel %vm1054, %v1995, 0
        %v2041 = vsel %vm1054, %v1997, 0
        %v2044 = vsel %vm1054, %v1999, 0
        %v2047 = vsel %vm1054, %v2001, 0
        %v2050 = vsel %vm1054, %v2003, 0
        %v2053 = vsel %vm1103, %v1886, 0
        %2055 = vmatprep.subr.bf16.mxu0 0
        %2056 = vmatpush1.bf16.msra.mxu0 0
        %2057 = vmatprep.subr.bf16.mxu0 0
        %2058 = vmatpush1.bf16.msra.mxu0 0
        %2059 = vmatprep.subr.bf16.mxu0 0
        %2060 = vmatpush1.bf16.msra.mxu0 0
        %2061 = vmatprep.subr.bf16.mxu0 0
        %2062 = vmatpush1.bf16.msra.mxu0 0
        %2063 = vmatprep.subr.bf16.mxu0 0
        %2064 = vmatpush1.bf16.msra.mxu0 0
        %2065 = vmatprep.subr.bf16.mxu0 0
        %2066 = vmatpush1.bf16.msra.mxu0 0
        %2067 = vmatprep.subr.bf16.mxu0 0
        %2068 = vmatpush1.bf16.msra.mxu0 0
        %2069 = vmatprep.subr.bf16.mxu0 0
        %2070 = vmatpush1.bf16.msra.mxu0 %v2053
        %2071 = vmatprep.subr.bf16.mxu0 0
        %2072 = vmatpush2.bf16.msra.mxu0 0
        %2073 = vmatprep.subr.bf16.mxu0 0
        %2074 = vmatpush2.bf16.msra.mxu0 0
        %2075 = vmatprep.subr.bf16.mxu0 0
        %2076 = vmatpush2.bf16.msra.mxu0 0
        %2077 = vmatprep.subr.bf16.mxu0 0
        %2078 = vmatpush2.bf16.msra.mxu0 0
        %2079 = vmatprep.subr.bf16.mxu0 0
        %2080 = vmatpush2.bf16.msra.mxu0 0
        %2081 = vmatprep.subr.bf16.mxu0 0
        %2082 = vmatpush2.bf16.msra.mxu0 0
        %2083 = vmatprep.subr.bf16.mxu0 0
        %2084 = vmatpush2.bf16.msra.mxu0 0
        %2085 = vmatprep.subr.bf16.mxu0 0
        %2086 = vmatpush2.bf16.msra.mxu0 0
        %2087 = vmatprep.mubr.bf16.mxu0 0
        %2088 = vmatmul.mubr.bf16.gmra.mxu0 %v2005
        %v2089 = vpop.f32.mrf.mxu0
        %v2090 = vadd.f32 0.0, %v2089
        %v2091 = vpop.f32.mrf.mxu0
        %v2092 = vpop.f32.mrf.mxu0
        %v2093 = vadd.f32 0.0, %v2092
        %v2094 = vpop.f32.mrf.mxu0
        %2095 = vmatprep.mubr.bf16.mxu0 0
        %2096 = vmatmul.mubr.bf16.gmra.mxu0 %v2008
        %v2097 = vpop.f32.mrf.mxu0
        %v2098 = vadd.f32 0.0, %v2097
        %v2099 = vpop.f32.mrf.mxu0
        %v2100 = vpop.f32.mrf.mxu0
        %v2101 = vadd.f32 0.0, %v2100
        %v2102 = vpop.f32.mrf.mxu0
        %2103 = vmatprep.mubr.bf16.mxu0 0
        %2104 = vmatmul.mubr.bf16.gmra.mxu0 %v2011
        %v2105 = vpop.f32.mrf.mxu0
        %v2106 = vadd.f32 0.0, %v2105
        %v2107 = vpop.f32.mrf.mxu0
        %v2108 = vpop.f32.mrf.mxu0
        %v2109 = vadd.f32 0.0, %v2108
        %v2110 = vpop.f32.mrf.mxu0
        %2111 = vmatprep.mubr.bf16.mxu0 0
        %2112 = vmatmul.mubr.bf16.gmra.mxu0 %v2014
        %v2113 = vpop.f32.mrf.mxu0
        %v2114 = vadd.f32 0.0, %v2113
        %v2115 = vpop.f32.mrf.mxu0
        %v2116 = vpop.f32.mrf.mxu0
        %v2117 = vadd.f32 0.0, %v2116
        %v2118 = vpop.f32.mrf.mxu0
        %2119 = vmatprep.mubr.bf16.mxu0 0
        %2120 = vmatmul.mubr.bf16.gmra.mxu0 %v2017
        %v2121 = vpop.f32.mrf.mxu0
        %v2122 = vadd.f32 0.0, %v2121
        %v2123 = vpop.f32.mrf.mxu0
        %v2124 = vpop.f32.mrf.mxu0
        %v2125 = vadd.f32 0.0, %v2124
        %v2126 = vpop.f32.mrf.mxu0
        %2127 = vmatprep.mubr.bf16.mxu0 0
        %2128 = vmatmul.mubr.bf16.gmra.mxu0 %v2020
        %v2129 = vpop.f32.mrf.mxu0
        %v2130 = vadd.f32 0.0, %v2129
        %v2131 = vpop.f32.mrf.mxu0
        %v2132 = vpop.f32.mrf.mxu0
        %v2133 = vadd.f32 0.0, %v2132
        %v2134 = vpop.f32.mrf.mxu0
        %2135 = vmatprep.mubr.bf16.mxu0 0
        %2136 = vmatmul.mubr.bf16.gmra.mxu0 %v2023
        %v2137 = vpop.f32.mrf.mxu0
        %v2138 = vadd.f32 0.0, %v2137
        %v2139 = vpop.f32.mrf.mxu0
        %v2140 = vpop.f32.mrf.mxu0
        %v2141 = vadd.f32 0.0, %v2140
        %v2142 = vpop.f32.mrf.mxu0
        %2143 = vmatprep.mubr.bf16.mxu0 0
        %2144 = vmatmul.mubr.bf16.gmra.mxu0 %v2026
        %v2145 = vpop.f32.mrf.mxu0
        %v2146 = vadd.f32 0.0, %v2145
        %v2147 = vpop.f32.mrf.mxu0
        %v2148 = vpop.f32.mrf.mxu0
        %v2149 = vadd.f32 0.0, %v2148
        %v2150 = vpop.f32.mrf.mxu0
        %2151 = vmatprep.mubr.bf16.mxu0 0
        %2152 = vmatmul.mubr.bf16.gmra.mxu0 %v2029
        %v2153 = vpop.f32.mrf.mxu0
        %v2154 = vadd.f32 0.0, %v2153
        %v2155 = vpop.f32.mrf.mxu0
        %v2156 = vpop.f32.mrf.mxu0
        %v2157 = vadd.f32 0.0, %v2156
        %v2158 = vpop.f32.mrf.mxu0
        %2159 = vmatprep.mubr.bf16.mxu0 0
        %2160 = vmatmul.mubr.bf16.gmra.mxu0 %v2032
        %v2161 = vpop.f32.mrf.mxu0
        %v2162 = vadd.f32 0.0, %v2161
        %v2163 = vpop.f32.mrf.mxu0
        %v2164 = vpop.f32.mrf.mxu0
        %v2165 = vadd.f32 0.0, %v2164
        %v2166 = vpop.f32.mrf.mxu0
        %2167 = vmatprep.mubr.bf16.mxu0 0
        %2168 = vmatmul.mubr.bf16.gmra.mxu0 %v2035
        %v2169 = vpop.f32.mrf.mxu0
        %v2170 = vadd.f32 0.0, %v2169
        %v2171 = vpop.f32.mrf.mxu0
        %v2172 = vpop.f32.mrf.mxu0
        %v2173 = vadd.f32 0.0, %v2172
        %v2174 = vpop.f32.mrf.mxu0
        %2175 = vmatprep.mubr.bf16.mxu0 0
        %2176 = vmatmul.mubr.bf16.gmra.mxu0 %v2038
        %v2177 = vpop.f32.mrf.mxu0
        %v2178 = vadd.f32 0.0, %v2177
        %v2179 = vpop.f32.mrf.mxu0
        %v2180 = vpop.f32.mrf.mxu0
        %v2181 = vadd.f32 0.0, %v2180
        %v2182 = vpop.f32.mrf.mxu0
        %2183 = vmatprep.mubr.bf16.mxu0 0
        %2184 = vmatmul.mubr.bf16.gmra.mxu0 %v2041
        %v2185 = vpop.f32.mrf.mxu0
        %v2186 = vadd.f32 0.0, %v2185
        %v2187 = vpop.f32.mrf.mxu0
        %v2188 = vpop.f32.mrf.mxu0
        %v2189 = vadd.f32 0.0, %v2188
        %v2190 = vpop.f32.mrf.mxu0
        %2191 = vmatprep.mubr.bf16.mxu0 0
        %2192 = vmatmul.mubr.bf16.gmra.mxu0 %v2044
        %v2193 = vpop.f32.mrf.mxu0
        %v2194 = vadd.f32 0.0, %v2193
        %v2195 = vpop.f32.mrf.mxu0
        %v2196 = vpop.f32.mrf.mxu0
        %v2197 = vadd.f32 0.0, %v2196
        %v2198 = vpop.f32.mrf.mxu0
        %2199 = vmatprep.mubr.bf16.mxu0 0
        %2200 = vmatmul.mubr.bf16.gmra.mxu0 %v2047
        %v2201 = vpop.f32.mrf.mxu0
        %v2202 = vadd.f32 0.0, %v2201
        %v2203 = vpop.f32.mrf.mxu0
        %v2204 = vpop.f32.mrf.mxu0
        %v2205 = vadd.f32 0.0, %v2204
        %v2206 = vpop.f32.mrf.mxu0
        %2207 = vmatprep.mubr.bf16.mxu0 0
        %2208 = vmatmul.mubr.bf16.gmra.mxu0 %v2050
        %v2209 = vpop.f32.mrf.mxu0
        %v2210 = vadd.f32 0.0, %v2209
        %v2211 = vpop.f32.mrf.mxu0
        %v2212 = vpop.f32.mrf.mxu0
        %v2213 = vadd.f32 0.0, %v2212
        %v2214 = vpop.f32.mrf.mxu0
        %2215 = vdwg.mxu0
        %v2216 = vadd.f32 %v1434, %v2090
        %v2217 = vadd.f32 %v1437, %v2093
        %v2218 = vadd.f32 %v1442, %v2098
        %v2219 = vadd.f32 %v1445, %v2101
        %v2220 = vadd.f32 %v1450, %v2106
        %v2221 = vadd.f32 %v1453, %v2109
        %v2222 = vadd.f32 %v1458, %v2114
        %v2223 = vadd.f32 %v1461, %v2117
        %v2224 = vadd.f32 %v1466, %v2122
        %v2225 = vadd.f32 %v1469, %v2125
        %v2226 = vadd.f32 %v1474, %v2130
        %v2227 = vadd.f32 %v1477, %v2133
        %v2228 = vadd.f32 %v1482, %v2138
        %v2229 = vadd.f32 %v1485, %v2141
        %v2230 = vadd.f32 %v1490, %v2146
        %v2231 = vadd.f32 %v1493, %v2149
        %v2232 = vadd.f32 %v1498, %v2154
        %v2233 = vadd.f32 %v1501, %v2157
        %v2234 = vadd.f32 %v1506, %v2162
        %v2235 = vadd.f32 %v1509, %v2165
        %v2236 = vadd.f32 %v1514, %v2170
        %v2237 = vadd.f32 %v1517, %v2173
        %v2238 = vadd.f32 %v1522, %v2178
        %v2239 = vadd.f32 %v1525, %v2181
        %v2240 = vadd.f32 %v1530, %v2186
        %v2241 = vadd.f32 %v1533, %v2189
        %v2242 = vadd.f32 %v1538, %v2194
        %v2243 = vadd.f32 %v1541, %v2197
        %v2244 = vadd.f32 %v1546, %v2202
        %v2245 = vadd.f32 %v1549, %v2205
        %v2246 = vadd.f32 %v1554, %v2210
        %v2247 = vadd.f32 %v1557, %v2213
        %v2248 = vld [vmem:[%s221 + $0x8] sm:$0xf]
        %v2249 = vld [vmem:[%s221 + $0xc] sm:$0xf]
        %v2250 = vld [vmem:[%s221 + $0x10] sm:$0xf]
        %v2251 = vld [vmem:[%s221 + $0x14] sm:$0xf]
        %v2252 = vld [vmem:[%s221 + $0x18] sm:$0xf]
        %v2253 = vld [vmem:[%s221 + $0x1c] sm:$0xf]
        %v2254 = vld [vmem:[%s221 + $0x20] sm:$0xf]
        %v2255 = vld [vmem:[%s221 + $0x24] sm:$0xf]
        %v2256 = vld [vmem:[%s221 + $0x28] sm:$0xf]
        %v2257 = vld [vmem:[%s221 + $0x2c] sm:$0xf]
        %v2258 = vld [vmem:[%s221 + $0x30] sm:$0xf]
        %v2259 = vld [vmem:[%s221 + $0x34] sm:$0xf]
        %v2260 = vld [vmem:[%s221 + $0x38] sm:$0xf]
        %v2261 = vld [vmem:[%s221 + $0x3c] sm:$0xf]
        %v2262 = vld [vmem:[%s221 + $0x40] sm:$0xf]
        %v2263 = vld [vmem:[%s221 + $0x44] sm:$0xf]
        %v2264 = vld [vmem:[%s221 + $0x48] sm:$0xf]
        %v2265 = vld [vmem:[%s221 + $0x4c] sm:$0xf]
        %v2266 = vld [vmem:[%s221 + $0x50] sm:$0xf]
        %v2267 = vld [vmem:[%s221 + $0x54] sm:$0xf]
        %v2268 = vld [vmem:[%s221 + $0x58] sm:$0xf]
        %v2269 = vld [vmem:[%s221 + $0x5c] sm:$0xf]
        %v2270 = vld [vmem:[%s221 + $0x60] sm:$0xf]
        %v2271 = vld [vmem:[%s221 + $0x64] sm:$0xf]
        %v2272 = vld [vmem:[%s221 + $0x68] sm:$0xf]
        %v2273 = vld [vmem:[%s221 + $0x6c] sm:$0xf]
        %v2274 = vld [vmem:[%s221 + $0x70] sm:$0xf]
        %v2275 = vld [vmem:[%s221 + $0x74] sm:$0xf]
        %v2276 = vld [vmem:[%s221 + $0x78] sm:$0xf]
        %v2277 = vld [vmem:[%s221 + $0x7c] sm:$0xf]
        %v2278 = vld [vmem:[%s221 + $0x80] sm:$0xf]
        %v2279 = vld [vmem:[%s221 + $0x84] sm:$0xf]
        %v2280 = vsel %vm770, %v2248, 0
        %v2281 = vsel %vm771, %v2249, 0
        %v2282 = vsel %vm772, %v2250, 0
        %v2283 = vsel %vm773, %v2251, 0
        %v2284 = vsel %vm774, %v2252, 0
        %v2285 = vsel %vm775, %v2253, 0
        %v2286 = vsel %vm776, %v2254, 0
        %v2287 = vsel %vm777, %v2255, 0
        %v2288 = vsel %vm778, %v2256, 0
        %v2289 = vsel %vm779, %v2257, 0
        %v2290 = vsel %vm780, %v2258, 0
        %v2291 = vsel %vm781, %v2259, 0
        %v2292 = vsel %vm782, %v2260, 0
        %v2293 = vsel %vm783, %v2261, 0
        %v2294 = vsel %vm784, %v2262, 0
        %v2295 = vsel %vm785, %v2263, 0
        %v2296 = vsel %vm786, %v2264, 0
        %v2297 = vsel %vm787, %v2265, 0
        %v2298 = vsel %vm788, %v2266, 0
        %v2299 = vsel %vm789, %v2267, 0
        %v2300 = vsel %vm790, %v2268, 0
        %v2301 = vsel %vm791, %v2269, 0
        %v2302 = vsel %vm792, %v2270, 0
        %v2303 = vsel %vm793, %v2271, 0
        %v2304 = vsel %vm794, %v2272, 0
        %v2305 = vsel %vm795, %v2273, 0
        %v2306 = vsel %vm796, %v2274, 0
        %v2307 = vsel %vm797, %v2275, 0
        %v2308 = vsel %vm798, %v2276, 0
        %v2309 = vsel %vm799, %v2277, 0
        %v2310 = vsel %vm800, %v2278, 0
        %v2311 = vsel %vm801, %v2279, 0
        %s2312 = scalar_lea.vmem %s1, 6
        %v2313 = vld [vmem:[%s2312] sm:$0x3]
        %v2346 = vunpack.c.l.b16 %v2280
        %v2347 = vunpack.c.l.b16 %v2281
        %v2348 = vunpack.c.l.b16 %v2282
        %v2349 = vunpack.c.l.b16 %v2283
        %v2350 = vunpack.c.l.b16 %v2284
        %v2351 = vunpack.c.l.b16 %v2285
        %v2352 = vunpack.c.l.b16 %v2286
        %v2353 = vunpack.c.l.b16 %v2287
        %v2354 = vunpack.c.l.b16 %v2288
        %v2355 = vunpack.c.l.b16 %v2289
        %v2356 = vunpack.c.l.b16 %v2290
        %v2357 = vunpack.c.l.b16 %v2291
        %v2358 = vunpack.c.l.b16 %v2292
        %v2359 = vunpack.c.l.b16 %v2293
        %v2360 = vunpack.c.l.b16 %v2294
        %v2361 = vunpack.c.l.b16 %v2295
        %v2362 = vunpack.c.l.b16 %v2296
        %v2363 = vunpack.c.l.b16 %v2297
        %v2364 = vunpack.c.l.b16 %v2298
        %v2365 = vunpack.c.l.b16 %v2299
        %v2366 = vunpack.c.l.b16 %v2300
        %v2367 = vunpack.c.l.b16 %v2301
        %v2368 = vunpack.c.l.b16 %v2302
        %v2369 = vunpack.c.l.b16 %v2303
        %v2370 = vunpack.c.l.b16 %v2304
        %v2371 = vunpack.c.l.b16 %v2305
        %v2372 = vunpack.c.l.b16 %v2306
        %v2373 = vunpack.c.l.b16 %v2307
        %v2374 = vunpack.c.l.b16 %v2308
        %v2375 = vunpack.c.l.b16 %v2309
        %v2376 = vunpack.c.l.b16 %v2310
        %v2377 = vunpack.c.l.b16 %v2311
        %v2378 = vpack.c.b16 %v2347, %v2346
        %v2379 = vpack.c.b16 %v2349, %v2348
        %v2380 = vpack.c.b16 %v2351, %v2350
        %v2381 = vpack.c.b16 %v2353, %v2352
        %v2382 = vpack.c.b16 %v2355, %v2354
        %v2383 = vpack.c.b16 %v2357, %v2356
        %v2384 = vpack.c.b16 %v2359, %v2358
        %v2385 = vpack.c.b16 %v2361, %v2360
        %v2386 = vpack.c.b16 %v2363, %v2362
        %v2387 = vpack.c.b16 %v2365, %v2364
        %v2388 = vpack.c.b16 %v2367, %v2366
        %v2389 = vpack.c.b16 %v2369, %v2368
        %v2390 = vpack.c.b16 %v2371, %v2370
        %v2391 = vpack.c.b16 %v2373, %v2372
        %v2392 = vpack.c.b16 %v2375, %v2374
        %v2393 = vpack.c.b16 %v2377, %v2376
        %v2395 = vsel %vm1054, %v2378, 0
        %v2398 = vsel %vm1054, %v2379, 0
        %v2401 = vsel %vm1054, %v2380, 0
        %v2404 = vsel %vm1054, %v2381, 0
        %v2407 = vsel %vm1054, %v2382, 0
        %v2410 = vsel %vm1054, %v2383, 0
        %v2413 = vsel %vm1054, %v2384, 0
        %v2416 = vsel %vm1054, %v2385, 0
        %v2419 = vsel %vm1054, %v2386, 0
        %v2422 = vsel %vm1054, %v2387, 0
        %v2425 = vsel %vm1054, %v2388, 0
        %v2428 = vsel %vm1054, %v2389, 0
        %v2431 = vsel %vm1054, %v2390, 0
        %v2434 = vsel %vm1054, %v2391, 0
        %v2437 = vsel %vm1054, %v2392, 0
        %v2440 = vsel %vm1054, %v2393, 0
        %v2443 = vsel %vm1103, %v2313, 0
        %2445 = vmatprep.subr.bf16.mxu0 0
        %2446 = vmatpush1.bf16.msra.mxu0 0
        %2447 = vmatprep.subr.bf16.mxu0 0
        %2448 = vmatpush1.bf16.msra.mxu0 0
        %2449 = vmatprep.subr.bf16.mxu0 0
        %2450 = vmatpush1.bf16.msra.mxu0 0
        %2451 = vmatprep.subr.bf16.mxu0 0
        %2452 = vmatpush1.bf16.msra.mxu0 0
        %2453 = vmatprep.subr.bf16.mxu0 0
        %2454 = vmatpush1.bf16.msra.mxu0 0
        %2455 = vmatprep.subr.bf16.mxu0 0
        %2456 = vmatpush1.bf16.msra.mxu0 0
        %2457 = vmatprep.subr.bf16.mxu0 0
        %2458 = vmatpush1.bf16.msra.mxu0 0
        %2459 = vmatprep.subr.bf16.mxu0 0
        %2460 = vmatpush1.bf16.msra.mxu0 %v2443
        %2461 = vmatprep.subr.bf16.mxu0 0
        %2462 = vmatpush2.bf16.msra.mxu0 0
        %2463 = vmatprep.subr.bf16.mxu0 0
        %2464 = vmatpush2.bf16.msra.mxu0 0
        %2465 = vmatprep.subr.bf16.mxu0 0
        %2466 = vmatpush2.bf16.msra.mxu0 0
        %2467 = vmatprep.subr.bf16.mxu0 0
        %2468 = vmatpush2.bf16.msra.mxu0 0
        %2469 = vmatprep.subr.bf16.mxu0 0
        %2470 = vmatpush2.bf16.msra.mxu0 0
        %2471 = vmatprep.subr.bf16.mxu0 0
        %2472 = vmatpush2.bf16.msra.mxu0 0
        %2473 = vmatprep.subr.bf16.mxu0 0
        %2474 = vmatpush2.bf16.msra.mxu0 0
        %2475 = vmatprep.subr.bf16.mxu0 0
        %2476 = vmatpush2.bf16.msra.mxu0 0
        %2477 = vmatprep.mubr.bf16.mxu0 0
        %2478 = vmatmul.mubr.bf16.gmra.mxu0 %v2395
        %v2479 = vpop.f32.mrf.mxu0
        %v2480 = vadd.f32 0.0, %v2479
        %v2481 = vpop.f32.mrf.mxu0
        %v2482 = vpop.f32.mrf.mxu0
        %v2483 = vadd.f32 0.0, %v2482
        %v2484 = vpop.f32.mrf.mxu0
        %2485 = vmatprep.mubr.bf16.mxu0 0
        %2486 = vmatmul.mubr.bf16.gmra.mxu0 %v2398
        %v2487 = vpop.f32.mrf.mxu0
        %v2488 = vadd.f32 0.0, %v2487
        %v2489 = vpop.f32.mrf.mxu0
        %v2490 = vpop.f32.mrf.mxu0
        %v2491 = vadd.f32 0.0, %v2490
        %v2492 = vpop.f32.mrf.mxu0
        %2493 = vmatprep.mubr.bf16.mxu0 0
        %2494 = vmatmul.mubr.bf16.gmra.mxu0 %v2401
        %v2495 = vpop.f32.mrf.mxu0
        %v2496 = vadd.f32 0.0, %v2495
        %v2497 = vpop.f32.mrf.mxu0
        %v2498 = vpop.f32.mrf.mxu0
        %v2499 = vadd.f32 0.0, %v2498
        %v2500 = vpop.f32.mrf.mxu0
        %2501 = vmatprep.mubr.bf16.mxu0 0
        %2502 = vmatmul.mubr.bf16.gmra.mxu0 %v2404
        %v2503 = vpop.f32.mrf.mxu0
        %v2504 = vadd.f32 0.0, %v2503
        %v2505 = vpop.f32.mrf.mxu0
        %v2506 = vpop.f32.mrf.mxu0
        %v2507 = vadd.f32 0.0, %v2506
        %v2508 = vpop.f32.mrf.mxu0
        %2509 = vmatprep.mubr.bf16.mxu0 0
        %2510 = vmatmul.mubr.bf16.gmra.mxu0 %v2407
        %v2511 = vpop.f32.mrf.mxu0
        %v2512 = vadd.f32 0.0, %v2511
        %v2513 = vpop.f32.mrf.mxu0
        %v2514 = vpop.f32.mrf.mxu0
        %v2515 = vadd.f32 0.0, %v2514
        %v2516 = vpop.f32.mrf.mxu0
        %2517 = vmatprep.mubr.bf16.mxu0 0
        %2518 = vmatmul.mubr.bf16.gmra.mxu0 %v2410
        %v2519 = vpop.f32.mrf.mxu0
        %v2520 = vadd.f32 0.0, %v2519
        %v2521 = vpop.f32.mrf.mxu0
        %v2522 = vpop.f32.mrf.mxu0
        %v2523 = vadd.f32 0.0, %v2522
        %v2524 = vpop.f32.mrf.mxu0
        %2525 = vmatprep.mubr.bf16.mxu0 0
        %2526 = vmatmul.mubr.bf16.gmra.mxu0 %v2413
        %v2527 = vpop.f32.mrf.mxu0
        %v2528 = vadd.f32 0.0, %v2527
        %v2529 = vpop.f32.mrf.mxu0
        %v2530 = vpop.f32.mrf.mxu0
        %v2531 = vadd.f32 0.0, %v2530
        %v2532 = vpop.f32.mrf.mxu0
        %2533 = vmatprep.mubr.bf16.mxu0 0
        %2534 = vmatmul.mubr.bf16.gmra.mxu0 %v2416
        %v2535 = vpop.f32.mrf.mxu0
        %v2536 = vadd.f32 0.0, %v2535
        %v2537 = vpop.f32.mrf.mxu0
        %v2538 = vpop.f32.mrf.mxu0
        %v2539 = vadd.f32 0.0, %v2538
        %v2540 = vpop.f32.mrf.mxu0
        %2541 = vmatprep.mubr.bf16.mxu0 0
        %2542 = vmatmul.mubr.bf16.gmra.mxu0 %v2419
        %v2543 = vpop.f32.mrf.mxu0
        %v2544 = vadd.f32 0.0, %v2543
        %v2545 = vpop.f32.mrf.mxu0
        %v2546 = vpop.f32.mrf.mxu0
        %v2547 = vadd.f32 0.0, %v2546
        %v2548 = vpop.f32.mrf.mxu0
        %2549 = vmatprep.mubr.bf16.mxu0 0
        %2550 = vmatmul.mubr.bf16.gmra.mxu0 %v2422
        %v2551 = vpop.f32.mrf.mxu0
        %v2552 = vadd.f32 0.0, %v2551
        %v2553 = vpop.f32.mrf.mxu0
        %v2554 = vpop.f32.mrf.mxu0
        %v2555 = vadd.f32 0.0, %v2554
        %v2556 = vpop.f32.mrf.mxu0
        %2557 = vmatprep.mubr.bf16.mxu0 0
        %2558 = vmatmul.mubr.bf16.gmra.mxu0 %v2425
        %v2559 = vpop.f32.mrf.mxu0
        %v2560 = vadd.f32 0.0, %v2559
        %v2561 = vpop.f32.mrf.mxu0
        %v2562 = vpop.f32.mrf.mxu0
        %v2563 = vadd.f32 0.0, %v2562
        %v2564 = vpop.f32.mrf.mxu0
        %2565 = vmatprep.mubr.bf16.mxu0 0
        %2566 = vmatmul.mubr.bf16.gmra.mxu0 %v2428
        %v2567 = vpop.f32.mrf.mxu0
        %v2568 = vadd.f32 0.0, %v2567
        %v2569 = vpop.f32.mrf.mxu0
        %v2570 = vpop.f32.mrf.mxu0
        %v2571 = vadd.f32 0.0, %v2570
        %v2572 = vpop.f32.mrf.mxu0
        %2573 = vmatprep.mubr.bf16.mxu0 0
        %2574 = vmatmul.mubr.bf16.gmra.mxu0 %v2431
        %v2575 = vpop.f32.mrf.mxu0
        %v2576 = vadd.f32 0.0, %v2575
        %v2577 = vpop.f32.mrf.mxu0
        %v2578 = vpop.f32.mrf.mxu0
        %v2579 = vadd.f32 0.0, %v2578
        %v2580 = vpop.f32.mrf.mxu0
        %2581 = vmatprep.mubr.bf16.mxu0 0
        %2582 = vmatmul.mubr.bf16.gmra.mxu0 %v2434
        %v2583 = vpop.f32.mrf.mxu0
        %v2584 = vadd.f32 0.0, %v2583
        %v2585 = vpop.f32.mrf.mxu0
        %v2586 = vpop.f32.mrf.mxu0
        %v2587 = vadd.f32 0.0, %v2586
        %v2588 = vpop.f32.mrf.mxu0
        %2589 = vmatprep.mubr.bf16.mxu0 0
        %2590 = vmatmul.mubr.bf16.gmra.mxu0 %v2437
        %v2591 = vpop.f32.mrf.mxu0
        %v2592 = vadd.f32 0.0, %v2591
        %v2593 = vpop.f32.mrf.mxu0
        %v2594 = vpop.f32.mrf.mxu0
        %v2595 = vadd.f32 0.0, %v2594
        %v2596 = vpop.f32.mrf.mxu0
        %2597 = vmatprep.mubr.bf16.mxu0 0
        %2598 = vmatmul.mubr.bf16.gmra.mxu0 %v2440
        %v2599 = vpop.f32.mrf.mxu0
        %v2600 = vadd.f32 0.0, %v2599
        %v2601 = vpop.f32.mrf.mxu0
        %v2602 = vpop.f32.mrf.mxu0
        %v2603 = vadd.f32 0.0, %v2602
        %v2604 = vpop.f32.mrf.mxu0
        %2605 = vdwg.mxu0
        %v2606 = vadd.f32 %v2216, %v2480
        %v2607 = vadd.f32 %v2217, %v2483
        %v2608 = vadd.f32 %v2218, %v2488
        %v2609 = vadd.f32 %v2219, %v2491
        %v2610 = vadd.f32 %v2220, %v2496
        %v2611 = vadd.f32 %v2221, %v2499
        %v2612 = vadd.f32 %v2222, %v2504
        %v2613 = vadd.f32 %v2223, %v2507
        %v2614 = vadd.f32 %v2224, %v2512
        %v2615 = vadd.f32 %v2225, %v2515
        %v2616 = vadd.f32 %v2226, %v2520
        %v2617 = vadd.f32 %v2227, %v2523
        %v2618 = vadd.f32 %v2228, %v2528
        %v2619 = vadd.f32 %v2229, %v2531
        %v2620 = vadd.f32 %v2230, %v2536
        %v2621 = vadd.f32 %v2231, %v2539
        %v2622 = vadd.f32 %v2232, %v2544
        %v2623 = vadd.f32 %v2233, %v2547
        %v2624 = vadd.f32 %v2234, %v2552
        %v2625 = vadd.f32 %v2235, %v2555
        %v2626 = vadd.f32 %v2236, %v2560
        %v2627 = vadd.f32 %v2237, %v2563
        %v2628 = vadd.f32 %v2238, %v2568
        %v2629 = vadd.f32 %v2239, %v2571
        %v2630 = vadd.f32 %v2240, %v2576
        %v2631 = vadd.f32 %v2241, %v2579
        %v2632 = vadd.f32 %v2242, %v2584
        %v2633 = vadd.f32 %v2243, %v2587
        %v2634 = vadd.f32 %v2244, %v2592
        %v2635 = vadd.f32 %v2245, %v2595
        %v2636 = vadd.f32 %v2246, %v2600
        %v2637 = vadd.f32 %v2247, %v2603
        %v2638 = vld [vmem:[%s221 + $0x8] sm:$0xf]
        %v2639 = vld [vmem:[%s221 + $0xc] sm:$0xf]
        %v2640 = vld [vmem:[%s221 + $0x10] sm:$0xf]
        %v2641 = vld [vmem:[%s221 + $0x14] sm:$0xf]
        %v2642 = vld [vmem:[%s221 + $0x18] sm:$0xf]
        %v2643 = vld [vmem:[%s221 + $0x1c] sm:$0xf]
        %v2644 = vld [vmem:[%s221 + $0x20] sm:$0xf]
        %v2645 = vld [vmem:[%s221 + $0x24] sm:$0xf]
        %v2646 = vld [vmem:[%s221 + $0x28] sm:$0xf]
        %v2647 = vld [vmem:[%s221 + $0x2c] sm:$0xf]
        %v2648 = vld [vmem:[%s221 + $0x30] sm:$0xf]
        %v2649 = vld [vmem:[%s221 + $0x34] sm:$0xf]
        %v2650 = vld [vmem:[%s221 + $0x38] sm:$0xf]
        %v2651 = vld [vmem:[%s221 + $0x3c] sm:$0xf]
        %v2652 = vld [vmem:[%s221 + $0x40] sm:$0xf]
        %v2653 = vld [vmem:[%s221 + $0x44] sm:$0xf]
        %v2654 = vld [vmem:[%s221 + $0x48] sm:$0xf]
        %v2655 = vld [vmem:[%s221 + $0x4c] sm:$0xf]
        %v2656 = vld [vmem:[%s221 + $0x50] sm:$0xf]
        %v2657 = vld [vmem:[%s221 + $0x54] sm:$0xf]
        %v2658 = vld [vmem:[%s221 + $0x58] sm:$0xf]
        %v2659 = vld [vmem:[%s221 + $0x5c] sm:$0xf]
        %v2660 = vld [vmem:[%s221 + $0x60] sm:$0xf]
        %v2661 = vld [vmem:[%s221 + $0x64] sm:$0xf]
        %v2662 = vld [vmem:[%s221 + $0x68] sm:$0xf]
        %v2663 = vld [vmem:[%s221 + $0x6c] sm:$0xf]
        %v2664 = vld [vmem:[%s221 + $0x70] sm:$0xf]
        %v2665 = vld [vmem:[%s221 + $0x74] sm:$0xf]
        %v2666 = vld [vmem:[%s221 + $0x78] sm:$0xf]
        %v2667 = vld [vmem:[%s221 + $0x7c] sm:$0xf]
        %v2668 = vld [vmem:[%s221 + $0x80] sm:$0xf]
        %v2669 = vld [vmem:[%s221 + $0x84] sm:$0xf]
        %v2670 = vld [vmem:[%s221 + $0x88] sm:$0x1]
        %s2671 = scalar_lea.vmem %s1, 8
        %v2672 = vld [vmem:[%s2671] sm:$0x3]
        %v2706 = vunpack.c.l.b16 %v2638
        %v2707 = vunpack.c.l.b16 %v2639
        %v2708 = vunpack.c.l.b16 %v2640
        %v2709 = vunpack.c.l.b16 %v2641
        %v2710 = vunpack.c.l.b16 %v2642
        %v2711 = vunpack.c.l.b16 %v2643
        %v2712 = vunpack.c.l.b16 %v2644
        %v2713 = vunpack.c.l.b16 %v2645
        %v2714 = vunpack.c.l.b16 %v2646
        %v2715 = vunpack.c.l.b16 %v2647
        %v2716 = vunpack.c.l.b16 %v2648
        %v2717 = vunpack.c.l.b16 %v2649
        %v2718 = vunpack.c.l.b16 %v2650
        %v2719 = vunpack.c.l.b16 %v2651
        %v2720 = vunpack.c.l.b16 %v2652
        %v2721 = vunpack.c.l.b16 %v2653
        %v2722 = vunpack.c.l.b16 %v2654
        %v2723 = vunpack.c.l.b16 %v2655
        %v2724 = vunpack.c.l.b16 %v2656
        %v2725 = vunpack.c.l.b16 %v2657
        %v2726 = vunpack.c.l.b16 %v2658
        %v2727 = vunpack.c.l.b16 %v2659
        %v2728 = vunpack.c.l.b16 %v2660
        %v2729 = vunpack.c.l.b16 %v2661
        %v2730 = vunpack.c.l.b16 %v2662
        %v2731 = vunpack.c.l.b16 %v2663
        %v2732 = vunpack.c.l.b16 %v2664
        %v2733 = vunpack.c.l.b16 %v2665
        %v2734 = vunpack.c.l.b16 %v2666
        %v2735 = vunpack.c.l.b16 %v2667
        %v2736 = vunpack.c.l.b16 %v2668
        %v2737 = vunpack.c.l.b16 %v2669
        %v2738 = vunpack.c.l.b16 %v2670
        %v2739 = vpack.c.b16 %v2707, %v2706
        %v2740 = vpack.c.b16 %v2709, %v2708
        %v2741 = vpack.c.b16 %v2711, %v2710
        %v2742 = vpack.c.b16 %v2713, %v2712
        %v2743 = vpack.c.b16 %v2715, %v2714
        %v2744 = vpack.c.b16 %v2717, %v2716
        %v2745 = vpack.c.b16 %v2719, %v2718
        %v2746 = vpack.c.b16 %v2721, %v2720
        %v2747 = vpack.c.b16 %v2723, %v2722
        %v2748 = vpack.c.b16 %v2725, %v2724
        %v2749 = vpack.c.b16 %v2727, %v2726
        %v2750 = vpack.c.b16 %v2729, %v2728
        %v2751 = vpack.c.b16 %v2731, %v2730
        %v2752 = vpack.c.b16 %v2733, %v2732
        %v2753 = vpack.c.b16 %v2735, %v2734
        %v2754 = vpack.c.b16 %v2737, %v2736
        %v2755 = vpack.c.b16 %v2738, %v2738
        %v2757 = vshrl.u32 %v2739, 16
        %v2759 = vshll.u32 %v2739, 16
        %v2761 = vrot.slane %v2759, 1
        %v2762 = vor.u32 %v2757, %v2761
        %v2764 = vshll.u32 %v2740, 16
        %v2766 = vrot.slane %v2764, 1
        %v2767 = vsel %vm921, %v2762, %v2766
        %v2768 = vshrl.u32 %v2740, 16
        %v2770 = vor.u32 %v2768, %v2766
        %v2772 = vshll.u32 %v2741, 16
        %v2774 = vrot.slane %v2772, 1
        %v2775 = vsel %vm921, %v2770, %v2774
        %v2776 = vshrl.u32 %v2741, 16
        %v2778 = vor.u32 %v2776, %v2774
        %v2780 = vshll.u32 %v2742, 16
        %v2782 = vrot.slane %v2780, 1
        %v2783 = vsel %vm921, %v2778, %v2782
        %v2784 = vshrl.u32 %v2742, 16
        %v2786 = vor.u32 %v2784, %v2782
        %v2788 = vshll.u32 %v2743, 16
        %v2790 = vrot.slane %v2788, 1
        %v2791 = vsel %vm921, %v2786, %v2790
        %v2792 = vshrl.u32 %v2743, 16
        %v2794 = vor.u32 %v2792, %v2790
        %v2796 = vshll.u32 %v2744, 16
        %v2798 = vrot.slane %v2796, 1
        %v2799 = vsel %vm921, %v2794, %v2798
        %v2800 = vshrl.u32 %v2744, 16
        %v2802 = vor.u32 %v2800, %v2798
        %v2804 = vshll.u32 %v2745, 16
        %v2806 = vrot.slane %v2804, 1
        %v2807 = vsel %vm921, %v2802, %v2806
        %v2808 = vshrl.u32 %v2745, 16
        %v2810 = vor.u32 %v2808, %v2806
        %v2812 = vshll.u32 %v2746, 16
        %v2814 = vrot.slane %v2812, 1
        %v2815 = vsel %vm921, %v2810, %v2814
        %v2816 = vshrl.u32 %v2746, 16
        %v2818 = vor.u32 %v2816, %v2814
        %v2820 = vshll.u32 %v2747, 16
        %v2822 = vrot.slane %v2820, 1
        %v2823 = vsel %vm921, %v2818, %v2822
        %v2824 = vshrl.u32 %v2747, 16
        %v2826 = vor.u32 %v2824, %v2822
        %v2828 = vshll.u32 %v2748, 16
        %v2830 = vrot.slane %v2828, 1
        %v2831 = vsel %vm921, %v2826, %v2830
        %v2832 = vshrl.u32 %v2748, 16
        %v2834 = vor.u32 %v2832, %v2830
        %v2836 = vshll.u32 %v2749, 16
        %v2838 = vrot.slane %v2836, 1
        %v2839 = vsel %vm921, %v2834, %v2838
        %v2840 = vshrl.u32 %v2749, 16
        %v2842 = vor.u32 %v2840, %v2838
        %v2844 = vshll.u32 %v2750, 16
        %v2846 = vrot.slane %v2844, 1
        %v2847 = vsel %vm921, %v2842, %v2846
        %v2848 = vshrl.u32 %v2750, 16
        %v2850 = vor.u32 %v2848, %v2846
        %v2852 = vshll.u32 %v2751, 16
        %v2854 = vrot.slane %v2852, 1
        %v2855 = vsel %vm921, %v2850, %v2854
        %v2856 = vshrl.u32 %v2751, 16
        %v2858 = vor.u32 %v2856, %v2854
        %v2860 = vshll.u32 %v2752, 16
        %v2862 = vrot.slane %v2860, 1
        %v2863 = vsel %vm921, %v2858, %v2862
        %v2864 = vshrl.u32 %v2752, 16
        %v2866 = vor.u32 %v2864, %v2862
        %v2868 = vshll.u32 %v2753, 16
        %v2870 = vrot.slane %v2868, 1
        %v2871 = vsel %vm921, %v2866, %v2870
        %v2872 = vshrl.u32 %v2753, 16
        %v2874 = vor.u32 %v2872, %v2870
        %v2876 = vshll.u32 %v2754, 16
        %v2878 = vrot.slane %v2876, 1
        %v2879 = vsel %vm921, %v2874, %v2878
        %v2880 = vshrl.u32 %v2754, 16
        %v2882 = vor.u32 %v2880, %v2878
        %v2884 = vshll.u32 %v2755, 16
        %v2886 = vrot.slane %v2884, 1
        %v2887 = vsel %vm921, %v2882, %v2886
        %v2889 = vsel %vm1054, %v2767, 0
        %v2892 = vsel %vm1054, %v2775, 0
        %v2895 = vsel %vm1054, %v2783, 0
        %v2898 = vsel %vm1054, %v2791, 0
        %v2901 = vsel %vm1054, %v2799, 0
        %v2904 = vsel %vm1054, %v2807, 0
        %v2907 = vsel %vm1054, %v2815, 0
        %v2910 = vsel %vm1054, %v2823, 0
        %v2913 = vsel %vm1054, %v2831, 0
        %v2916 = vsel %vm1054, %v2839, 0
        %v2919 = vsel %vm1054, %v2847, 0
        %v2922 = vsel %vm1054, %v2855, 0
        %v2925 = vsel %vm1054, %v2863, 0
        %v2928 = vsel %vm1054, %v2871, 0
        %v2931 = vsel %vm1054, %v2879, 0
        %v2934 = vsel %vm1054, %v2887, 0
        %v2937 = vsel %vm1103, %v2672, 0
        %2939 = vmatprep.subr.bf16.mxu0 0
        %2940 = vmatpush1.bf16.msra.mxu0 0
        %2941 = vmatprep.subr.bf16.mxu0 0
        %2942 = vmatpush1.bf16.msra.mxu0 0
        %2943 = vmatprep.subr.bf16.mxu0 0
        %2944 = vmatpush1.bf16.msra.mxu0 0
        %2945 = vmatprep.subr.bf16.mxu0 0
        %2946 = vmatpush1.bf16.msra.mxu0 0
        %2947 = vmatprep.subr.bf16.mxu0 0
        %2948 = vmatpush1.bf16.msra.mxu0 0
        %2949 = vmatprep.subr.bf16.mxu0 0
        %2950 = vmatpush1.bf16.msra.mxu0 0
        %2951 = vmatprep.subr.bf16.mxu0 0
        %2952 = vmatpush1.bf16.msra.mxu0 0
        %2953 = vmatprep.subr.bf16.mxu0 0
        %2954 = vmatpush1.bf16.msra.mxu0 %v2937
        %2955 = vmatprep.subr.bf16.mxu0 0
        %2956 = vmatpush2.bf16.msra.mxu0 0
        %2957 = vmatprep.subr.bf16.mxu0 0
        %2958 = vmatpush2.bf16.msra.mxu0 0
        %2959 = vmatprep.subr.bf16.mxu0 0
        %2960 = vmatpush2.bf16.msra.mxu0 0
        %2961 = vmatprep.subr.bf16.mxu0 0
        %2962 = vmatpush2.bf16.msra.mxu0 0
        %2963 = vmatprep.subr.bf16.mxu0 0
        %2964 = vmatpush2.bf16.msra.mxu0 0
        %2965 = vmatprep.subr.bf16.mxu0 0
        %2966 = vmatpush2.bf16.msra.mxu0 0
        %2967 = vmatprep.subr.bf16.mxu0 0
        %2968 = vmatpush2.bf16.msra.mxu0 0
        %2969 = vmatprep.subr.bf16.mxu0 0
        %2970 = vmatpush2.bf16.msra.mxu0 0
        %2971 = vmatprep.mubr.bf16.mxu0 0
        %2972 = vmatmul.mubr.bf16.gmra.mxu0 %v2889
        %v2973 = vpop.f32.mrf.mxu0
        %v2974 = vadd.f32 0.0, %v2973
        %v2975 = vpop.f32.mrf.mxu0
        %v2976 = vpop.f32.mrf.mxu0
        %v2977 = vadd.f32 0.0, %v2976
        %v2978 = vpop.f32.mrf.mxu0
        %2979 = vmatprep.mubr.bf16.mxu0 0
        %2980 = vmatmul.mubr.bf16.gmra.mxu0 %v2892
        %v2981 = vpop.f32.mrf.mxu0
        %v2982 = vadd.f32 0.0, %v2981
        %v2983 = vpop.f32.mrf.mxu0
        %v2984 = vpop.f32.mrf.mxu0
        %v2985 = vadd.f32 0.0, %v2984
        %v2986 = vpop.f32.mrf.mxu0
        %2987 = vmatprep.mubr.bf16.mxu0 0
        %2988 = vmatmul.mubr.bf16.gmra.mxu0 %v2895
        %v2989 = vpop.f32.mrf.mxu0
        %v2990 = vadd.f32 0.0, %v2989
        %v2991 = vpop.f32.mrf.mxu0
        %v2992 = vpop.f32.mrf.mxu0
        %v2993 = vadd.f32 0.0, %v2992
        %v2994 = vpop.f32.mrf.mxu0
        %2995 = vmatprep.mubr.bf16.mxu0 0
        %2996 = vmatmul.mubr.bf16.gmra.mxu0 %v2898
        %v2997 = vpop.f32.mrf.mxu0
        %v2998 = vadd.f32 0.0, %v2997
        %v2999 = vpop.f32.mrf.mxu0
        %v3000 = vpop.f32.mrf.mxu0
        %v3001 = vadd.f32 0.0, %v3000
        %v3002 = vpop.f32.mrf.mxu0
        %3003 = vmatprep.mubr.bf16.mxu0 0
        %3004 = vmatmul.mubr.bf16.gmra.mxu0 %v2901
        %v3005 = vpop.f32.mrf.mxu0
        %v3006 = vadd.f32 0.0, %v3005
        %v3007 = vpop.f32.mrf.mxu0
        %v3008 = vpop.f32.mrf.mxu0
        %v3009 = vadd.f32 0.0, %v3008
        %v3010 = vpop.f32.mrf.mxu0
        %3011 = vmatprep.mubr.bf16.mxu0 0
        %3012 = vmatmul.mubr.bf16.gmra.mxu0 %v2904
        %v3013 = vpop.f32.mrf.mxu0
        %v3014 = vadd.f32 0.0, %v3013
        %v3015 = vpop.f32.mrf.mxu0
        %v3016 = vpop.f32.mrf.mxu0
        %v3017 = vadd.f32 0.0, %v3016
        %v3018 = vpop.f32.mrf.mxu0
        %3019 = vmatprep.mubr.bf16.mxu0 0
        %3020 = vmatmul.mubr.bf16.gmra.mxu0 %v2907
        %v3021 = vpop.f32.mrf.mxu0
        %v3022 = vadd.f32 0.0, %v3021
        %v3023 = vpop.f32.mrf.mxu0
        %v3024 = vpop.f32.mrf.mxu0
        %v3025 = vadd.f32 0.0, %v3024
        %v3026 = vpop.f32.mrf.mxu0
        %3027 = vmatprep.mubr.bf16.mxu0 0
        %3028 = vmatmul.mubr.bf16.gmra.mxu0 %v2910
        %v3029 = vpop.f32.mrf.mxu0
        %v3030 = vadd.f32 0.0, %v3029
        %v3031 = vpop.f32.mrf.mxu0
        %v3032 = vpop.f32.mrf.mxu0
        %v3033 = vadd.f32 0.0, %v3032
        %v3034 = vpop.f32.mrf.mxu0
        %3035 = vmatprep.mubr.bf16.mxu0 0
        %3036 = vmatmul.mubr.bf16.gmra.mxu0 %v2913
        %v3037 = vpop.f32.mrf.mxu0
        %v3038 = vadd.f32 0.0, %v3037
        %v3039 = vpop.f32.mrf.mxu0
        %v3040 = vpop.f32.mrf.mxu0
        %v3041 = vadd.f32 0.0, %v3040
        %v3042 = vpop.f32.mrf.mxu0
        %3043 = vmatprep.mubr.bf16.mxu0 0
        %3044 = vmatmul.mubr.bf16.gmra.mxu0 %v2916
        %v3045 = vpop.f32.mrf.mxu0
        %v3046 = vadd.f32 0.0, %v3045
        %v3047 = vpop.f32.mrf.mxu0
        %v3048 = vpop.f32.mrf.mxu0
        %v3049 = vadd.f32 0.0, %v3048
        %v3050 = vpop.f32.mrf.mxu0
        %3051 = vmatprep.mubr.bf16.mxu0 0
        %3052 = vmatmul.mubr.bf16.gmra.mxu0 %v2919
        %v3053 = vpop.f32.mrf.mxu0
        %v3054 = vadd.f32 0.0, %v3053
        %v3055 = vpop.f32.mrf.mxu0
        %v3056 = vpop.f32.mrf.mxu0
        %v3057 = vadd.f32 0.0, %v3056
        %v3058 = vpop.f32.mrf.mxu0
        %3059 = vmatprep.mubr.bf16.mxu0 0
        %3060 = vmatmul.mubr.bf16.gmra.mxu0 %v2922
        %v3061 = vpop.f32.mrf.mxu0
        %v3062 = vadd.f32 0.0, %v3061
        %v3063 = vpop.f32.mrf.mxu0
        %v3064 = vpop.f32.mrf.mxu0
        %v3065 = vadd.f32 0.0, %v3064
        %v3066 = vpop.f32.mrf.mxu0
        %3067 = vmatprep.mubr.bf16.mxu0 0
        %3068 = vmatmul.mubr.bf16.gmra.mxu0 %v2925
        %v3069 = vpop.f32.mrf.mxu0
        %v3070 = vadd.f32 0.0, %v3069
        %v3071 = vpop.f32.mrf.mxu0
        %v3072 = vpop.f32.mrf.mxu0
        %v3073 = vadd.f32 0.0, %v3072
        %v3074 = vpop.f32.mrf.mxu0
        %3075 = vmatprep.mubr.bf16.mxu0 0
        %3076 = vmatmul.mubr.bf16.gmra.mxu0 %v2928
        %v3077 = vpop.f32.mrf.mxu0
        %v3078 = vadd.f32 0.0, %v3077
        %v3079 = vpop.f32.mrf.mxu0
        %v3080 = vpop.f32.mrf.mxu0
        %v3081 = vadd.f32 0.0, %v3080
        %v3082 = vpop.f32.mrf.mxu0
        %3083 = vmatprep.mubr.bf16.mxu0 0
        %3084 = vmatmul.mubr.bf16.gmra.mxu0 %v2931
        %v3085 = vpop.f32.mrf.mxu0
        %v3086 = vadd.f32 0.0, %v3085
        %v3087 = vpop.f32.mrf.mxu0
        %v3088 = vpop.f32.mrf.mxu0
        %v3089 = vadd.f32 0.0, %v3088
        %v3090 = vpop.f32.mrf.mxu0
        %3091 = vmatprep.mubr.bf16.mxu0 0
        %3092 = vmatmul.mubr.bf16.gmra.mxu0 %v2934
        %v3093 = vpop.f32.mrf.mxu0
        %v3094 = vadd.f32 0.0, %v3093
        %v3095 = vpop.f32.mrf.mxu0
        %v3096 = vpop.f32.mrf.mxu0
        %v3097 = vadd.f32 0.0, %v3096
        %v3098 = vpop.f32.mrf.mxu0
        %3099 = vdwg.mxu0
        %v3100 = vadd.f32 %v2606, %v2974
        %v3101 = vadd.f32 %v2607, %v2977
        %v3102 = vadd.f32 %v2608, %v2982
        %v3103 = vadd.f32 %v2609, %v2985
        %v3104 = vadd.f32 %v2610, %v2990
        %v3105 = vadd.f32 %v2611, %v2993
        %v3106 = vadd.f32 %v2612, %v2998
        %v3107 = vadd.f32 %v2613, %v3001
        %v3108 = vadd.f32 %v2614, %v3006
        %v3109 = vadd.f32 %v2615, %v3009
        %v3110 = vadd.f32 %v2616, %v3014
        %v3111 = vadd.f32 %v2617, %v3017
        %v3112 = vadd.f32 %v2618, %v3022
        %v3113 = vadd.f32 %v2619, %v3025
        %v3114 = vadd.f32 %v2620, %v3030
        %v3115 = vadd.f32 %v2621, %v3033
        %v3116 = vadd.f32 %v2622, %v3038
        %v3117 = vadd.f32 %v2623, %v3041
        %v3118 = vadd.f32 %v2624, %v3046
        %v3119 = vadd.f32 %v2625, %v3049
        %v3120 = vadd.f32 %v2626, %v3054
        %v3121 = vadd.f32 %v2627, %v3057
        %v3122 = vadd.f32 %v2628, %v3062
        %v3123 = vadd.f32 %v2629, %v3065
        %v3124 = vadd.f32 %v2630, %v3070
        %v3125 = vadd.f32 %v2631, %v3073
        %v3126 = vadd.f32 %v2632, %v3078
        %v3127 = vadd.f32 %v2633, %v3081
        %v3128 = vadd.f32 %v2634, %v3086
        %v3129 = vadd.f32 %v2635, %v3089
        %v3130 = vadd.f32 %v2636, %v3094
        %v3131 = vadd.f32 %v2637, %v3097
        %v3132 = vld [vmem:[%s221 + $0x8] sm:$0xe]
        %v3133 = vsel %vm1819, %v3132, 0
        %v3134 = vsel %vm1820, %v2639, 0
        %v3135 = vsel %vm1821, %v2640, 0
        %v3136 = vsel %vm1822, %v2641, 0
        %v3137 = vsel %vm1823, %v2642, 0
        %v3138 = vsel %vm1824, %v2643, 0
        %v3139 = vsel %vm1825, %v2644, 0
        %v3140 = vsel %vm1826, %v2645, 0
        %v3141 = vsel %vm1827, %v2646, 0
        %v3142 = vsel %vm1828, %v2647, 0
        %v3143 = vsel %vm1829, %v2648, 0
        %v3144 = vsel %vm1830, %v2649, 0
        %v3145 = vsel %vm1831, %v2650, 0
        %v3146 = vsel %vm1832, %v2651, 0
        %v3147 = vsel %vm1833, %v2652, 0
        %v3148 = vsel %vm1834, %v2653, 0
        %v3149 = vsel %vm1835, %v2654, 0
        %v3150 = vsel %vm1836, %v2655, 0
        %v3151 = vsel %vm1837, %v2656, 0
        %v3152 = vsel %vm1838, %v2657, 0
        %v3153 = vsel %vm1839, %v2658, 0
        %v3154 = vsel %vm1840, %v2659, 0
        %v3155 = vsel %vm1841, %v2660, 0
        %v3156 = vsel %vm1842, %v2661, 0
        %v3157 = vsel %vm1843, %v2662, 0
        %v3158 = vsel %vm1844, %v2663, 0
        %v3159 = vsel %vm1845, %v2664, 0
        %v3160 = vsel %vm1846, %v2665, 0
        %v3161 = vsel %vm1847, %v2666, 0
        %v3162 = vsel %vm1848, %v2667, 0
        %v3163 = vsel %vm1849, %v2668, 0
        %v3164 = vsel %vm1850, %v2669, 0
        %v3165 = vsel %vm1851, %v2670, 0
        %s3166 = scalar_lea.vmem %s1, 10
        %v3167 = vld [vmem:[%s3166] sm:$0x3]
        %v3201 = vunpack.c.l.b16 %v3133
        %v3202 = vunpack.c.l.b16 %v3134
        %v3203 = vunpack.c.l.b16 %v3135
        %v3204 = vunpack.c.l.b16 %v3136
        %v3205 = vunpack.c.l.b16 %v3137
        %v3206 = vunpack.c.l.b16 %v3138
        %v3207 = vunpack.c.l.b16 %v3139
        %v3208 = vunpack.c.l.b16 %v3140
        %v3209 = vunpack.c.l.b16 %v3141
        %v3210 = vunpack.c.l.b16 %v3142
        %v3211 = vunpack.c.l.b16 %v3143
        %v3212 = vunpack.c.l.b16 %v3144
        %v3213 = vunpack.c.l.b16 %v3145
        %v3214 = vunpack.c.l.b16 %v3146
        %v3215 = vunpack.c.l.b16 %v3147
        %v3216 = vunpack.c.l.b16 %v3148
        %v3217 = vunpack.c.l.b16 %v3149
        %v3218 = vunpack.c.l.b16 %v3150
        %v3219 = vunpack.c.l.b16 %v3151
        %v3220 = vunpack.c.l.b16 %v3152
        %v3221 = vunpack.c.l.b16 %v3153
        %v3222 = vunpack.c.l.b16 %v3154
        %v3223 = vunpack.c.l.b16 %v3155
        %v3224 = vunpack.c.l.b16 %v3156
        %v3225 = vunpack.c.l.b16 %v3157
        %v3226 = vunpack.c.l.b16 %v3158
        %v3227 = vunpack.c.l.b16 %v3159
        %v3228 = vunpack.c.l.b16 %v3160
        %v3229 = vunpack.c.l.b16 %v3161
        %v3230 = vunpack.c.l.b16 %v3162
        %v3231 = vunpack.c.l.b16 %v3163
        %v3232 = vunpack.c.l.b16 %v3164
        %v3233 = vunpack.c.l.b16 %v3165
        %v3234 = vpack.c.b16 %v3202, %v3201
        %v3235 = vpack.c.b16 %v3204, %v3203
        %v3236 = vpack.c.b16 %v3206, %v3205
        %v3237 = vpack.c.b16 %v3208, %v3207
        %v3238 = vpack.c.b16 %v3210, %v3209
        %v3239 = vpack.c.b16 %v3212, %v3211
        %v3240 = vpack.c.b16 %v3214, %v3213
        %v3241 = vpack.c.b16 %v3216, %v3215
        %v3242 = vpack.c.b16 %v3218, %v3217
        %v3243 = vpack.c.b16 %v3220, %v3219
        %v3244 = vpack.c.b16 %v3222, %v3221
        %v3245 = vpack.c.b16 %v3224, %v3223
        %v3246 = vpack.c.b16 %v3226, %v3225
        %v3247 = vpack.c.b16 %v3228, %v3227
        %v3248 = vpack.c.b16 %v3230, %v3229
        %v3249 = vpack.c.b16 %v3232, %v3231
        %v3250 = vpack.c.b16 %v3233, %v3233
        %v3251 = vrot.slane %v3234, 1
        %v3252 = vrot.slane %v3235, 1
        %v3253 = vsel %vm1970, %v3251, %v3252
        %v3254 = vrot.slane %v3236, 1
        %v3255 = vsel %vm1970, %v3252, %v3254
        %v3256 = vrot.slane %v3237, 1
        %v3257 = vsel %vm1970, %v3254, %v3256
        %v3258 = vrot.slane %v3238, 1
        %v3259 = vsel %vm1970, %v3256, %v3258
        %v3260 = vrot.slane %v3239, 1
        %v3261 = vsel %vm1970, %v3258, %v3260
        %v3262 = vrot.slane %v3240, 1
        %v3263 = vsel %vm1970, %v3260, %v3262
        %v3264 = vrot.slane %v3241, 1
        %v3265 = vsel %vm1970, %v3262, %v3264
        %v3266 = vrot.slane %v3242, 1
        %v3267 = vsel %vm1970, %v3264, %v3266
        %v3268 = vrot.slane %v3243, 1
        %v3269 = vsel %vm1970, %v3266, %v3268
        %v3270 = vrot.slane %v3244, 1
        %v3271 = vsel %vm1970, %v3268, %v3270
        %v3272 = vrot.slane %v3245, 1
        %v3273 = vsel %vm1970, %v3270, %v3272
        %v3274 = vrot.slane %v3246, 1
        %v3275 = vsel %vm1970, %v3272, %v3274
        %v3276 = vrot.slane %v3247, 1
        %v3277 = vsel %vm1970, %v3274, %v3276
        %v3278 = vrot.slane %v3248, 1
        %v3279 = vsel %vm1970, %v3276, %v3278
        %v3280 = vrot.slane %v3249, 1
        %v3281 = vsel %vm1970, %v3278, %v3280
        %v3282 = vrot.slane %v3250, 1
        %v3283 = vsel %vm1970, %v3280, %v3282
        %v3285 = vsel %vm1054, %v3253, 0
        %v3288 = vsel %vm1054, %v3255, 0
        %v3291 = vsel %vm1054, %v3257, 0
        %v3294 = vsel %vm1054, %v3259, 0
        %v3297 = vsel %vm1054, %v3261, 0
        %v3300 = vsel %vm1054, %v3263, 0
        %v3303 = vsel %vm1054, %v3265, 0
        %v3306 = vsel %vm1054, %v3267, 0
        %v3309 = vsel %vm1054, %v3269, 0
        %v3312 = vsel %vm1054, %v3271, 0
        %v3315 = vsel %vm1054, %v3273, 0
        %v3318 = vsel %vm1054, %v3275, 0
        %v3321 = vsel %vm1054, %v3277, 0
        %v3324 = vsel %vm1054, %v3279, 0
        %v3327 = vsel %vm1054, %v3281, 0
        %v3330 = vsel %vm1054, %v3283, 0
        %v3333 = vsel %vm1103, %v3167, 0
        %3335 = vmatprep.subr.bf16.mxu0 0
        %3336 = vmatpush1.bf16.msra.mxu0 0
        %3337 = vmatprep.subr.bf16.mxu0 0
        %3338 = vmatpush1.bf16.msra.mxu0 0
        %3339 = vmatprep.subr.bf16.mxu0 0
        %3340 = vmatpush1.bf16.msra.mxu0 0
        %3341 = vmatprep.subr.bf16.mxu0 0
        %3342 = vmatpush1.bf16.msra.mxu0 0
        %3343 = vmatprep.subr.bf16.mxu0 0
        %3344 = vmatpush1.bf16.msra.mxu0 0
        %3345 = vmatprep.subr.bf16.mxu0 0
        %3346 = vmatpush1.bf16.msra.mxu0 0
        %3347 = vmatprep.subr.bf16.mxu0 0
        %3348 = vmatpush1.bf16.msra.mxu0 0
        %3349 = vmatprep.subr.bf16.mxu0 0
        %3350 = vmatpush1.bf16.msra.mxu0 %v3333
        %3351 = vmatprep.subr.bf16.mxu0 0
        %3352 = vmatpush2.bf16.msra.mxu0 0
        %3353 = vmatprep.subr.bf16.mxu0 0
        %3354 = vmatpush2.bf16.msra.mxu0 0
        %3355 = vmatprep.subr.bf16.mxu0 0
        %3356 = vmatpush2.bf16.msra.mxu0 0
        %3357 = vmatprep.subr.bf16.mxu0 0
        %3358 = vmatpush2.bf16.msra.mxu0 0
        %3359 = vmatprep.subr.bf16.mxu0 0
        %3360 = vmatpush2.bf16.msra.mxu0 0
        %3361 = vmatprep.subr.bf16.mxu0 0
        %3362 = vmatpush2.bf16.msra.mxu0 0
        %3363 = vmatprep.subr.bf16.mxu0 0
        %3364 = vmatpush2.bf16.msra.mxu0 0
        %3365 = vmatprep.subr.bf16.mxu0 0
        %3366 = vmatpush2.bf16.msra.mxu0 0
        %3367 = vmatprep.mubr.bf16.mxu0 0
        %3368 = vmatmul.mubr.bf16.gmra.mxu0 %v3285
        %v3369 = vpop.f32.mrf.mxu0
        %v3370 = vadd.f32 0.0, %v3369
        %v3371 = vpop.f32.mrf.mxu0
        %v3372 = vpop.f32.mrf.mxu0
        %v3373 = vadd.f32 0.0, %v3372
        %v3374 = vpop.f32.mrf.mxu0
        %3375 = vmatprep.mubr.bf16.mxu0 0
        %3376 = vmatmul.mubr.bf16.gmra.mxu0 %v3288
        %v3377 = vpop.f32.mrf.mxu0
        %v3378 = vadd.f32 0.0, %v3377
        %v3379 = vpop.f32.mrf.mxu0
        %v3380 = vpop.f32.mrf.mxu0
        %v3381 = vadd.f32 0.0, %v3380
        %v3382 = vpop.f32.mrf.mxu0
        %3383 = vmatprep.mubr.bf16.mxu0 0
        %3384 = vmatmul.mubr.bf16.gmra.mxu0 %v3291
        %v3385 = vpop.f32.mrf.mxu0
        %v3386 = vadd.f32 0.0, %v3385
        %v3387 = vpop.f32.mrf.mxu0
        %v3388 = vpop.f32.mrf.mxu0
        %v3389 = vadd.f32 0.0, %v3388
        %v3390 = vpop.f32.mrf.mxu0
        %3391 = vmatprep.mubr.bf16.mxu0 0
        %3392 = vmatmul.mubr.bf16.gmra.mxu0 %v3294
        %v3393 = vpop.f32.mrf.mxu0
        %v3394 = vadd.f32 0.0, %v3393
        %v3395 = vpop.f32.mrf.mxu0
        %v3396 = vpop.f32.mrf.mxu0
        %v3397 = vadd.f32 0.0, %v3396
        %v3398 = vpop.f32.mrf.mxu0
        %3399 = vmatprep.mubr.bf16.mxu0 0
        %3400 = vmatmul.mubr.bf16.gmra.mxu0 %v3297
        %v3401 = vpop.f32.mrf.mxu0
        %v3402 = vadd.f32 0.0, %v3401
        %v3403 = vpop.f32.mrf.mxu0
        %v3404 = vpop.f32.mrf.mxu0
        %v3405 = vadd.f32 0.0, %v3404
        %v3406 = vpop.f32.mrf.mxu0
        %3407 = vmatprep.mubr.bf16.mxu0 0
        %3408 = vmatmul.mubr.bf16.gmra.mxu0 %v3300
        %v3409 = vpop.f32.mrf.mxu0
        %v3410 = vadd.f32 0.0, %v3409
        %v3411 = vpop.f32.mrf.mxu0
        %v3412 = vpop.f32.mrf.mxu0
        %v3413 = vadd.f32 0.0, %v3412
        %v3414 = vpop.f32.mrf.mxu0
        %3415 = vmatprep.mubr.bf16.mxu0 0
        %3416 = vmatmul.mubr.bf16.gmra.mxu0 %v3303
        %v3417 = vpop.f32.mrf.mxu0
        %v3418 = vadd.f32 0.0, %v3417
        %v3419 = vpop.f32.mrf.mxu0
        %v3420 = vpop.f32.mrf.mxu0
        %v3421 = vadd.f32 0.0, %v3420
        %v3422 = vpop.f32.mrf.mxu0
        %3423 = vmatprep.mubr.bf16.mxu0 0
        %3424 = vmatmul.mubr.bf16.gmra.mxu0 %v3306
        %v3425 = vpop.f32.mrf.mxu0
        %v3426 = vadd.f32 0.0, %v3425
        %v3427 = vpop.f32.mrf.mxu0
        %v3428 = vpop.f32.mrf.mxu0
        %v3429 = vadd.f32 0.0, %v3428
        %v3430 = vpop.f32.mrf.mxu0
        %3431 = vmatprep.mubr.bf16.mxu0 0
        %3432 = vmatmul.mubr.bf16.gmra.mxu0 %v3309
        %v3433 = vpop.f32.mrf.mxu0
        %v3434 = vadd.f32 0.0, %v3433
        %v3435 = vpop.f32.mrf.mxu0
        %v3436 = vpop.f32.mrf.mxu0
        %v3437 = vadd.f32 0.0, %v3436
        %v3438 = vpop.f32.mrf.mxu0
        %3439 = vmatprep.mubr.bf16.mxu0 0
        %3440 = vmatmul.mubr.bf16.gmra.mxu0 %v3312
        %v3441 = vpop.f32.mrf.mxu0
        %v3442 = vadd.f32 0.0, %v3441
        %v3443 = vpop.f32.mrf.mxu0
        %v3444 = vpop.f32.mrf.mxu0
        %v3445 = vadd.f32 0.0, %v3444
        %v3446 = vpop.f32.mrf.mxu0
        %3447 = vmatprep.mubr.bf16.mxu0 0
        %3448 = vmatmul.mubr.bf16.gmra.mxu0 %v3315
        %v3449 = vpop.f32.mrf.mxu0
        %v3450 = vadd.f32 0.0, %v3449
        %v3451 = vpop.f32.mrf.mxu0
        %v3452 = vpop.f32.mrf.mxu0
        %v3453 = vadd.f32 0.0, %v3452
        %v3454 = vpop.f32.mrf.mxu0
        %3455 = vmatprep.mubr.bf16.mxu0 0
        %3456 = vmatmul.mubr.bf16.gmra.mxu0 %v3318
        %v3457 = vpop.f32.mrf.mxu0
        %v3458 = vadd.f32 0.0, %v3457
        %v3459 = vpop.f32.mrf.mxu0
        %v3460 = vpop.f32.mrf.mxu0
        %v3461 = vadd.f32 0.0, %v3460
        %v3462 = vpop.f32.mrf.mxu0
        %3463 = vmatprep.mubr.bf16.mxu0 0
        %3464 = vmatmul.mubr.bf16.gmra.mxu0 %v3321
        %v3465 = vpop.f32.mrf.mxu0
        %v3466 = vadd.f32 0.0, %v3465
        %v3467 = vpop.f32.mrf.mxu0
        %v3468 = vpop.f32.mrf.mxu0
        %v3469 = vadd.f32 0.0, %v3468
        %v3470 = vpop.f32.mrf.mxu0
        %3471 = vmatprep.mubr.bf16.mxu0 0
        %3472 = vmatmul.mubr.bf16.gmra.mxu0 %v3324
        %v3473 = vpop.f32.mrf.mxu0
        %v3474 = vadd.f32 0.0, %v3473
        %v3475 = vpop.f32.mrf.mxu0
        %v3476 = vpop.f32.mrf.mxu0
        %v3477 = vadd.f32 0.0, %v3476
        %v3478 = vpop.f32.mrf.mxu0
        %3479 = vmatprep.mubr.bf16.mxu0 0
        %3480 = vmatmul.mubr.bf16.gmra.mxu0 %v3327
        %v3481 = vpop.f32.mrf.mxu0
        %v3482 = vadd.f32 0.0, %v3481
        %v3483 = vpop.f32.mrf.mxu0
        %v3484 = vpop.f32.mrf.mxu0
        %v3485 = vadd.f32 0.0, %v3484
        %v3486 = vpop.f32.mrf.mxu0
        %3487 = vmatprep.mubr.bf16.mxu0 0
        %3488 = vmatmul.mubr.bf16.gmra.mxu0 %v3330
        %v3489 = vpop.f32.mrf.mxu0
        %v3490 = vadd.f32 0.0, %v3489
        %v3491 = vpop.f32.mrf.mxu0
        %v3492 = vpop.f32.mrf.mxu0
        %v3493 = vadd.f32 0.0, %v3492
        %v3494 = vpop.f32.mrf.mxu0
        %3495 = vdwg.mxu0
        %v3496 = vadd.f32 %v3100, %v3370
        %v3497 = vadd.f32 %v3101, %v3373
        %v3498 = vadd.f32 %v3102, %v3378
        %v3499 = vadd.f32 %v3103, %v3381
        %v3500 = vadd.f32 %v3104, %v3386
        %v3501 = vadd.f32 %v3105, %v3389
        %v3502 = vadd.f32 %v3106, %v3394
        %v3503 = vadd.f32 %v3107, %v3397
        %v3504 = vadd.f32 %v3108, %v3402
        %v3505 = vadd.f32 %v3109, %v3405
        %v3506 = vadd.f32 %v3110, %v3410
        %v3507 = vadd.f32 %v3111, %v3413
        %v3508 = vadd.f32 %v3112, %v3418
        %v3509 = vadd.f32 %v3113, %v3421
        %v3510 = vadd.f32 %v3114, %v3426
        %v3511 = vadd.f32 %v3115, %v3429
        %v3512 = vadd.f32 %v3116, %v3434
        %v3513 = vadd.f32 %v3117, %v3437
        %v3514 = vadd.f32 %v3118, %v3442
        %v3515 = vadd.f32 %v3119, %v3445
        %v3516 = vadd.f32 %v3120, %v3450
        %v3517 = vadd.f32 %v3121, %v3453
        %v3518 = vadd.f32 %v3122, %v3458
        %v3519 = vadd.f32 %v3123, %v3461
        %v3520 = vadd.f32 %v3124, %v3466
        %v3521 = vadd.f32 %v3125, %v3469
        %v3522 = vadd.f32 %v3126, %v3474
        %v3523 = vadd.f32 %v3127, %v3477
        %v3524 = vadd.f32 %v3128, %v3482
        %v3525 = vadd.f32 %v3129, %v3485
        %v3526 = vadd.f32 %v3130, %v3490
        %v3527 = vadd.f32 %v3131, %v3493
        %v3528 = vld [vmem:[%s221 + $0x10] sm:$0xf]
        %v3529 = vld [vmem:[%s221 + $0x14] sm:$0xf]
        %v3530 = vld [vmem:[%s221 + $0x18] sm:$0xf]
        %v3531 = vld [vmem:[%s221 + $0x1c] sm:$0xf]
        %v3532 = vld [vmem:[%s221 + $0x20] sm:$0xf]
        %v3533 = vld [vmem:[%s221 + $0x24] sm:$0xf]
        %v3534 = vld [vmem:[%s221 + $0x28] sm:$0xf]
        %v3535 = vld [vmem:[%s221 + $0x2c] sm:$0xf]
        %v3536 = vld [vmem:[%s221 + $0x30] sm:$0xf]
        %v3537 = vld [vmem:[%s221 + $0x34] sm:$0xf]
        %v3538 = vld [vmem:[%s221 + $0x38] sm:$0xf]
        %v3539 = vld [vmem:[%s221 + $0x3c] sm:$0xf]
        %v3540 = vld [vmem:[%s221 + $0x40] sm:$0xf]
        %v3541 = vld [vmem:[%s221 + $0x44] sm:$0xf]
        %v3542 = vld [vmem:[%s221 + $0x48] sm:$0xf]
        %v3543 = vld [vmem:[%s221 + $0x4c] sm:$0xf]
        %v3544 = vld [vmem:[%s221 + $0x50] sm:$0xf]
        %v3545 = vld [vmem:[%s221 + $0x54] sm:$0xf]
        %v3546 = vld [vmem:[%s221 + $0x58] sm:$0xf]
        %v3547 = vld [vmem:[%s221 + $0x5c] sm:$0xf]
        %v3548 = vld [vmem:[%s221 + $0x60] sm:$0xf]
        %v3549 = vld [vmem:[%s221 + $0x64] sm:$0xf]
        %v3550 = vld [vmem:[%s221 + $0x68] sm:$0xf]
        %v3551 = vld [vmem:[%s221 + $0x6c] sm:$0xf]
        %v3552 = vld [vmem:[%s221 + $0x70] sm:$0xf]
        %v3553 = vld [vmem:[%s221 + $0x74] sm:$0xf]
        %v3554 = vld [vmem:[%s221 + $0x78] sm:$0xf]
        %v3555 = vld [vmem:[%s221 + $0x7c] sm:$0xf]
        %v3556 = vld [vmem:[%s221 + $0x80] sm:$0xf]
        %v3557 = vld [vmem:[%s221 + $0x84] sm:$0xf]
        %v3558 = vld [vmem:[%s221 + $0x88] sm:$0xf]
        %v3559 = vld [vmem:[%s221 + $0x8c] sm:$0xf]
        %v3560 = vsel %vm770, %v3528, 0
        %v3561 = vsel %vm771, %v3529, 0
        %v3562 = vsel %vm772, %v3530, 0
        %v3563 = vsel %vm773, %v3531, 0
        %v3564 = vsel %vm774, %v3532, 0
        %v3565 = vsel %vm775, %v3533, 0
        %v3566 = vsel %vm776, %v3534, 0
        %v3567 = vsel %vm777, %v3535, 0
        %v3568 = vsel %vm778, %v3536, 0
        %v3569 = vsel %vm779, %v3537, 0
        %v3570 = vsel %vm780, %v3538, 0
        %v3571 = vsel %vm781, %v3539, 0
        %v3572 = vsel %vm782, %v3540, 0
        %v3573 = vsel %vm783, %v3541, 0
        %v3574 = vsel %vm784, %v3542, 0
        %v3575 = vsel %vm785, %v3543, 0
        %v3576 = vsel %vm786, %v3544, 0
        %v3577 = vsel %vm787, %v3545, 0
        %v3578 = vsel %vm788, %v3546, 0
        %v3579 = vsel %vm789, %v3547, 0
        %v3580 = vsel %vm790, %v3548, 0
        %v3581 = vsel %vm791, %v3549, 0
        %v3582 = vsel %vm792, %v3550, 0
        %v3583 = vsel %vm793, %v3551, 0
        %v3584 = vsel %vm794, %v3552, 0
        %v3585 = vsel %vm795, %v3553, 0
        %v3586 = vsel %vm796, %v3554, 0
        %v3587 = vsel %vm797, %v3555, 0
        %v3588 = vsel %vm798, %v3556, 0
        %v3589 = vsel %vm799, %v3557, 0
        %v3590 = vsel %vm800, %v3558, 0
        %v3591 = vsel %vm801, %v3559, 0
        %s3592 = scalar_lea.vmem %s1, 12
        %v3593 = vld [vmem:[%s3592] sm:$0x3]
        %v3626 = vunpack.c.l.b16 %v3560
        %v3627 = vunpack.c.l.b16 %v3561
        %v3628 = vunpack.c.l.b16 %v3562
        %v3629 = vunpack.c.l.b16 %v3563
        %v3630 = vunpack.c.l.b16 %v3564
        %v3631 = vunpack.c.l.b16 %v3565
        %v3632 = vunpack.c.l.b16 %v3566
        %v3633 = vunpack.c.l.b16 %v3567
        %v3634 = vunpack.c.l.b16 %v3568
        %v3635 = vunpack.c.l.b16 %v3569
        %v3636 = vunpack.c.l.b16 %v3570
        %v3637 = vunpack.c.l.b16 %v3571
        %v3638 = vunpack.c.l.b16 %v3572
        %v3639 = vunpack.c.l.b16 %v3573
        %v3640 = vunpack.c.l.b16 %v3574
        %v3641 = vunpack.c.l.b16 %v3575
        %v3642 = vunpack.c.l.b16 %v3576
        %v3643 = vunpack.c.l.b16 %v3577
        %v3644 = vunpack.c.l.b16 %v3578
        %v3645 = vunpack.c.l.b16 %v3579
        %v3646 = vunpack.c.l.b16 %v3580
        %v3647 = vunpack.c.l.b16 %v3581
        %v3648 = vunpack.c.l.b16 %v3582
        %v3649 = vunpack.c.l.b16 %v3583
        %v3650 = vunpack.c.l.b16 %v3584
        %v3651 = vunpack.c.l.b16 %v3585
        %v3652 = vunpack.c.l.b16 %v3586
        %v3653 = vunpack.c.l.b16 %v3587
        %v3654 = vunpack.c.l.b16 %v3588
        %v3655 = vunpack.c.l.b16 %v3589
        %v3656 = vunpack.c.l.b16 %v3590
        %v3657 = vunpack.c.l.b16 %v3591
        %v3658 = vpack.c.b16 %v3627, %v3626
        %v3659 = vpack.c.b16 %v3629, %v3628
        %v3660 = vpack.c.b16 %v3631, %v3630
        %v3661 = vpack.c.b16 %v3633, %v3632
        %v3662 = vpack.c.b16 %v3635, %v3634
        %v3663 = vpack.c.b16 %v3637, %v3636
        %v3664 = vpack.c.b16 %v3639, %v3638
        %v3665 = vpack.c.b16 %v3641, %v3640
        %v3666 = vpack.c.b16 %v3643, %v3642
        %v3667 = vpack.c.b16 %v3645, %v3644
        %v3668 = vpack.c.b16 %v3647, %v3646
        %v3669 = vpack.c.b16 %v3649, %v3648
        %v3670 = vpack.c.b16 %v3651, %v3650
        %v3671 = vpack.c.b16 %v3653, %v3652
        %v3672 = vpack.c.b16 %v3655, %v3654
        %v3673 = vpack.c.b16 %v3657, %v3656
        %v3675 = vsel %vm1054, %v3658, 0
        %v3678 = vsel %vm1054, %v3659, 0
        %v3681 = vsel %vm1054, %v3660, 0
        %v3684 = vsel %vm1054, %v3661, 0
        %v3687 = vsel %vm1054, %v3662, 0
        %v3690 = vsel %vm1054, %v3663, 0
        %v3693 = vsel %vm1054, %v3664, 0
        %v3696 = vsel %vm1054, %v3665, 0
        %v3699 = vsel %vm1054, %v3666, 0
        %v3702 = vsel %vm1054, %v3667, 0
        %v3705 = vsel %vm1054, %v3668, 0
        %v3708 = vsel %vm1054, %v3669, 0
        %v3711 = vsel %vm1054, %v3670, 0
        %v3714 = vsel %vm1054, %v3671, 0
        %v3717 = vsel %vm1054, %v3672, 0
        %v3720 = vsel %vm1054, %v3673, 0
        %v3723 = vsel %vm1103, %v3593, 0
        %3725 = vmatprep.subr.bf16.mxu0 0
        %3726 = vmatpush1.bf16.msra.mxu0 0
        %3727 = vmatprep.subr.bf16.mxu0 0
        %3728 = vmatpush1.bf16.msra.mxu0 0
        %3729 = vmatprep.subr.bf16.mxu0 0
        %3730 = vmatpush1.bf16.msra.mxu0 0
        %3731 = vmatprep.subr.bf16.mxu0 0
        %3732 = vmatpush1.bf16.msra.mxu0 0
        %3733 = vmatprep.subr.bf16.mxu0 0
        %3734 = vmatpush1.bf16.msra.mxu0 0
        %3735 = vmatprep.subr.bf16.mxu0 0
        %3736 = vmatpush1.bf16.msra.mxu0 0
        %3737 = vmatprep.subr.bf16.mxu0 0
        %3738 = vmatpush1.bf16.msra.mxu0 0
        %3739 = vmatprep.subr.bf16.mxu0 0
        %3740 = vmatpush1.bf16.msra.mxu0 %v3723
        %3741 = vmatprep.subr.bf16.mxu0 0
        %3742 = vmatpush2.bf16.msra.mxu0 0
        %3743 = vmatprep.subr.bf16.mxu0 0
        %3744 = vmatpush2.bf16.msra.mxu0 0
        %3745 = vmatprep.subr.bf16.mxu0 0
        %3746 = vmatpush2.bf16.msra.mxu0 0
        %3747 = vmatprep.subr.bf16.mxu0 0
        %3748 = vmatpush2.bf16.msra.mxu0 0
        %3749 = vmatprep.subr.bf16.mxu0 0
        %3750 = vmatpush2.bf16.msra.mxu0 0
        %3751 = vmatprep.subr.bf16.mxu0 0
        %3752 = vmatpush2.bf16.msra.mxu0 0
        %3753 = vmatprep.subr.bf16.mxu0 0
        %3754 = vmatpush2.bf16.msra.mxu0 0
        %3755 = vmatprep.subr.bf16.mxu0 0
        %3756 = vmatpush2.bf16.msra.mxu0 0
        %3757 = vmatprep.mubr.bf16.mxu0 0
        %3758 = vmatmul.mubr.bf16.gmra.mxu0 %v3675
        %v3759 = vpop.f32.mrf.mxu0
        %v3760 = vadd.f32 0.0, %v3759
        %v3761 = vpop.f32.mrf.mxu0
        %v3762 = vpop.f32.mrf.mxu0
        %v3763 = vadd.f32 0.0, %v3762
        %v3764 = vpop.f32.mrf.mxu0
        %3765 = vmatprep.mubr.bf16.mxu0 0
        %3766 = vmatmul.mubr.bf16.gmra.mxu0 %v3678
        %v3767 = vpop.f32.mrf.mxu0
        %v3768 = vadd.f32 0.0, %v3767
        %v3769 = vpop.f32.mrf.mxu0
        %v3770 = vpop.f32.mrf.mxu0
        %v3771 = vadd.f32 0.0, %v3770
        %v3772 = vpop.f32.mrf.mxu0
        %3773 = vmatprep.mubr.bf16.mxu0 0
        %3774 = vmatmul.mubr.bf16.gmra.mxu0 %v3681
        %v3775 = vpop.f32.mrf.mxu0
        %v3776 = vadd.f32 0.0, %v3775
        %v3777 = vpop.f32.mrf.mxu0
        %v3778 = vpop.f32.mrf.mxu0
        %v3779 = vadd.f32 0.0, %v3778
        %v3780 = vpop.f32.mrf.mxu0
        %3781 = vmatprep.mubr.bf16.mxu0 0
        %3782 = vmatmul.mubr.bf16.gmra.mxu0 %v3684
        %v3783 = vpop.f32.mrf.mxu0
        %v3784 = vadd.f32 0.0, %v3783
        %v3785 = vpop.f32.mrf.mxu0
        %v3786 = vpop.f32.mrf.mxu0
        %v3787 = vadd.f32 0.0, %v3786
        %v3788 = vpop.f32.mrf.mxu0
        %3789 = vmatprep.mubr.bf16.mxu0 0
        %3790 = vmatmul.mubr.bf16.gmra.mxu0 %v3687
        %v3791 = vpop.f32.mrf.mxu0
        %v3792 = vadd.f32 0.0, %v3791
        %v3793 = vpop.f32.mrf.mxu0
        %v3794 = vpop.f32.mrf.mxu0
        %v3795 = vadd.f32 0.0, %v3794
        %v3796 = vpop.f32.mrf.mxu0
        %3797 = vmatprep.mubr.bf16.mxu0 0
        %3798 = vmatmul.mubr.bf16.gmra.mxu0 %v3690
        %v3799 = vpop.f32.mrf.mxu0
        %v3800 = vadd.f32 0.0, %v3799
        %v3801 = vpop.f32.mrf.mxu0
        %v3802 = vpop.f32.mrf.mxu0
        %v3803 = vadd.f32 0.0, %v3802
        %v3804 = vpop.f32.mrf.mxu0
        %3805 = vmatprep.mubr.bf16.mxu0 0
        %3806 = vmatmul.mubr.bf16.gmra.mxu0 %v3693
        %v3807 = vpop.f32.mrf.mxu0
        %v3808 = vadd.f32 0.0, %v3807
        %v3809 = vpop.f32.mrf.mxu0
        %v3810 = vpop.f32.mrf.mxu0
        %v3811 = vadd.f32 0.0, %v3810
        %v3812 = vpop.f32.mrf.mxu0
        %3813 = vmatprep.mubr.bf16.mxu0 0
        %3814 = vmatmul.mubr.bf16.gmra.mxu0 %v3696
        %v3815 = vpop.f32.mrf.mxu0
        %v3816 = vadd.f32 0.0, %v3815
        %v3817 = vpop.f32.mrf.mxu0
        %v3818 = vpop.f32.mrf.mxu0
        %v3819 = vadd.f32 0.0, %v3818
        %v3820 = vpop.f32.mrf.mxu0
        %3821 = vmatprep.mubr.bf16.mxu0 0
        %3822 = vmatmul.mubr.bf16.gmra.mxu0 %v3699
        %v3823 = vpop.f32.mrf.mxu0
        %v3824 = vadd.f32 0.0, %v3823
        %v3825 = vpop.f32.mrf.mxu0
        %v3826 = vpop.f32.mrf.mxu0
        %v3827 = vadd.f32 0.0, %v3826
        %v3828 = vpop.f32.mrf.mxu0
        %3829 = vmatprep.mubr.bf16.mxu0 0
        %3830 = vmatmul.mubr.bf16.gmra.mxu0 %v3702
        %v3831 = vpop.f32.mrf.mxu0
        %v3832 = vadd.f32 0.0, %v3831
        %v3833 = vpop.f32.mrf.mxu0
        %v3834 = vpop.f32.mrf.mxu0
        %v3835 = vadd.f32 0.0, %v3834
        %v3836 = vpop.f32.mrf.mxu0
        %3837 = vmatprep.mubr.bf16.mxu0 0
        %3838 = vmatmul.mubr.bf16.gmra.mxu0 %v3705
        %v3839 = vpop.f32.mrf.mxu0
        %v3840 = vadd.f32 0.0, %v3839
        %v3841 = vpop.f32.mrf.mxu0
        %v3842 = vpop.f32.mrf.mxu0
        %v3843 = vadd.f32 0.0, %v3842
        %v3844 = vpop.f32.mrf.mxu0
        %3845 = vmatprep.mubr.bf16.mxu0 0
        %3846 = vmatmul.mubr.bf16.gmra.mxu0 %v3708
        %v3847 = vpop.f32.mrf.mxu0
        %v3848 = vadd.f32 0.0, %v3847
        %v3849 = vpop.f32.mrf.mxu0
        %v3850 = vpop.f32.mrf.mxu0
        %v3851 = vadd.f32 0.0, %v3850
        %v3852 = vpop.f32.mrf.mxu0
        %3853 = vmatprep.mubr.bf16.mxu0 0
        %3854 = vmatmul.mubr.bf16.gmra.mxu0 %v3711
        %v3855 = vpop.f32.mrf.mxu0
        %v3856 = vadd.f32 0.0, %v3855
        %v3857 = vpop.f32.mrf.mxu0
        %v3858 = vpop.f32.mrf.mxu0
        %v3859 = vadd.f32 0.0, %v3858
        %v3860 = vpop.f32.mrf.mxu0
        %3861 = vmatprep.mubr.bf16.mxu0 0
        %3862 = vmatmul.mubr.bf16.gmra.mxu0 %v3714
        %v3863 = vpop.f32.mrf.mxu0
        %v3864 = vadd.f32 0.0, %v3863
        %v3865 = vpop.f32.mrf.mxu0
        %v3866 = vpop.f32.mrf.mxu0
        %v3867 = vadd.f32 0.0, %v3866
        %v3868 = vpop.f32.mrf.mxu0
        %3869 = vmatprep.mubr.bf16.mxu0 0
        %3870 = vmatmul.mubr.bf16.gmra.mxu0 %v3717
        %v3871 = vpop.f32.mrf.mxu0
        %v3872 = vadd.f32 0.0, %v3871
        %v3873 = vpop.f32.mrf.mxu0
        %v3874 = vpop.f32.mrf.mxu0
        %v3875 = vadd.f32 0.0, %v3874
        %v3876 = vpop.f32.mrf.mxu0
        %3877 = vmatprep.mubr.bf16.mxu0 0
        %3878 = vmatmul.mubr.bf16.gmra.mxu0 %v3720
        %v3879 = vpop.f32.mrf.mxu0
        %v3880 = vadd.f32 0.0, %v3879
        %v3881 = vpop.f32.mrf.mxu0
        %v3882 = vpop.f32.mrf.mxu0
        %v3883 = vadd.f32 0.0, %v3882
        %v3884 = vpop.f32.mrf.mxu0
        %3885 = vdwg.mxu0
        %v3886 = vadd.f32 %v3496, %v3760
        %v3887 = vadd.f32 %v3497, %v3763
        %v3888 = vadd.f32 %v3498, %v3768
        %v3889 = vadd.f32 %v3499, %v3771
        %v3890 = vadd.f32 %v3500, %v3776
        %v3891 = vadd.f32 %v3501, %v3779
        %v3892 = vadd.f32 %v3502, %v3784
        %v3893 = vadd.f32 %v3503, %v3787
        %v3894 = vadd.f32 %v3504, %v3792
        %v3895 = vadd.f32 %v3505, %v3795
        %v3896 = vadd.f32 %v3506, %v3800
        %v3897 = vadd.f32 %v3507, %v3803
        %v3898 = vadd.f32 %v3508, %v3808
        %v3899 = vadd.f32 %v3509, %v3811
        %v3900 = vadd.f32 %v3510, %v3816
        %v3901 = vadd.f32 %v3511, %v3819
        %v3902 = vadd.f32 %v3512, %v3824
        %v3903 = vadd.f32 %v3513, %v3827
        %v3904 = vadd.f32 %v3514, %v3832
        %v3905 = vadd.f32 %v3515, %v3835
        %v3906 = vadd.f32 %v3516, %v3840
        %v3907 = vadd.f32 %v3517, %v3843
        %v3908 = vadd.f32 %v3518, %v3848
        %v3909 = vadd.f32 %v3519, %v3851
        %v3910 = vadd.f32 %v3520, %v3856
        %v3911 = vadd.f32 %v3521, %v3859
        %v3912 = vadd.f32 %v3522, %v3864
        %v3913 = vadd.f32 %v3523, %v3867
        %v3914 = vadd.f32 %v3524, %v3872
        %v3915 = vadd.f32 %v3525, %v3875
        %v3916 = vadd.f32 %v3526, %v3880
        %v3917 = vadd.f32 %v3527, %v3883
        %v3918 = vld [vmem:[%s221 + $0x10] sm:$0xf]
        %v3919 = vld [vmem:[%s221 + $0x14] sm:$0xf]
        %v3920 = vld [vmem:[%s221 + $0x18] sm:$0xf]
        %v3921 = vld [vmem:[%s221 + $0x1c] sm:$0xf]
        %v3922 = vld [vmem:[%s221 + $0x20] sm:$0xf]
        %v3923 = vld [vmem:[%s221 + $0x24] sm:$0xf]
        %v3924 = vld [vmem:[%s221 + $0x28] sm:$0xf]
        %v3925 = vld [vmem:[%s221 + $0x2c] sm:$0xf]
        %v3926 = vld [vmem:[%s221 + $0x30] sm:$0xf]
        %v3927 = vld [vmem:[%s221 + $0x34] sm:$0xf]
        %v3928 = vld [vmem:[%s221 + $0x38] sm:$0xf]
        %v3929 = vld [vmem:[%s221 + $0x3c] sm:$0xf]
        %v3930 = vld [vmem:[%s221 + $0x40] sm:$0xf]
        %v3931 = vld [vmem:[%s221 + $0x44] sm:$0xf]
        %v3932 = vld [vmem:[%s221 + $0x48] sm:$0xf]
        %v3933 = vld [vmem:[%s221 + $0x4c] sm:$0xf]
        %v3934 = vld [vmem:[%s221 + $0x50] sm:$0xf]
        %v3935 = vld [vmem:[%s221 + $0x54] sm:$0xf]
        %v3936 = vld [vmem:[%s221 + $0x58] sm:$0xf]
        %v3937 = vld [vmem:[%s221 + $0x5c] sm:$0xf]
        %v3938 = vld [vmem:[%s221 + $0x60] sm:$0xf]
        %v3939 = vld [vmem:[%s221 + $0x64] sm:$0xf]
        %v3940 = vld [vmem:[%s221 + $0x68] sm:$0xf]
        %v3941 = vld [vmem:[%s221 + $0x6c] sm:$0xf]
        %v3942 = vld [vmem:[%s221 + $0x70] sm:$0xf]
        %v3943 = vld [vmem:[%s221 + $0x74] sm:$0xf]
        %v3944 = vld [vmem:[%s221 + $0x78] sm:$0xf]
        %v3945 = vld [vmem:[%s221 + $0x7c] sm:$0xf]
        %v3946 = vld [vmem:[%s221 + $0x80] sm:$0xf]
        %v3947 = vld [vmem:[%s221 + $0x84] sm:$0xf]
        %v3948 = vld [vmem:[%s221 + $0x88] sm:$0xf]
        %v3949 = vld [vmem:[%s221 + $0x8c] sm:$0xf]
        %v3950 = vld [vmem:[%s221 + $0x90] sm:$0x1]
        %s3951 = scalar_lea.vmem %s1, 14
        %v3952 = vld [vmem:[%s3951] sm:$0x3]
        %v3986 = vunpack.c.l.b16 %v3918
        %v3987 = vunpack.c.l.b16 %v3919
        %v3988 = vunpack.c.l.b16 %v3920
        %v3989 = vunpack.c.l.b16 %v3921
        %v3990 = vunpack.c.l.b16 %v3922
        %v3991 = vunpack.c.l.b16 %v3923
        %v3992 = vunpack.c.l.b16 %v3924
        %v3993 = vunpack.c.l.b16 %v3925
        %v3994 = vunpack.c.l.b16 %v3926
        %v3995 = vunpack.c.l.b16 %v3927
        %v3996 = vunpack.c.l.b16 %v3928
        %v3997 = vunpack.c.l.b16 %v3929
        %v3998 = vunpack.c.l.b16 %v3930
        %v3999 = vunpack.c.l.b16 %v3931
        %v4000 = vunpack.c.l.b16 %v3932
        %v4001 = vunpack.c.l.b16 %v3933
        %v4002 = vunpack.c.l.b16 %v3934
        %v4003 = vunpack.c.l.b16 %v3935
        %v4004 = vunpack.c.l.b16 %v3936
        %v4005 = vunpack.c.l.b16 %v3937
        %v4006 = vunpack.c.l.b16 %v3938
        %v4007 = vunpack.c.l.b16 %v3939
        %v4008 = vunpack.c.l.b16 %v3940
        %v4009 = vunpack.c.l.b16 %v3941
        %v4010 = vunpack.c.l.b16 %v3942
        %v4011 = vunpack.c.l.b16 %v3943
        %v4012 = vunpack.c.l.b16 %v3944
        %v4013 = vunpack.c.l.b16 %v3945
        %v4014 = vunpack.c.l.b16 %v3946
        %v4015 = vunpack.c.l.b16 %v3947
        %v4016 = vunpack.c.l.b16 %v3948
        %v4017 = vunpack.c.l.b16 %v3949
        %v4018 = vunpack.c.l.b16 %v3950
        %v4019 = vpack.c.b16 %v3987, %v3986
        %v4020 = vpack.c.b16 %v3989, %v3988
        %v4021 = vpack.c.b16 %v3991, %v3990
        %v4022 = vpack.c.b16 %v3993, %v3992
        %v4023 = vpack.c.b16 %v3995, %v3994
        %v4024 = vpack.c.b16 %v3997, %v3996
        %v4025 = vpack.c.b16 %v3999, %v3998
        %v4026 = vpack.c.b16 %v4001, %v4000
        %v4027 = vpack.c.b16 %v4003, %v4002
        %v4028 = vpack.c.b16 %v4005, %v4004
        %v4029 = vpack.c.b16 %v4007, %v4006
        %v4030 = vpack.c.b16 %v4009, %v4008
        %v4031 = vpack.c.b16 %v4011, %v4010
        %v4032 = vpack.c.b16 %v4013, %v4012
        %v4033 = vpack.c.b16 %v4015, %v4014
        %v4034 = vpack.c.b16 %v4017, %v4016
        %v4035 = vpack.c.b16 %v4018, %v4018
        %v4037 = vshrl.u32 %v4019, 16
        %v4039 = vshll.u32 %v4019, 16
        %v4041 = vrot.slane %v4039, 1
        %v4042 = vor.u32 %v4037, %v4041
        %v4044 = vshll.u32 %v4020, 16
        %v4046 = vrot.slane %v4044, 1
        %v4047 = vsel %vm921, %v4042, %v4046
        %v4048 = vshrl.u32 %v4020, 16
        %v4050 = vor.u32 %v4048, %v4046
        %v4052 = vshll.u32 %v4021, 16
        %v4054 = vrot.slane %v4052, 1
        %v4055 = vsel %vm921, %v4050, %v4054
        %v4056 = vshrl.u32 %v4021, 16
        %v4058 = vor.u32 %v4056, %v4054
        %v4060 = vshll.u32 %v4022, 16
        %v4062 = vrot.slane %v4060, 1
        %v4063 = vsel %vm921, %v4058, %v4062
        %v4064 = vshrl.u32 %v4022, 16
        %v4066 = vor.u32 %v4064, %v4062
        %v4068 = vshll.u32 %v4023, 16
        %v4070 = vrot.slane %v4068, 1
        %v4071 = vsel %vm921, %v4066, %v4070
        %v4072 = vshrl.u32 %v4023, 16
        %v4074 = vor.u32 %v4072, %v4070
        %v4076 = vshll.u32 %v4024, 16
        %v4078 = vrot.slane %v4076, 1
        %v4079 = vsel %vm921, %v4074, %v4078
        %v4080 = vshrl.u32 %v4024, 16
        %v4082 = vor.u32 %v4080, %v4078
        %v4084 = vshll.u32 %v4025, 16
        %v4086 = vrot.slane %v4084, 1
        %v4087 = vsel %vm921, %v4082, %v4086
        %v4088 = vshrl.u32 %v4025, 16
        %v4090 = vor.u32 %v4088, %v4086
        %v4092 = vshll.u32 %v4026, 16
        %v4094 = vrot.slane %v4092, 1
        %v4095 = vsel %vm921, %v4090, %v4094
        %v4096 = vshrl.u32 %v4026, 16
        %v4098 = vor.u32 %v4096, %v4094
        %v4100 = vshll.u32 %v4027, 16
        %v4102 = vrot.slane %v4100, 1
        %v4103 = vsel %vm921, %v4098, %v4102
        %v4104 = vshrl.u32 %v4027, 16
        %v4106 = vor.u32 %v4104, %v4102
        %v4108 = vshll.u32 %v4028, 16
        %v4110 = vrot.slane %v4108, 1
        %v4111 = vsel %vm921, %v4106, %v4110
        %v4112 = vshrl.u32 %v4028, 16
        %v4114 = vor.u32 %v4112, %v4110
        %v4116 = vshll.u32 %v4029, 16
        %v4118 = vrot.slane %v4116, 1
        %v4119 = vsel %vm921, %v4114, %v4118
        %v4120 = vshrl.u32 %v4029, 16
        %v4122 = vor.u32 %v4120, %v4118
        %v4124 = vshll.u32 %v4030, 16
        %v4126 = vrot.slane %v4124, 1
        %v4127 = vsel %vm921, %v4122, %v4126
        %v4128 = vshrl.u32 %v4030, 16
        %v4130 = vor.u32 %v4128, %v4126
        %v4132 = vshll.u32 %v4031, 16
        %v4134 = vrot.slane %v4132, 1
        %v4135 = vsel %vm921, %v4130, %v4134
        %v4136 = vshrl.u32 %v4031, 16
        %v4138 = vor.u32 %v4136, %v4134
        %v4140 = vshll.u32 %v4032, 16
        %v4142 = vrot.slane %v4140, 1
        %v4143 = vsel %vm921, %v4138, %v4142
        %v4144 = vshrl.u32 %v4032, 16
        %v4146 = vor.u32 %v4144, %v4142
        %v4148 = vshll.u32 %v4033, 16
        %v4150 = vrot.slane %v4148, 1
        %v4151 = vsel %vm921, %v4146, %v4150
        %v4152 = vshrl.u32 %v4033, 16
        %v4154 = vor.u32 %v4152, %v4150
        %v4156 = vshll.u32 %v4034, 16
        %v4158 = vrot.slane %v4156, 1
        %v4159 = vsel %vm921, %v4154, %v4158
        %v4160 = vshrl.u32 %v4034, 16
        %v4162 = vor.u32 %v4160, %v4158
        %v4164 = vshll.u32 %v4035, 16
        %v4166 = vrot.slane %v4164, 1
        %v4167 = vsel %vm921, %v4162, %v4166
        %v4169 = vsel %vm1054, %v4047, 0
        %v4172 = vsel %vm1054, %v4055, 0
        %v4175 = vsel %vm1054, %v4063, 0
        %v4178 = vsel %vm1054, %v4071, 0
        %v4181 = vsel %vm1054, %v4079, 0
        %v4184 = vsel %vm1054, %v4087, 0
        %v4187 = vsel %vm1054, %v4095, 0
        %v4190 = vsel %vm1054, %v4103, 0
        %v4193 = vsel %vm1054, %v4111, 0
        %v4196 = vsel %vm1054, %v4119, 0
        %v4199 = vsel %vm1054, %v4127, 0
        %v4202 = vsel %vm1054, %v4135, 0
        %v4205 = vsel %vm1054, %v4143, 0
        %v4208 = vsel %vm1054, %v4151, 0
        %v4211 = vsel %vm1054, %v4159, 0
        %v4214 = vsel %vm1054, %v4167, 0
        %v4217 = vsel %vm1103, %v3952, 0
        %4219 = vmatprep.subr.bf16.mxu0 0
        %4220 = vmatpush1.bf16.msra.mxu0 0
        %4221 = vmatprep.subr.bf16.mxu0 0
        %4222 = vmatpush1.bf16.msra.mxu0 0
        %4223 = vmatprep.subr.bf16.mxu0 0
        %4224 = vmatpush1.bf16.msra.mxu0 0
        %4225 = vmatprep.subr.bf16.mxu0 0
        %4226 = vmatpush1.bf16.msra.mxu0 0
        %4227 = vmatprep.subr.bf16.mxu0 0
        %4228 = vmatpush1.bf16.msra.mxu0 0
        %4229 = vmatprep.subr.bf16.mxu0 0
        %4230 = vmatpush1.bf16.msra.mxu0 0
        %4231 = vmatprep.subr.bf16.mxu0 0
        %4232 = vmatpush1.bf16.msra.mxu0 0
        %4233 = vmatprep.subr.bf16.mxu0 0
        %4234 = vmatpush1.bf16.msra.mxu0 %v4217
        %4235 = vmatprep.subr.bf16.mxu0 0
        %4236 = vmatpush2.bf16.msra.mxu0 0
        %4237 = vmatprep.subr.bf16.mxu0 0
        %4238 = vmatpush2.bf16.msra.mxu0 0
        %4239 = vmatprep.subr.bf16.mxu0 0
        %4240 = vmatpush2.bf16.msra.mxu0 0
        %4241 = vmatprep.subr.bf16.mxu0 0
        %4242 = vmatpush2.bf16.msra.mxu0 0
        %4243 = vmatprep.subr.bf16.mxu0 0
        %4244 = vmatpush2.bf16.msra.mxu0 0
        %4245 = vmatprep.subr.bf16.mxu0 0
        %4246 = vmatpush2.bf16.msra.mxu0 0
        %4247 = vmatprep.subr.bf16.mxu0 0
        %4248 = vmatpush2.bf16.msra.mxu0 0
        %4249 = vmatprep.subr.bf16.mxu0 0
        %4250 = vmatpush2.bf16.msra.mxu0 0
        %4251 = vmatprep.mubr.bf16.mxu0 0
        %4252 = vmatmul.mubr.bf16.gmra.mxu0 %v4169
        %v4253 = vpop.f32.mrf.mxu0
        %v4254 = vadd.f32 0.0, %v4253
        %v4255 = vpop.f32.mrf.mxu0
        %v4256 = vpop.f32.mrf.mxu0
        %v4257 = vadd.f32 0.0, %v4256
        %v4258 = vpop.f32.mrf.mxu0
        %4259 = vmatprep.mubr.bf16.mxu0 0
        %4260 = vmatmul.mubr.bf16.gmra.mxu0 %v4172
        %v4261 = vpop.f32.mrf.mxu0
        %v4262 = vadd.f32 0.0, %v4261
        %v4263 = vpop.f32.mrf.mxu0
        %v4264 = vpop.f32.mrf.mxu0
        %v4265 = vadd.f32 0.0, %v4264
        %v4266 = vpop.f32.mrf.mxu0
        %4267 = vmatprep.mubr.bf16.mxu0 0
        %4268 = vmatmul.mubr.bf16.gmra.mxu0 %v4175
        %v4269 = vpop.f32.mrf.mxu0
        %v4270 = vadd.f32 0.0, %v4269
        %v4271 = vpop.f32.mrf.mxu0
        %v4272 = vpop.f32.mrf.mxu0
        %v4273 = vadd.f32 0.0, %v4272
        %v4274 = vpop.f32.mrf.mxu0
        %4275 = vmatprep.mubr.bf16.mxu0 0
        %4276 = vmatmul.mubr.bf16.gmra.mxu0 %v4178
        %v4277 = vpop.f32.mrf.mxu0
        %v4278 = vadd.f32 0.0, %v4277
        %v4279 = vpop.f32.mrf.mxu0
        %v4280 = vpop.f32.mrf.mxu0
        %v4281 = vadd.f32 0.0, %v4280
        %v4282 = vpop.f32.mrf.mxu0
        %4283 = vmatprep.mubr.bf16.mxu0 0
        %4284 = vmatmul.mubr.bf16.gmra.mxu0 %v4181
        %v4285 = vpop.f32.mrf.mxu0
        %v4286 = vadd.f32 0.0, %v4285
        %v4287 = vpop.f32.mrf.mxu0
        %v4288 = vpop.f32.mrf.mxu0
        %v4289 = vadd.f32 0.0, %v4288
        %v4290 = vpop.f32.mrf.mxu0
        %4291 = vmatprep.mubr.bf16.mxu0 0
        %4292 = vmatmul.mubr.bf16.gmra.mxu0 %v4184
        %v4293 = vpop.f32.mrf.mxu0
        %v4294 = vadd.f32 0.0, %v4293
        %v4295 = vpop.f32.mrf.mxu0
        %v4296 = vpop.f32.mrf.mxu0
        %v4297 = vadd.f32 0.0, %v4296
        %v4298 = vpop.f32.mrf.mxu0
        %4299 = vmatprep.mubr.bf16.mxu0 0
        %4300 = vmatmul.mubr.bf16.gmra.mxu0 %v4187
        %v4301 = vpop.f32.mrf.mxu0
        %v4302 = vadd.f32 0.0, %v4301
        %v4303 = vpop.f32.mrf.mxu0
        %v4304 = vpop.f32.mrf.mxu0
        %v4305 = vadd.f32 0.0, %v4304
        %v4306 = vpop.f32.mrf.mxu0
        %4307 = vmatprep.mubr.bf16.mxu0 0
        %4308 = vmatmul.mubr.bf16.gmra.mxu0 %v4190
        %v4309 = vpop.f32.mrf.mxu0
        %v4310 = vadd.f32 0.0, %v4309
        %v4311 = vpop.f32.mrf.mxu0
        %v4312 = vpop.f32.mrf.mxu0
        %v4313 = vadd.f32 0.0, %v4312
        %v4314 = vpop.f32.mrf.mxu0
        %4315 = vmatprep.mubr.bf16.mxu0 0
        %4316 = vmatmul.mubr.bf16.gmra.mxu0 %v4193
        %v4317 = vpop.f32.mrf.mxu0
        %v4318 = vadd.f32 0.0, %v4317
        %v4319 = vpop.f32.mrf.mxu0
        %v4320 = vpop.f32.mrf.mxu0
        %v4321 = vadd.f32 0.0, %v4320
        %v4322 = vpop.f32.mrf.mxu0
        %4323 = vmatprep.mubr.bf16.mxu0 0
        %4324 = vmatmul.mubr.bf16.gmra.mxu0 %v4196
        %v4325 = vpop.f32.mrf.mxu0
        %v4326 = vadd.f32 0.0, %v4325
        %v4327 = vpop.f32.mrf.mxu0
        %v4328 = vpop.f32.mrf.mxu0
        %v4329 = vadd.f32 0.0, %v4328
        %v4330 = vpop.f32.mrf.mxu0
        %4331 = vmatprep.mubr.bf16.mxu0 0
        %4332 = vmatmul.mubr.bf16.gmra.mxu0 %v4199
        %v4333 = vpop.f32.mrf.mxu0
        %v4334 = vadd.f32 0.0, %v4333
        %v4335 = vpop.f32.mrf.mxu0
        %v4336 = vpop.f32.mrf.mxu0
        %v4337 = vadd.f32 0.0, %v4336
        %v4338 = vpop.f32.mrf.mxu0
        %4339 = vmatprep.mubr.bf16.mxu0 0
        %4340 = vmatmul.mubr.bf16.gmra.mxu0 %v4202
        %v4341 = vpop.f32.mrf.mxu0
        %v4342 = vadd.f32 0.0, %v4341
        %v4343 = vpop.f32.mrf.mxu0
        %v4344 = vpop.f32.mrf.mxu0
        %v4345 = vadd.f32 0.0, %v4344
        %v4346 = vpop.f32.mrf.mxu0
        %4347 = vmatprep.mubr.bf16.mxu0 0
        %4348 = vmatmul.mubr.bf16.gmra.mxu0 %v4205
        %v4349 = vpop.f32.mrf.mxu0
        %v4350 = vadd.f32 0.0, %v4349
        %v4351 = vpop.f32.mrf.mxu0
        %v4352 = vpop.f32.mrf.mxu0
        %v4353 = vadd.f32 0.0, %v4352
        %v4354 = vpop.f32.mrf.mxu0
        %4355 = vmatprep.mubr.bf16.mxu0 0
        %4356 = vmatmul.mubr.bf16.gmra.mxu0 %v4208
        %v4357 = vpop.f32.mrf.mxu0
        %v4358 = vadd.f32 0.0, %v4357
        %v4359 = vpop.f32.mrf.mxu0
        %v4360 = vpop.f32.mrf.mxu0
        %v4361 = vadd.f32 0.0, %v4360
        %v4362 = vpop.f32.mrf.mxu0
        %4363 = vmatprep.mubr.bf16.mxu0 0
        %4364 = vmatmul.mubr.bf16.gmra.mxu0 %v4211
        %v4365 = vpop.f32.mrf.mxu0
        %v4366 = vadd.f32 0.0, %v4365
        %v4367 = vpop.f32.mrf.mxu0
        %v4368 = vpop.f32.mrf.mxu0
        %v4369 = vadd.f32 0.0, %v4368
        %v4370 = vpop.f32.mrf.mxu0
        %4371 = vmatprep.mubr.bf16.mxu0 0
        %4372 = vmatmul.mubr.bf16.gmra.mxu0 %v4214
        %v4373 = vpop.f32.mrf.mxu0
        %v4374 = vadd.f32 0.0, %v4373
        %v4375 = vpop.f32.mrf.mxu0
        %v4376 = vpop.f32.mrf.mxu0
        %v4377 = vadd.f32 0.0, %v4376
        %v4378 = vpop.f32.mrf.mxu0
        %4379 = vdwg.mxu0
        %v4380 = vadd.f32 %v3886, %v4254
        %v4381 = vadd.f32 %v3887, %v4257
        %v4382 = vadd.f32 %v3888, %v4262
        %v4383 = vadd.f32 %v3889, %v4265
        %v4384 = vadd.f32 %v3890, %v4270
        %v4385 = vadd.f32 %v3891, %v4273
        %v4386 = vadd.f32 %v3892, %v4278
        %v4387 = vadd.f32 %v3893, %v4281
        %v4388 = vadd.f32 %v3894, %v4286
        %v4389 = vadd.f32 %v3895, %v4289
        %v4390 = vadd.f32 %v3896, %v4294
        %v4391 = vadd.f32 %v3897, %v4297
        %v4392 = vadd.f32 %v3898, %v4302
        %v4393 = vadd.f32 %v3899, %v4305
        %v4394 = vadd.f32 %v3900, %v4310
        %v4395 = vadd.f32 %v3901, %v4313
        %v4396 = vadd.f32 %v3902, %v4318
        %v4397 = vadd.f32 %v3903, %v4321
        %v4398 = vadd.f32 %v3904, %v4326
        %v4399 = vadd.f32 %v3905, %v4329
        %v4400 = vadd.f32 %v3906, %v4334
        %v4401 = vadd.f32 %v3907, %v4337
        %v4402 = vadd.f32 %v3908, %v4342
        %v4403 = vadd.f32 %v3909, %v4345
        %v4404 = vadd.f32 %v3910, %v4350
        %v4405 = vadd.f32 %v3911, %v4353
        %v4406 = vadd.f32 %v3912, %v4358
        %v4407 = vadd.f32 %v3913, %v4361
        %v4408 = vadd.f32 %v3914, %v4366
        %v4409 = vadd.f32 %v3915, %v4369
        %v4410 = vadd.f32 %v3916, %v4374
        %v4411 = vadd.f32 %v3917, %v4377
        %v4412 = vld [vmem:[%s221 + $0x10] sm:$0xe]
        %v4413 = vsel %vm1819, %v4412, 0
        %v4414 = vsel %vm1820, %v3919, 0
        %v4415 = vsel %vm1821, %v3920, 0
        %v4416 = vsel %vm1822, %v3921, 0
        %v4417 = vsel %vm1823, %v3922, 0
        %v4418 = vsel %vm1824, %v3923, 0
        %v4419 = vsel %vm1825, %v3924, 0
        %v4420 = vsel %vm1826, %v3925, 0
        %v4421 = vsel %vm1827, %v3926, 0
        %v4422 = vsel %vm1828, %v3927, 0
        %v4423 = vsel %vm1829, %v3928, 0
        %v4424 = vsel %vm1830, %v3929, 0
        %v4425 = vsel %vm1831, %v3930, 0
        %v4426 = vsel %vm1832, %v3931, 0
        %v4427 = vsel %vm1833, %v3932, 0
        %v4428 = vsel %vm1834, %v3933, 0
        %v4429 = vsel %vm1835, %v3934, 0
        %v4430 = vsel %vm1836, %v3935, 0
        %v4431 = vsel %vm1837, %v3936, 0
        %v4432 = vsel %vm1838, %v3937, 0
        %v4433 = vsel %vm1839, %v3938, 0
        %v4434 = vsel %vm1840, %v3939, 0
        %v4435 = vsel %vm1841, %v3940, 0
        %v4436 = vsel %vm1842, %v3941, 0
        %v4437 = vsel %vm1843, %v3942, 0
        %v4438 = vsel %vm1844, %v3943, 0
        %v4439 = vsel %vm1845, %v3944, 0
        %v4440 = vsel %vm1846, %v3945, 0
        %v4441 = vsel %vm1847, %v3946, 0
        %v4442 = vsel %vm1848, %v3947, 0
        %v4443 = vsel %vm1849, %v3948, 0
        %v4444 = vsel %vm1850, %v3949, 0
        %v4445 = vsel %vm1851, %v3950, 0
        %s4446 = scalar_lea.vmem %s1, 16
        %v4447 = vld [vmem:[%s4446] sm:$0x3]
        %v4481 = vunpack.c.l.b16 %v4413
        %v4482 = vunpack.c.l.b16 %v4414
        %v4483 = vunpack.c.l.b16 %v4415
        %v4484 = vunpack.c.l.b16 %v4416
        %v4485 = vunpack.c.l.b16 %v4417
        %v4486 = vunpack.c.l.b16 %v4418
        %v4487 = vunpack.c.l.b16 %v4419
        %v4488 = vunpack.c.l.b16 %v4420
        %v4489 = vunpack.c.l.b16 %v4421
        %v4490 = vunpack.c.l.b16 %v4422
        %v4491 = vunpack.c.l.b16 %v4423
        %v4492 = vunpack.c.l.b16 %v4424
        %v4493 = vunpack.c.l.b16 %v4425
        %v4494 = vunpack.c.l.b16 %v4426
        %v4495 = vunpack.c.l.b16 %v4427
        %v4496 = vunpack.c.l.b16 %v4428
        %v4497 = vunpack.c.l.b16 %v4429
        %v4498 = vunpack.c.l.b16 %v4430
        %v4499 = vunpack.c.l.b16 %v4431
        %v4500 = vunpack.c.l.b16 %v4432
        %v4501 = vunpack.c.l.b16 %v4433
        %v4502 = vunpack.c.l.b16 %v4434
        %v4503 = vunpack.c.l.b16 %v4435
        %v4504 = vunpack.c.l.b16 %v4436
        %v4505 = vunpack.c.l.b16 %v4437
        %v4506 = vunpack.c.l.b16 %v4438
        %v4507 = vunpack.c.l.b16 %v4439
        %v4508 = vunpack.c.l.b16 %v4440
        %v4509 = vunpack.c.l.b16 %v4441
        %v4510 = vunpack.c.l.b16 %v4442
        %v4511 = vunpack.c.l.b16 %v4443
        %v4512 = vunpack.c.l.b16 %v4444
        %v4513 = vunpack.c.l.b16 %v4445
        %v4514 = vpack.c.b16 %v4482, %v4481
        %v4515 = vpack.c.b16 %v4484, %v4483
        %v4516 = vpack.c.b16 %v4486, %v4485
        %v4517 = vpack.c.b16 %v4488, %v4487
        %v4518 = vpack.c.b16 %v4490, %v4489
        %v4519 = vpack.c.b16 %v4492, %v4491
        %v4520 = vpack.c.b16 %v4494, %v4493
        %v4521 = vpack.c.b16 %v4496, %v4495
        %v4522 = vpack.c.b16 %v4498, %v4497
        %v4523 = vpack.c.b16 %v4500, %v4499
        %v4524 = vpack.c.b16 %v4502, %v4501
        %v4525 = vpack.c.b16 %v4504, %v4503
        %v4526 = vpack.c.b16 %v4506, %v4505
        %v4527 = vpack.c.b16 %v4508, %v4507
        %v4528 = vpack.c.b16 %v4510, %v4509
        %v4529 = vpack.c.b16 %v4512, %v4511
        %v4530 = vpack.c.b16 %v4513, %v4513
        %v4531 = vrot.slane %v4514, 1
        %v4532 = vrot.slane %v4515, 1
        %v4533 = vsel %vm1970, %v4531, %v4532
        %v4534 = vrot.slane %v4516, 1
        %v4535 = vsel %vm1970, %v4532, %v4534
        %v4536 = vrot.slane %v4517, 1
        %v4537 = vsel %vm1970, %v4534, %v4536
        %v4538 = vrot.slane %v4518, 1
        %v4539 = vsel %vm1970, %v4536, %v4538
        %v4540 = vrot.slane %v4519, 1
        %v4541 = vsel %vm1970, %v4538, %v4540
        %v4542 = vrot.slane %v4520, 1
        %v4543 = vsel %vm1970, %v4540, %v4542
        %v4544 = vrot.slane %v4521, 1
        %v4545 = vsel %vm1970, %v4542, %v4544
        %v4546 = vrot.slane %v4522, 1
        %v4547 = vsel %vm1970, %v4544, %v4546
        %v4548 = vrot.slane %v4523, 1
        %v4549 = vsel %vm1970, %v4546, %v4548
        %v4550 = vrot.slane %v4524, 1
        %v4551 = vsel %vm1970, %v4548, %v4550
        %v4552 = vrot.slane %v4525, 1
        %v4553 = vsel %vm1970, %v4550, %v4552
        %v4554 = vrot.slane %v4526, 1
        %v4555 = vsel %vm1970, %v4552, %v4554
        %v4556 = vrot.slane %v4527, 1
        %v4557 = vsel %vm1970, %v4554, %v4556
        %v4558 = vrot.slane %v4528, 1
        %v4559 = vsel %vm1970, %v4556, %v4558
        %v4560 = vrot.slane %v4529, 1
        %v4561 = vsel %vm1970, %v4558, %v4560
        %v4562 = vrot.slane %v4530, 1
        %v4563 = vsel %vm1970, %v4560, %v4562
        %v4565 = vsel %vm1054, %v4533, 0
        %v4568 = vsel %vm1054, %v4535, 0
        %v4571 = vsel %vm1054, %v4537, 0
        %v4574 = vsel %vm1054, %v4539, 0
        %v4577 = vsel %vm1054, %v4541, 0
        %v4580 = vsel %vm1054, %v4543, 0
        %v4583 = vsel %vm1054, %v4545, 0
        %v4586 = vsel %vm1054, %v4547, 0
        %v4589 = vsel %vm1054, %v4549, 0
        %v4592 = vsel %vm1054, %v4551, 0
        %v4595 = vsel %vm1054, %v4553, 0
        %v4598 = vsel %vm1054, %v4555, 0
        %v4601 = vsel %vm1054, %v4557, 0
        %v4604 = vsel %vm1054, %v4559, 0
        %v4607 = vsel %vm1054, %v4561, 0
        %v4610 = vsel %vm1054, %v4563, 0
        %v4613 = vsel %vm1103, %v4447, 0
        %4615 = vmatprep.subr.bf16.mxu0 0
        %4616 = vmatpush1.bf16.msra.mxu0 0
        %4617 = vmatprep.subr.bf16.mxu0 0
        %4618 = vmatpush1.bf16.msra.mxu0 0
        %4619 = vmatprep.subr.bf16.mxu0 0
        %4620 = vmatpush1.bf16.msra.mxu0 0
        %4621 = vmatprep.subr.bf16.mxu0 0
        %4622 = vmatpush1.bf16.msra.mxu0 0
        %4623 = vmatprep.subr.bf16.mxu0 0
        %4624 = vmatpush1.bf16.msra.mxu0 0
        %4625 = vmatprep.subr.bf16.mxu0 0
        %4626 = vmatpush1.bf16.msra.mxu0 0
        %4627 = vmatprep.subr.bf16.mxu0 0
        %4628 = vmatpush1.bf16.msra.mxu0 0
        %4629 = vmatprep.subr.bf16.mxu0 0
        %4630 = vmatpush1.bf16.msra.mxu0 %v4613
        %4631 = vmatprep.subr.bf16.mxu0 0
        %4632 = vmatpush2.bf16.msra.mxu0 0
        %4633 = vmatprep.subr.bf16.mxu0 0
        %4634 = vmatpush2.bf16.msra.mxu0 0
        %4635 = vmatprep.subr.bf16.mxu0 0
        %4636 = vmatpush2.bf16.msra.mxu0 0
        %4637 = vmatprep.subr.bf16.mxu0 0
        %4638 = vmatpush2.bf16.msra.mxu0 0
        %4639 = vmatprep.subr.bf16.mxu0 0
        %4640 = vmatpush2.bf16.msra.mxu0 0
        %4641 = vmatprep.subr.bf16.mxu0 0
        %4642 = vmatpush2.bf16.msra.mxu0 0
        %4643 = vmatprep.subr.bf16.mxu0 0
        %4644 = vmatpush2.bf16.msra.mxu0 0
        %4645 = vmatprep.subr.bf16.mxu0 0
        %4646 = vmatpush2.bf16.msra.mxu0 0
        %4647 = vmatprep.mubr.bf16.mxu0 0
        %4648 = vmatmul.mubr.bf16.gmra.mxu0 %v4565
        %v4649 = vpop.f32.mrf.mxu0
        %v4650 = vadd.f32 0.0, %v4649
        %v4651 = vpop.f32.mrf.mxu0
        %v4652 = vpop.f32.mrf.mxu0
        %v4653 = vadd.f32 0.0, %v4652
        %v4654 = vpop.f32.mrf.mxu0
        %4655 = vmatprep.mubr.bf16.mxu0 0
        %4656 = vmatmul.mubr.bf16.gmra.mxu0 %v4568
        %v4657 = vpop.f32.mrf.mxu0
        %v4658 = vadd.f32 0.0, %v4657
        %v4659 = vpop.f32.mrf.mxu0
        %v4660 = vpop.f32.mrf.mxu0
        %v4661 = vadd.f32 0.0, %v4660
        %v4662 = vpop.f32.mrf.mxu0
        %4663 = vmatprep.mubr.bf16.mxu0 0
        %4664 = vmatmul.mubr.bf16.gmra.mxu0 %v4571
        %v4665 = vpop.f32.mrf.mxu0
        %v4666 = vadd.f32 0.0, %v4665
        %v4667 = vpop.f32.mrf.mxu0
        %v4668 = vpop.f32.mrf.mxu0
        %v4669 = vadd.f32 0.0, %v4668
        %v4670 = vpop.f32.mrf.mxu0
        %4671 = vmatprep.mubr.bf16.mxu0 0
        %4672 = vmatmul.mubr.bf16.gmra.mxu0 %v4574
        %v4673 = vpop.f32.mrf.mxu0
        %v4674 = vadd.f32 0.0, %v4673
        %v4675 = vpop.f32.mrf.mxu0
        %v4676 = vpop.f32.mrf.mxu0
        %v4677 = vadd.f32 0.0, %v4676
        %v4678 = vpop.f32.mrf.mxu0
        %4679 = vmatprep.mubr.bf16.mxu0 0
        %4680 = vmatmul.mubr.bf16.gmra.mxu0 %v4577
        %v4681 = vpop.f32.mrf.mxu0
        %v4682 = vadd.f32 0.0, %v4681
        %v4683 = vpop.f32.mrf.mxu0
        %v4684 = vpop.f32.mrf.mxu0
        %v4685 = vadd.f32 0.0, %v4684
        %v4686 = vpop.f32.mrf.mxu0
        %4687 = vmatprep.mubr.bf16.mxu0 0
        %4688 = vmatmul.mubr.bf16.gmra.mxu0 %v4580
        %v4689 = vpop.f32.mrf.mxu0
        %v4690 = vadd.f32 0.0, %v4689
        %v4691 = vpop.f32.mrf.mxu0
        %v4692 = vpop.f32.mrf.mxu0
        %v4693 = vadd.f32 0.0, %v4692
        %v4694 = vpop.f32.mrf.mxu0
        %4695 = vmatprep.mubr.bf16.mxu0 0
        %4696 = vmatmul.mubr.bf16.gmra.mxu0 %v4583
        %v4697 = vpop.f32.mrf.mxu0
        %v4698 = vadd.f32 0.0, %v4697
        %v4699 = vpop.f32.mrf.mxu0
        %v4700 = vpop.f32.mrf.mxu0
        %v4701 = vadd.f32 0.0, %v4700
        %v4702 = vpop.f32.mrf.mxu0
        %4703 = vmatprep.mubr.bf16.mxu0 0
        %4704 = vmatmul.mubr.bf16.gmra.mxu0 %v4586
        %v4705 = vpop.f32.mrf.mxu0
        %v4706 = vadd.f32 0.0, %v4705
        %v4707 = vpop.f32.mrf.mxu0
        %v4708 = vpop.f32.mrf.mxu0
        %v4709 = vadd.f32 0.0, %v4708
        %v4710 = vpop.f32.mrf.mxu0
        %4711 = vmatprep.mubr.bf16.mxu0 0
        %4712 = vmatmul.mubr.bf16.gmra.mxu0 %v4589
        %v4713 = vpop.f32.mrf.mxu0
        %v4714 = vadd.f32 0.0, %v4713
        %v4715 = vpop.f32.mrf.mxu0
        %v4716 = vpop.f32.mrf.mxu0
        %v4717 = vadd.f32 0.0, %v4716
        %v4718 = vpop.f32.mrf.mxu0
        %4719 = vmatprep.mubr.bf16.mxu0 0
        %4720 = vmatmul.mubr.bf16.gmra.mxu0 %v4592
        %v4721 = vpop.f32.mrf.mxu0
        %v4722 = vadd.f32 0.0, %v4721
        %v4723 = vpop.f32.mrf.mxu0
        %v4724 = vpop.f32.mrf.mxu0
        %v4725 = vadd.f32 0.0, %v4724
        %v4726 = vpop.f32.mrf.mxu0
        %4727 = vmatprep.mubr.bf16.mxu0 0
        %4728 = vmatmul.mubr.bf16.gmra.mxu0 %v4595
        %v4729 = vpop.f32.mrf.mxu0
        %v4730 = vadd.f32 0.0, %v4729
        %v4731 = vpop.f32.mrf.mxu0
        %v4732 = vpop.f32.mrf.mxu0
        %v4733 = vadd.f32 0.0, %v4732
        %v4734 = vpop.f32.mrf.mxu0
        %4735 = vmatprep.mubr.bf16.mxu0 0
        %4736 = vmatmul.mubr.bf16.gmra.mxu0 %v4598
        %v4737 = vpop.f32.mrf.mxu0
        %v4738 = vadd.f32 0.0, %v4737
        %v4739 = vpop.f32.mrf.mxu0
        %v4740 = vpop.f32.mrf.mxu0
        %v4741 = vadd.f32 0.0, %v4740
        %v4742 = vpop.f32.mrf.mxu0
        %4743 = vmatprep.mubr.bf16.mxu0 0
        %4744 = vmatmul.mubr.bf16.gmra.mxu0 %v4601
        %v4745 = vpop.f32.mrf.mxu0
        %v4746 = vadd.f32 0.0, %v4745
        %v4747 = vpop.f32.mrf.mxu0
        %v4748 = vpop.f32.mrf.mxu0
        %v4749 = vadd.f32 0.0, %v4748
        %v4750 = vpop.f32.mrf.mxu0
        %4751 = vmatprep.mubr.bf16.mxu0 0
        %4752 = vmatmul.mubr.bf16.gmra.mxu0 %v4604
        %v4753 = vpop.f32.mrf.mxu0
        %v4754 = vadd.f32 0.0, %v4753
        %v4755 = vpop.f32.mrf.mxu0
        %v4756 = vpop.f32.mrf.mxu0
        %v4757 = vadd.f32 0.0, %v4756
        %v4758 = vpop.f32.mrf.mxu0
        %4759 = vmatprep.mubr.bf16.mxu0 0
        %4760 = vmatmul.mubr.bf16.gmra.mxu0 %v4607
        %v4761 = vpop.f32.mrf.mxu0
        %v4762 = vadd.f32 0.0, %v4761
        %v4763 = vpop.f32.mrf.mxu0
        %v4764 = vpop.f32.mrf.mxu0
        %v4765 = vadd.f32 0.0, %v4764
        %v4766 = vpop.f32.mrf.mxu0
        %4767 = vmatprep.mubr.bf16.mxu0 0
        %4768 = vmatmul.mubr.bf16.gmra.mxu0 %v4610
        %v4769 = vpop.f32.mrf.mxu0
        %v4770 = vadd.f32 0.0, %v4769
        %v4771 = vpop.f32.mrf.mxu0
        %v4772 = vpop.f32.mrf.mxu0
        %v4773 = vadd.f32 0.0, %v4772
        %v4774 = vpop.f32.mrf.mxu0
        %4775 = vdwg.mxu0
        %v4776 = vadd.f32 %v4380, %v4650
        %v4777 = vadd.f32 %v4381, %v4653
        %v4778 = vadd.f32 %v4382, %v4658
        %v4779 = vadd.f32 %v4383, %v4661
        %v4780 = vadd.f32 %v4384, %v4666
        %v4781 = vadd.f32 %v4385, %v4669
        %v4782 = vadd.f32 %v4386, %v4674
        %v4783 = vadd.f32 %v4387, %v4677
        %v4784 = vadd.f32 %v4388, %v4682
        %v4785 = vadd.f32 %v4389, %v4685
        %v4786 = vadd.f32 %v4390, %v4690
        %v4787 = vadd.f32 %v4391, %v4693
        %v4788 = vadd.f32 %v4392, %v4698
        %v4789 = vadd.f32 %v4393, %v4701
        %v4790 = vadd.f32 %v4394, %v4706
        %v4791 = vadd.f32 %v4395, %v4709
        %v4792 = vadd.f32 %v4396, %v4714
        %v4793 = vadd.f32 %v4397, %v4717
        %v4794 = vadd.f32 %v4398, %v4722
        %v4795 = vadd.f32 %v4399, %v4725
        %v4796 = vadd.f32 %v4400, %v4730
        %v4797 = vadd.f32 %v4401, %v4733
        %v4798 = vadd.f32 %v4402, %v4738
        %v4799 = vadd.f32 %v4403, %v4741
        %v4800 = vadd.f32 %v4404, %v4746
        %v4801 = vadd.f32 %v4405, %v4749
        %v4802 = vadd.f32 %v4406, %v4754
        %v4803 = vadd.f32 %v4407, %v4757
        %v4804 = vadd.f32 %v4408, %v4762
        %v4805 = vadd.f32 %v4409, %v4765
        %v4806 = vadd.f32 %v4410, %v4770
        %v4807 = vadd.f32 %v4411, %v4773
        %v4808 = vld [vmem:[%s2] sm:$0x1]
        %v4810 = vlaneseq
        %v4811 = vshrl.u32 %v4810, 7
        %v4812 = vsub.s32 0, %v4811
        %v4813 = vrot.slane %v4808, %v4812
        %v4815 = vadd.f32 %v4776, %v4813
        %v4816 = vadd.f32 %v4777, %v4813
        %v4817 = vadd.f32 %v4778, %v4813
        %v4818 = vadd.f32 %v4779, %v4813
        %v4819 = vadd.f32 %v4780, %v4813
        %v4820 = vadd.f32 %v4781, %v4813
        %v4821 = vadd.f32 %v4782, %v4813
        %v4822 = vadd.f32 %v4783, %v4813
        %v4823 = vadd.f32 %v4784, %v4813
        %v4824 = vadd.f32 %v4785, %v4813
        %v4825 = vadd.f32 %v4786, %v4813
        %v4826 = vadd.f32 %v4787, %v4813
        %v4827 = vadd.f32 %v4788, %v4813
        %v4828 = vadd.f32 %v4789, %v4813
        %v4829 = vadd.f32 %v4790, %v4813
        %v4830 = vadd.f32 %v4791, %v4813
        %v4831 = vadd.f32 %v4792, %v4813
        %v4832 = vadd.f32 %v4793, %v4813
        %v4833 = vadd.f32 %v4794, %v4813
        %v4834 = vadd.f32 %v4795, %v4813
        %v4835 = vadd.f32 %v4796, %v4813
        %v4836 = vadd.f32 %v4797, %v4813
        %v4837 = vadd.f32 %v4798, %v4813
        %v4838 = vadd.f32 %v4799, %v4813
        %v4839 = vadd.f32 %v4800, %v4813
        %v4840 = vadd.f32 %v4801, %v4813
        %v4841 = vadd.f32 %v4802, %v4813
        %v4842 = vadd.f32 %v4803, %v4813
        %v4843 = vadd.f32 %v4804, %v4813
        %v4844 = vadd.f32 %v4805, %v4813
        %v4845 = vadd.f32 %v4806, %v4813
        %v4846 = vadd.f32 %v4807, %v4813
        %v4847 = vmax.f32 %v4815, 0.0
        %v4848 = vmax.f32 %v4816, 0.0
        %v4849 = vmax.f32 %v4817, 0.0
        %v4850 = vmax.f32 %v4818, 0.0
        %v4851 = vmax.f32 %v4819, 0.0
        %v4852 = vmax.f32 %v4820, 0.0
        %v4853 = vmax.f32 %v4821, 0.0
        %v4854 = vmax.f32 %v4822, 0.0
        %v4855 = vmax.f32 %v4823, 0.0
        %v4856 = vmax.f32 %v4824, 0.0
        %v4857 = vmax.f32 %v4825, 0.0
        %v4858 = vmax.f32 %v4826, 0.0
        %v4859 = vmax.f32 %v4827, 0.0
        %v4860 = vmax.f32 %v4828, 0.0
        %v4861 = vmax.f32 %v4829, 0.0
        %v4862 = vmax.f32 %v4830, 0.0
        %v4863 = vmax.f32 %v4831, 0.0
        %v4864 = vmax.f32 %v4832, 0.0
        %v4865 = vmax.f32 %v4833, 0.0
        %v4866 = vmax.f32 %v4834, 0.0
        %v4867 = vmax.f32 %v4835, 0.0
        %v4868 = vmax.f32 %v4836, 0.0
        %v4869 = vmax.f32 %v4837, 0.0
        %v4870 = vmax.f32 %v4838, 0.0
        %v4871 = vmax.f32 %v4839, 0.0
        %v4872 = vmax.f32 %v4840, 0.0
        %v4873 = vmax.f32 %v4841, 0.0
        %v4874 = vmax.f32 %v4842, 0.0
        %v4875 = vmax.f32 %v4843, 0.0
        %v4876 = vmax.f32 %v4844, 0.0
        %v4877 = vmax.f32 %v4845, 0.0
        %v4878 = vmax.f32 %v4846, 0.0
        %v4879 = vadd.f32 %v4847, %v4848
        %v4880 = vadd.f32 %v4879, %v4849
        %v4881 = vadd.f32 %v4880, %v4850
        %v4882 = vadd.f32 %v4881, %v4851
        %v4883 = vadd.f32 %v4882, %v4852
        %v4884 = vadd.f32 %v4883, %v4853
        %v4885 = vadd.f32 %v4884, %v4854
        %v4886 = vadd.f32 %v4885, %v4855
        %v4887 = vadd.f32 %v4886, %v4856
        %v4888 = vadd.f32 %v4887, %v4857
        %v4889 = vadd.f32 %v4888, %v4858
        %v4890 = vadd.f32 %v4889, %v4859
        %v4891 = vadd.f32 %v4890, %v4860
        %v4892 = vadd.f32 %v4891, %v4861
        %v4893 = vadd.f32 %v4892, %v4862
        %v4894 = vadd.f32 %v4893, %v4863
        %v4895 = vadd.f32 %v4894, %v4864
        %v4896 = vadd.f32 %v4895, %v4865
        %v4897 = vadd.f32 %v4896, %v4866
        %v4898 = vadd.f32 %v4897, %v4867
        %v4899 = vadd.f32 %v4898, %v4868
        %v4900 = vadd.f32 %v4899, %v4869
        %v4901 = vadd.f32 %v4900, %v4870
        %v4902 = vadd.f32 %v4901, %v4871
        %v4903 = vadd.f32 %v4902, %v4872
        %v4904 = vadd.f32 %v4903, %v4873
        %v4905 = vadd.f32 %v4904, %v4874
        %v4906 = vadd.f32 %v4905, %v4875
        %v4907 = vadd.f32 %v4906, %v4876
        %v4908 = vadd.f32 %v4907, %v4877
        %v4909 = vadd.f32 %v4908, %v4878
        %v4910 = vrot.slane %v4909, 4
        %v4911 = vadd.f32 %v4909, %v4910
        %v4912 = vrot.slane %v4911, 2
        %v4913 = vadd.f32 %v4911, %v4912
        %v4914 = vrot.slane %v4913, 1
        %v4915 = vadd.f32 %v4913, %v4914
        %v4916 = vmul.f32 %v4915, 0.00390625
        %v4917 = vld [vmem:[%s3] sm:$0xff]
        %v4918 = vld [vmem:[%s3 + $0x8] sm:$0xff]
        %v4919 = vld [vmem:[%s3 + $0x10] sm:$0xff]
        %v4920 = vld [vmem:[%s3 + $0x18] sm:$0xff]
        %v4921 = vld [vmem:[%s3 + $0x20] sm:$0xff]
        %v4922 = vld [vmem:[%s3 + $0x28] sm:$0xff]
        %v4923 = vld [vmem:[%s3 + $0x30] sm:$0xff]
        %v4924 = vld [vmem:[%s3 + $0x38] sm:$0xff]
        %v4925 = vld [vmem:[%s3 + $0x40] sm:$0xff]
        %v4926 = vld [vmem:[%s3 + $0x48] sm:$0xff]
        %v4927 = vld [vmem:[%s3 + $0x50] sm:$0xff]
        %v4928 = vld [vmem:[%s3 + $0x58] sm:$0xff]
        %v4929 = vld [vmem:[%s3 + $0x60] sm:$0xff]
        %v4930 = vld [vmem:[%s3 + $0x68] sm:$0xff]
        %v4931 = vld [vmem:[%s3 + $0x70] sm:$0xff]
        %v4932 = vld [vmem:[%s3 + $0x78] sm:$0xff]
        %v4933 = vld [vmem:[%s4] sm:$0x1]
        %4934 = vmatprep.subr.mxu0 0.0
        %4935 = vmatpush1.msra.mxu0 %v4932
        %4936 = vmatprep.subr.mxu0 0.0
        %4937 = vmatpush1.msra.mxu0 %v4931
        %4938 = vmatprep.subr.mxu0 0.0
        %4939 = vmatpush1.msra.mxu0 %v4930
        %4940 = vmatprep.subr.mxu0 0.0
        %4941 = vmatpush1.msra.mxu0 %v4929
        %4942 = vmatprep.subr.mxu0 0.0
        %4943 = vmatpush1.msra.mxu0 %v4928
        %4944 = vmatprep.subr.mxu0 0.0
        %4945 = vmatpush1.msra.mxu0 %v4927
        %4946 = vmatprep.subr.mxu0 0.0
        %4947 = vmatpush1.msra.mxu0 %v4926
        %4948 = vmatprep.subr.mxu0 0.0
        %4949 = vmatpush1.msra.mxu0 %v4925
        %4950 = vmatprep.subr.mxu0 0.0
        %4951 = vmatpush1.msra.mxu0 %v4924
        %4952 = vmatprep.subr.mxu0 0.0
        %4953 = vmatpush1.msra.mxu0 %v4923
        %4954 = vmatprep.subr.mxu0 0.0
        %4955 = vmatpush1.msra.mxu0 %v4922
        %4956 = vmatprep.subr.mxu0 0.0
        %4957 = vmatpush1.msra.mxu0 %v4921
        %4958 = vmatprep.subr.mxu0 0.0
        %4959 = vmatpush1.msra.mxu0 %v4920
        %4960 = vmatprep.subr.mxu0 0.0
        %4961 = vmatpush1.msra.mxu0 %v4919
        %4962 = vmatprep.subr.mxu0 0.0
        %4963 = vmatpush1.msra.mxu0 %v4918
        %4964 = vmatprep.subr.mxu0 0.0
        %4965 = vmatpush1.msra.mxu0 %v4917
        %4966 = vmatprep.subr.mxu0 0.0
        %4967 = vmatpush2.msra.mxu0 0.0
        %4968 = vmatprep.subr.mxu0 0.0
        %4969 = vmatpush2.msra.mxu0 0.0
        %4970 = vmatprep.subr.mxu0 0.0
        %4971 = vmatpush2.msra.mxu0 0.0
        %4972 = vmatprep.subr.mxu0 0.0
        %4973 = vmatpush2.msra.mxu0 0.0
        %4974 = vmatprep.subr.mxu0 0.0
        %4975 = vmatpush2.msra.mxu0 0.0
        %4976 = vmatprep.subr.mxu0 0.0
        %4977 = vmatpush2.msra.mxu0 0.0
        %4978 = vmatprep.subr.mxu0 0.0
        %4979 = vmatpush2.msra.mxu0 0.0
        %4980 = vmatprep.subr.mxu0 0.0
        %4981 = vmatpush2.msra.mxu0 0.0
        %4982 = vmatprep.subr.mxu0 0.0
        %4983 = vmatpush2.msra.mxu0 0.0
        %4984 = vmatprep.subr.mxu0 0.0
        %4985 = vmatpush2.msra.mxu0 0.0
        %4986 = vmatprep.subr.mxu0 0.0
        %4987 = vmatpush2.msra.mxu0 0.0
        %4988 = vmatprep.subr.mxu0 0.0
        %4989 = vmatpush2.msra.mxu0 0.0
        %4990 = vmatprep.subr.mxu0 0.0
        %4991 = vmatpush2.msra.mxu0 0.0
        %4992 = vmatprep.subr.mxu0 0.0
        %4993 = vmatpush2.msra.mxu0 0.0
        %4994 = vmatprep.subr.mxu0 0.0
        %4995 = vmatpush2.msra.mxu0 0.0
        %4996 = vmatprep.subr.mxu0 0.0
        %4997 = vmatpush2.msra.mxu0 0.0
        %4998 = vmatprep.mubr.f32.mxu0 0.0
        %4999 = vmatmul.mubr.f32.gmra.mxu0 %v4916
        %v5000 = vpop.f32.mrf.mxu0
        %v5001 = vadd.f32 %v4933, %v5000
        %v5002 = vpop.f32.mrf.mxu0
        %5003 = vdwg.mxu0
        %5004 = vst [vmem:[%s216] sm:$0x1] %v5001
        %s5005 = sand.u32 %s137, 1
        %s5006 = scalar_lea.sflag [#allocation3], %s5005
        %s5007 = sand.u32 %s137, 1
        %s5008 = scalar_lea.vmem [#allocation2], %s5007
        // Predicated region
        $region41: #{model_forward.1} parent=39 // pred_check
          %p5009 = pneg %p147
        $region42: #{model_forward.1} parent=39 // pred_check_branch
          %5011 = sbr.rel (%p5009) target = $region44
        $region43: #{model_forward.1} parent=39 // pred_region
          %s5013 = ssub.s32 16, 16
          %5014 = vsyncadd %s5006, %s5013
          %s5015 = smul.addr %s19, 16
          %s5016 = scalar_lea.hbm %s5, %s5015
          %s5018 = sshll.u32 %s5008, 4
          %s5019 = int_to_ptr.vmem [resolvable:$true] %s5018
          %5021 = dma.vmem_to_hbm [thread:$0]  %s5019, 16, %s5016, %s5006
        $region44: #{model_forward.1} parent=39 // pred_fallthru
          _
      $region40: #{model_forward.1} parent=5 // pred_fallthru
        _
      %p5022 = scmp.le.s32.totalorder 2, %s14
      // Predicated region
      $region45: #{model_forward.1} parent=5 // pred_check
        %p5023 = pneg %p5022
      $region46: #{model_forward.1} parent=5 // pred_check_branch
        %5025 = sbr.rel (%p5023) target = $region48
      $region47: #{model_forward.1} parent=5 // pred_region
        %s5026 = ssub.s32 %s14, 2
        // Predicated region
        $region49: #{model_forward.1} parent=47 // pred_check
          %p5027 = pneg %p153
        $region50: #{model_forward.1} parent=47 // pred_check_branch
          %5029 = sbr.rel (%p5027) target = $region52
        $region51: #{model_forward.1} parent=47 // pred_region
          %s5030 = sand.u32 %s138, 1
          %s5031 = scalar_lea.sflag [#allocation3], %s5030
          %s5032 = sand.u32 %s138, 1
          %s5033 = scalar_lea.vmem [#allocation2], %s5032
          %5034 = dma.done %s5031, 16
        $region52: #{model_forward.1} parent=47 // pred_fallthru
          _
      $region48: #{model_forward.1} parent=5 // pred_fallthru
        _
    $region6: #{model_forward.1} parent=1 // loop_footer
      %s18 = sadd.s32 1, %s14
    $region7: #{model_forward.1} parent=1 // loop_footer_branch
      %13 = sbr.rel target = $region3
    $region8: #{model_forward.1} parent=1 // loop_exit
      _
    %5035 = vsyncpa [#allocation3], 1
    %s5036 = scalar_lea.sflag [#allocation3], 1
    %5037 = vsyncpa %s5036, 1

</llo_original>
